<compile_context>
chip_gen: v7x
topology: tpu7x:2x2x1
jax: 0.10.0
libtpu: 0.0.40
codegen_flags: <defaults>
</compile_context>

<pallas_src>
import functools

import jax
import jax.numpy as jnp
import numpy as np
from jax import lax
from jax.experimental import pallas as pl
from jax.experimental.pallas import tpu as pltpu


def rmodel_kernel(h_ref, len_ref, warc_ref, wdec_ref, bdec_ref,
                  arc_ref, samp_ref, stats_ref, z_ref, pred_ref,
                  *, tau, compute_dtype):
    Bt, T, H = h_ref.shape
    h = h_ref[...]                                      # (Bt, T, H) f32
    lengths = len_ref[...]                              # (Bt, 1)    int32
    hc = h.astype(compute_dtype)

    # ---- archer: bilinear arc scores --------------------------------------
    # One (Bt*T, H) @ (H, H) matmul fills MXU rows instead of T=8 at a time.
    hw = jnp.dot(hc.reshape(Bt * T, H),
                 warc_ref[...].astype(compute_dtype),
                 preferred_element_type=jnp.float32).reshape(Bt, T, H)
    # Batched contraction over H -- no explicit h.T transpose materialized.
    logits = jnp.einsum('bqh,bkh->bqk', hw.astype(compute_dtype), hc,
                        preferred_element_type=jnp.float32)     # (Bt, T, T)
    key_valid = (lax.broadcasted_iota(jnp.int32, (Bt, 1, T), 2)
                 < lengths[:, :, None])                         # (Bt, 1, T)
    logits = jnp.where(key_valid, logits, jnp.float32(-1e9))
    arc_ref[...] = logits

    # ---- sampler: tempered softmax / log-softmax / entropy ----------------
    if tau == 1.0:                      # static branch; tau baked in via partial
        scaled = logits
    else:
        scaled = logits * jnp.float32(1.0 / tau)
    mx = jnp.max(scaled, axis=-1, keepdims=True)                # (Bt, T, 1)
    e = jnp.exp(scaled - mx)
    denom = jnp.sum(e, axis=-1, keepdims=True)                  # (Bt, T, 1)
    p = e * pl.reciprocal(denom, approx=True)                   # (Bt, T, T)
    logp = (scaled - mx) - jnp.log(denom)                       # (Bt, T, T)
    samp_ref[...] = p
    z_ref[...] = logp
    tok_mask = (lax.broadcasted_iota(jnp.int32, (Bt, T), 1)
                < lengths).astype(jnp.float32)                  # (Bt, T) lanes
    stats_ref[...] = -jnp.sum(p * logp, axis=-1) * tok_mask     # entropy

    # ---- computer: message passing + masked mean pool ----------------------
    comp = jnp.einsum('bqk,bkh->bqh', p.astype(compute_dtype), hc,
                      preferred_element_type=jnp.float32)       # (Bt, T, H)
    q_valid = (lax.broadcasted_iota(jnp.int32, (Bt, T, 1), 1)
               < lengths[:, :, None]).astype(jnp.float32)       # (Bt, T, 1)
    pooled = jnp.sum(comp * q_valid, axis=1)                    # (Bt, H)
    cnt = jnp.minimum(jnp.maximum(lengths.astype(jnp.float32), 1.0),
                      jnp.float32(T))                           # (Bt, 1)
    pooled = pooled * pl.reciprocal(cnt, approx=True)

    # ---- decoder: linear classifier ----------------------------------------
    pred = jnp.dot(pooled.astype(compute_dtype),
                   wdec_ref[...].astype(compute_dtype),
                   preferred_element_type=jnp.float32) + bdec_ref[...]
    pred_ref[...] = pred                                        # (Bt, C)


def rmodel_forward(x_ids, arcs, lengths, params, tau=1.0, block_b=16,
                   compute_dtype=jnp.float32):
    """Pallas implementation of RModel.forward.

    Returns (pred, arc_logits, sample, stats, z) like the PyTorch module.
    """
    emb, W_arc, W_dec, b_dec = params
    B, T = x_ids.shape
    H = emb.shape[1]
    C = W_dec.shape[1]
    # TODO(synk): gold `arcs` accepted but unused -- the concrete archer
    # sub-module's use of them is not specified in the reference code.
    del arcs

    # Glue: embedding gather (plain JAX) + batch blocking / padding.
    h = emb[x_ids].astype(jnp.float32)                      # (B, T, H)
    lengths = lengths.astype(jnp.int32)

    block_b = max(8, 8 * ((block_b + 7) // 8))              # sublane-aligned
    if B <= block_b:
        Bt = B                                              # single block == full dim
    else:
        Bt = block_b
    nb = (B + Bt - 1) // Bt
    B_pad = nb * Bt
    if B_pad != B:
        h = jnp.pad(h, ((0, B_pad - B), (0, 0), (0, 0)))
        lengths = jnp.pad(lengths, ((0, B_pad - B),))       # length 0 -> inert rows
    len2d = lengths.reshape(B_pad, 1)

    out_shapes = (
        jax.ShapeDtypeStruct((B_pad, T, T), jnp.float32),   # arc_logits
        jax.ShapeDtypeStruct((B_pad, T, T), jnp.float32),   # sample
        jax.ShapeDtypeStruct((B_pad, T), jnp.float32),      # stats (entropy)
        jax.ShapeDtypeStruct((B_pad, T, T), jnp.float32),   # z (log-probs)
        jax.ShapeDtypeStruct((B_pad, C), jnp.float32),      # pred
    )

    grid_spec = pltpu.PrefetchScalarGridSpec(
        num_scalar_prefetch=0,
        grid=(nb,),
        in_specs=[
            pl.BlockSpec((Bt, T, H), lambda b: (b, 0, 0)),  # h
            pl.BlockSpec((Bt, 1), lambda b: (b, 0)),        # lengths
            pl.BlockSpec((H, H), lambda b: (0, 0)),         # W_arc (shared)
            pl.BlockSpec((H, C), lambda b: (0, 0)),         # W_dec (shared)
            pl.BlockSpec((1, C), lambda b: (0, 0)),         # b_dec (shared)
        ],
        out_specs=[
            pl.BlockSpec((Bt, T, T), lambda b: (b, 0, 0)),
            pl.BlockSpec((Bt, T, T), lambda b: (b, 0, 0)),
            pl.BlockSpec((Bt, T), lambda b: (b, 0)),
            pl.BlockSpec((Bt, T, T), lambda b: (b, 0, 0)),
            pl.BlockSpec((Bt, C), lambda b: (b, 0)),
        ],
    )

    kernel = functools.partial(rmodel_kernel, tau=tau,
                               compute_dtype=compute_dtype)
    arc_logits, sample, stats, z, pred = pl.pallas_call(
        kernel,
        out_shape=out_shapes,
        grid_spec=grid_spec,
        compiler_params=pltpu.CompilerParams(
            dimension_semantics=("parallel",)),
    )(h, len2d, W_arc, W_dec, b_dec)

    return pred[:B], arc_logits[:B], sample[:B], stats[:B], z[:B]


def _reference(h, mask, W_arc, W_dec, b_dec, tau):
    """Pure-JAX reference for correctness checking."""
    logits = jnp.einsum('bth,hk,bsk->bts', h, W_arc, h)
    logits = jnp.where(mask[:, None, :] > 0, logits, -1e9)
    scaled = logits / tau
    p = jax.nn.softmax(scaled, axis=-1)
    logp = jax.nn.log_softmax(scaled, axis=-1)
    ent = -jnp.sum(p * logp, axis=-1) * mask
    comp_tok = jnp.einsum('bts,bsh->bth', p, h) * mask[..., None]
    pooled = jnp.sum(comp_tok, axis=1) / jnp.maximum(
        jnp.sum(mask, axis=1, keepdims=True), 1.0)
    pred = pooled @ W_dec + b_dec[0]
    return pred, logits, p, ent, logp


def _chk(a, b, rtol, atol):
    a = np.asarray(a, np.float32)
    b = np.asarray(b, np.float32)
    assert np.allclose(a, b, rtol=rtol, atol=atol), float(np.max(np.abs(a - b)))


if __name__ == "__main__":
    # Small ListOps-like problem sizes.
    B, T, H, V, C = 30, 8, 32, 16, 10
    tau = 1.0

    key = jax.random.PRNGKey(0)
    k_emb, k_arc, k_dec, k_bias, k_x, k_arcs, k_len = jax.random.split(key, 7)

    emb = jax.random.normal(k_emb, (V, H), jnp.float32) * 0.1
    W_arc = jax.random.normal(k_arc, (H, H), jnp.float32) * 0.1
    W_dec = jax.random.normal(k_dec, (H, C), jnp.float32) * 0.1
    b_dec = jax.random.normal(k_bias, (1, C), jnp.float32) * 0.01
    params = (emb, W_arc, W_dec, b_dec)

    x_ids = jax.random.randint(k_x, (B, T), 0, V, dtype=jnp.int32)
    arcs = jax.random.randint(k_arcs, (B, T), 0, T, dtype=jnp.int32)
    lengths = jax.random.randint(k_len, (B,), 1, T + 1, dtype=jnp.int32)

    # f32 path (works on all generations).
    pred, arc_logits, sample, stats, z = rmodel_forward(
        x_ids, arcs, lengths, params, tau=tau, block_b=16)
    jax.block_until_ready((pred, arc_logits, sample, stats, z))

    # Correctness check against pure-JAX reference.
    h = emb[x_ids]
    mask = (jnp.arange(T)[None, :] < lengths[:, None]).astype(jnp.float32)
    r_pred, r_logits, r_p, r_ent, r_logp = _reference(
        h, mask, W_arc, W_dec, b_dec, tau)
    _chk(arc_logits, r_logits, 1e-3, 2e-3)
    _chk(z, r_logp, 1e-3, 2e-3)
    _chk(sample, r_p, 1e-2, 1e-2)        # approx reciprocal in the softmax
    _chk(stats, r_ent, 1e-2, 1e-2)
    _chk(pred, r_pred, 1e-2, 1e-2)

    # bf16 MXU-input fast path (v6e/v7x); looser tolerance for bf16 operands.
    pred16, arc16, samp16, stats16, z16 = rmodel_forward(
        x_ids, arcs, lengths, params, tau=tau, block_b=16,
        compute_dtype=jnp.bfloat16)
    jax.block_until_ready((pred16, arc16, samp16, stats16, z16))
    _chk(arc16, r_logits, 3e-2, 3e-2)
    _chk(pred16, r_pred, 3e-2, 3e-2)

    print("KERNEL_OK")
</pallas_src>

<mosaic_0001>
module attributes {stable_mosaic.version = 11 : i64} {
  func.func @rmodel_kernel(%arg0: i32, %arg1: memref<16x8x32xf32, #tpu.memory_space<vmem>>, %arg2: memref<16x1xi32, #tpu.memory_space<vmem>>, %arg3: memref<32x32xf32, #tpu.memory_space<vmem>>, %arg4: memref<32x10xf32, #tpu.memory_space<vmem>>, %arg5: memref<1x10xf32, #tpu.memory_space<vmem>>, %arg6: memref<16x8x8xf32, #tpu.memory_space<vmem>>, %arg7: memref<16x8x8xf32, #tpu.memory_space<vmem>>, %arg8: memref<16x8xf32, #tpu.memory_space<vmem>>, %arg9: memref<16x8x8xf32, #tpu.memory_space<vmem>>, %arg10: memref<16x10xf32, #tpu.memory_space<vmem>>) attributes {dimension_semantics = [#tpu.dimension_semantics<parallel>], iteration_bounds = array<i64: 2>, scalar_prefetch = 0 : i64, scratch_operands = 0 : i64, tpu.core_type = #tpu.core_type<tc>, window_params = [{transform_indices = @transform_0, window_bounds = array<i64: 16, 8, 32>}, {transform_indices = @transform_1, window_bounds = array<i64: 16, 1>}, {pipeline_mode = #tpu.pipeline_mode<synchronous>, transform_indices = @transform_2, window_bounds = array<i64: 32, 32>}, {pipeline_mode = #tpu.pipeline_mode<synchronous>, transform_indices = @transform_3, window_bounds = array<i64: 32, 10>}, {pipeline_mode = #tpu.pipeline_mode<synchronous>, transform_indices = @transform_4, window_bounds = array<i64: 1, 10>}, {transform_indices = @transform_5, window_bounds = array<i64: 16, 8, 8>}, {transform_indices = @transform_6, window_bounds = array<i64: 16, 8, 8>}, {transform_indices = @transform_7, window_bounds = array<i64: 16, 8>}, {transform_indices = @transform_8, window_bounds = array<i64: 16, 8, 8>}, {transform_indices = @transform_9, window_bounds = array<i64: 16, 10>}]} {
    %c0 = arith.constant 0 : index
    %c0_0 = arith.constant 0 : index
    %c0_1 = arith.constant 0 : index
    %0 = vector.load %arg1[%c0, %c0_0, %c0_1] : memref<16x8x32xf32, #tpu.memory_space<vmem>>, vector<16x8x32xf32>
    %c0_2 = arith.constant 0 : index
    %c0_3 = arith.constant 0 : index
    %1 = vector.load %arg2[%c0_2, %c0_3] : memref<16x1xi32, #tpu.memory_space<vmem>>, vector<16x1xi32>
    %2 = vector.shape_cast %0 : vector<16x8x32xf32> to vector<128x32xf32>
    %c0_4 = arith.constant 0 : index
    %c0_5 = arith.constant 0 : index
    %3 = vector.load %arg3[%c0_4, %c0_5] : memref<32x32xf32, #tpu.memory_space<vmem>>, vector<32x32xf32>
    %cst = arith.constant dense<0.000000e+00> : vector<128x32xf32>
    %4 = tpu.matmul %2, %3, %cst {dimension_numbers = #tpu.dot_dimension_numbers<[1], [0], [0], [1], [0, 0, 1, 1], [], []>} : vector<128x32xf32>, vector<32x32xf32>, vector<128x32xf32> -> vector<128x32xf32>
    %5 = vector.shape_cast %4 : vector<128x32xf32> to vector<16x8x32xf32>
    "tpu.trace_start"() <{level = 10 : i32, message = "bqh,bkh->bqk"}> : () -> ()
    %cst_6 = arith.constant dense<0.000000e+00> : vector<16x8x8xf32>
    %6 = tpu.matmul %5, %0, %cst_6 {dimension_numbers = #tpu.dot_dimension_numbers<[2], [2], [1], [1], [0, 0, 0, 1, 1, 1], [0], [0]>} : vector<16x8x32xf32>, vector<16x8x32xf32>, vector<16x8x8xf32> -> vector<16x8x8xf32>
    "tpu.trace_stop"() : () -> ()
    %7 = tpu.iota {dimensions = array<i32: 2>} : vector<16x1x8xi32>
    %8 = vector.shape_cast %1 : vector<16x1xi32> to vector<16x1x1xi32>
    %9 = vector.broadcast %8 : vector<16x1x1xi32> to vector<16x1x8xi32>
    %10 = arith.cmpi slt, %7, %9 : vector<16x1x8xi32>
    %cst_7 = arith.constant -1.000000e+09 : f32
    %11 = vector.shape_cast %10 : vector<16x1x8xi1> to vector<16x1x8xi1>
    %12 = vector.broadcast %11 : vector<16x1x8xi1> to vector<16x8x8xi1>
    %13 = vector.broadcast %cst_7 : f32 to vector<16x8x8xf32>
    %14 = arith.select %12, %6, %13 : vector<16x8x8xi1>, vector<16x8x8xf32>
    %c0_8 = arith.constant 0 : index
    %c0_9 = arith.constant 0 : index
    %c0_10 = arith.constant 0 : index
    %15 = vector.load %arg6[%c0_8, %c0_9, %c0_10] : memref<16x8x8xf32, #tpu.memory_space<vmem>>, vector<16x8x8xf32>
    tpu.vector_store %arg6[%c0_8, %c0_9, %c0_10], %14 {strides = array<i32>} : memref<16x8x8xf32, #tpu.memory_space<vmem>>, vector<16x8x8xf32>,
    %cst_11 = arith.constant dense<0xFF800000> : vector<16x8xf32>
    %16 = vector.multi_reduction <maximumf>, %14, %cst_11 [2] : vector<16x8x8xf32> to vector<16x8xf32>
    %17 = vector.shape_cast %16 : vector<16x8xf32> to vector<16x8x1xf32>
    %18 = vector.broadcast %17 : vector<16x8x1xf32> to vector<16x8x8xf32>
    %19 = arith.subf %14, %18 : vector<16x8x8xf32>
    %20 = math.exp %19 : vector<16x8x8xf32>
    %cst_12 = arith.constant dense<0.000000e+00> : vector<16x8xf32>
    %21 = vector.multi_reduction <add>, %20, %cst_12 [2] : vector<16x8x8xf32> to vector<16x8xf32>
    %22 = vector.shape_cast %21 : vector<16x8xf32> to vector<16x8x1xf32>
    %23 = tpu.reciprocal %22 {approx = true} : vector<16x8x1xf32> -> vector<16x8x1xf32>
    %24 = vector.broadcast %23 : vector<16x8x1xf32> to vector<16x8x8xf32>
    %25 = arith.mulf %20, %24 : vector<16x8x8xf32>
    %26 = vector.broadcast %17 : vector<16x8x1xf32> to vector<16x8x8xf32>
    %27 = arith.subf %14, %26 : vector<16x8x8xf32>
    %28 = math.log %22 : vector<16x8x1xf32>
    %29 = vector.broadcast %28 : vector<16x8x1xf32> to vector<16x8x8xf32>
    %30 = arith.subf %27, %29 : vector<16x8x8xf32>
    %c0_13 = arith.constant 0 : index
    %c0_14 = arith.constant 0 : index
    %c0_15 = arith.constant 0 : index
    %31 = vector.load %arg7[%c0_13, %c0_14, %c0_15] : memref<16x8x8xf32, #tpu.memory_space<vmem>>, vector<16x8x8xf32>
    tpu.vector_store %arg7[%c0_13, %c0_14, %c0_15], %25 {strides = array<i32>} : memref<16x8x8xf32, #tpu.memory_space<vmem>>, vector<16x8x8xf32>,
    %c0_16 = arith.constant 0 : index
    %c0_17 = arith.constant 0 : index
    %c0_18 = arith.constant 0 : index
    %32 = vector.load %arg9[%c0_16, %c0_17, %c0_18] : memref<16x8x8xf32, #tpu.memory_space<vmem>>, vector<16x8x8xf32>
    tpu.vector_store %arg9[%c0_16, %c0_17, %c0_18], %30 {strides = array<i32>} : memref<16x8x8xf32, #tpu.memory_space<vmem>>, vector<16x8x8xf32>,
    %33 = tpu.iota {dimensions = array<i32: 1>} : vector<16x8xi32>
    %34 = vector.broadcast %1 : vector<16x1xi32> to vector<16x8xi32>
    %35 = arith.cmpi slt, %33, %34 : vector<16x8xi32>
    %36 = arith.extui %35 : vector<16x8xi1> to vector<16x8xi32>
    %37 = arith.sitofp %36 : vector<16x8xi32> to vector<16x8xf32>
    %38 = arith.mulf %25, %30 : vector<16x8x8xf32>
    %cst_19 = arith.constant dense<0.000000e+00> : vector<16x8xf32>
    %39 = vector.multi_reduction <add>, %38, %cst_19 [2] : vector<16x8x8xf32> to vector<16x8xf32>
    %cst_20 = arith.constant 0.000000e+00 : f32
    %40 = vector.broadcast %cst_20 : f32 to vector<16x8xf32>
    %41 = arith.subf %40, %39 : vector<16x8xf32>
    %42 = arith.mulf %41, %37 : vector<16x8xf32>
    %c0_21 = arith.constant 0 : index
    %c0_22 = arith.constant 0 : index
    %43 = vector.load %arg8[%c0_21, %c0_22] : memref<16x8xf32, #tpu.memory_space<vmem>>, vector<16x8xf32>
    tpu.vector_store %arg8[%c0_21, %c0_22], %42 {strides = array<i32>} : memref<16x8xf32, #tpu.memory_space<vmem>>, vector<16x8xf32>,
    "tpu.trace_start"() <{level = 10 : i32, message = "bqk,bkh->bqh"}> : () -> ()
    %cst_23 = arith.constant dense<0.000000e+00> : vector<16x8x32xf32>
    %44 = tpu.matmul %25, %0, %cst_23 {dimension_numbers = #tpu.dot_dimension_numbers<[2], [1], [1], [2], [0, 0, 0, 1, 1, 2], [0], [0]>} : vector<16x8x8xf32>, vector<16x8x32xf32>, vector<16x8x32xf32> -> vector<16x8x32xf32>
    "tpu.trace_stop"() : () -> ()
    %45 = tpu.iota {dimensions = array<i32: 1>} : vector<16x8x1xi32>
    %46 = vector.shape_cast %1 : vector<16x1xi32> to vector<16x1x1xi32>
    %47 = vector.broadcast %46 : vector<16x1x1xi32> to vector<16x8x1xi32>
    %48 = arith.cmpi slt, %45, %47 : vector<16x8x1xi32>
    %49 = arith.extui %48 : vector<16x8x1xi1> to vector<16x8x1xi32>
    %50 = arith.sitofp %49 : vector<16x8x1xi32> to vector<16x8x1xf32>
    %51 = vector.broadcast %50 : vector<16x8x1xf32> to vector<16x8x32xf32>
    %52 = arith.mulf %44, %51 : vector<16x8x32xf32>
    %cst_24 = arith.constant dense<0.000000e+00> : vector<16x32xf32>
    %53 = vector.multi_reduction <add>, %52, %cst_24 [1] : vector<16x8x32xf32> to vector<16x32xf32>
    %54 = arith.sitofp %1 : vector<16x1xi32> to vector<16x1xf32>
    %cst_25 = arith.constant 1.000000e+00 : f32
    %55 = vector.broadcast %cst_25 : f32 to vector<16x1xf32>
    %56 = arith.maximumf %54, %55 : vector<16x1xf32>
    %cst_26 = arith.constant 8.000000e+00 : f32
    %57 = vector.broadcast %cst_26 : f32 to vector<16x1xf32>
    %58 = arith.minimumf %56, %57 : vector<16x1xf32>
    %59 = tpu.reciprocal %58 {approx = true} : vector<16x1xf32> -> vector<16x1xf32>
    %60 = vector.broadcast %59 : vector<16x1xf32> to vector<16x32xf32>
    %61 = arith.mulf %53, %60 : vector<16x32xf32>
    %c0_27 = arith.constant 0 : index
    %c0_28 = arith.constant 0 : index
    %62 = vector.load %arg4[%c0_27, %c0_28] : memref<32x10xf32, #tpu.memory_space<vmem>>, vector<32x10xf32>
    %cst_29 = arith.constant dense<0.000000e+00> : vector<16x10xf32>
    %63 = tpu.matmul %61, %62, %cst_29 {dimension_numbers = #tpu.dot_dimension_numbers<[1], [0], [0], [1], [0, 0, 1, 1], [], []>} : vector<16x32xf32>, vector<32x10xf32>, vector<16x10xf32> -> vector<16x10xf32>
    %c0_30 = arith.constant 0 : index
    %c0_31 = arith.constant 0 : index
    %64 = vector.load %arg5[%c0_30, %c0_31] : memref<1x10xf32, #tpu.memory_space<vmem>>, vector<1x10xf32>
    %65 = vector.broadcast %64 : vector<1x10xf32> to vector<16x10xf32>
    %66 = arith.addf %63, %65 : vector<16x10xf32>
    %c0_32 = arith.constant 0 : index
    %c0_33 = arith.constant 0 : index
    %67 = vector.load %arg10[%c0_32, %c0_33] : memref<16x10xf32, #tpu.memory_space<vmem>>, vector<16x10xf32>
    tpu.vector_store %arg10[%c0_32, %c0_33], %66 {strides = array<i32>} : memref<16x10xf32, #tpu.memory_space<vmem>>, vector<16x10xf32>,
    return
  }
  func.func @transform_0(%arg0: i32) -> (i32, i32, i32) {
    %c0_i32 = arith.constant 0 : i32
    %c0_i32_0 = arith.constant 0 : i32
    %c0_i32_1 = arith.constant 0 : i32
    return %arg0, %c0_i32, %c0_i32_0 : i32, i32, i32
  }
  func.func @transform_1(%arg0: i32) -> (i32, i32) {
    %c0_i32 = arith.constant 0 : i32
    %c0_i32_0 = arith.constant 0 : i32
    return %arg0, %c0_i32 : i32, i32
  }
  func.func @transform_2(%arg0: i32) -> (i32, i32) {
    %c0_i32 = arith.constant 0 : i32
    %c0_i32_0 = arith.constant 0 : i32
    %c0_i32_1 = arith.constant 0 : i32
    return %c0_i32, %c0_i32_0 : i32, i32
  }
  func.func @transform_3(%arg0: i32) -> (i32, i32) {
    %c0_i32 = arith.constant 0 : i32
    %c0_i32_0 = arith.constant 0 : i32
    %c0_i32_1 = arith.constant 0 : i32
    return %c0_i32, %c0_i32_0 : i32, i32
  }
  func.func @transform_4(%arg0: i32) -> (i32, i32) {
    %c0_i32 = arith.constant 0 : i32
    %c0_i32_0 = arith.constant 0 : i32
    %c0_i32_1 = arith.constant 0 : i32
    return %c0_i32, %c0_i32_0 : i32, i32
  }
  func.func @transform_5(%arg0: i32) -> (i32, i32, i32) {
    %c0_i32 = arith.constant 0 : i32
    %c0_i32_0 = arith.constant 0 : i32
    %c0_i32_1 = arith.constant 0 : i32
    return %arg0, %c0_i32, %c0_i32_0 : i32, i32, i32
  }
  func.func @transform_6(%arg0: i32) -> (i32, i32, i32) {
    %c0_i32 = arith.constant 0 : i32
    %c0_i32_0 = arith.constant 0 : i32
    %c0_i32_1 = arith.constant 0 : i32
    return %arg0, %c0_i32, %c0_i32_0 : i32, i32, i32
  }
  func.func @transform_7(%arg0: i32) -> (i32, i32) {
    %c0_i32 = arith.constant 0 : i32
    %c0_i32_0 = arith.constant 0 : i32
    return %arg0, %c0_i32 : i32, i32
  }
  func.func @transform_8(%arg0: i32) -> (i32, i32, i32) {
    %c0_i32 = arith.constant 0 : i32
    %c0_i32_0 = arith.constant 0 : i32
    %c0_i32_1 = arith.constant 0 : i32
    return %arg0, %c0_i32, %c0_i32_0 : i32, i32, i32
  }
  func.func @transform_9(%arg0: i32) -> (i32, i32) {
    %c0_i32 = arith.constant 0 : i32
    %c0_i32_0 = arith.constant 0 : i32
    return %arg0, %c0_i32 : i32, i32
  }
}

</mosaic_0001>

<llo_original>
// kernel: tpu_custom_call.1
$region0: #{tpu_custom_call.1}
  #allocation0 [shape = 'u32[]', space=smem, size = 0x4, offset = 0x4, fixed_abs, tag = 'smem constant byte address 0x4 - core index']
  #allocation1 [shape = 'u32[144,128]{1,0:T(1,128)}', space=vmem, size = 0x12000, scoped, tag = 'internal scratch']
  %s0 = inlined_call_operand.hbm [shape: f32[32,8,32], index: 0, kind: input, shape index: {}]
  %s1 = inlined_call_operand.vmem [shape: s32[32,1], index: 1, kind: input, shape index: {}]
  %s2 = inlined_call_operand.vmem [shape: f32[32,32], index: 2, kind: input, shape index: {}]
  %s3 = inlined_call_operand.vmem [shape: f32[32,10], index: 3, kind: input, shape index: {}]
  %s4 = inlined_call_operand.vmem [shape: f32[1,10], index: 4, kind: input, shape index: {}]
  %s5 = inlined_call_operand.vmem [shape: f32[32,8,8], index: 5, kind: output, shape index: {0}]
  %s6 = inlined_call_operand.vmem [shape: f32[32,8,8], index: 6, kind: output, shape index: {1}]
  %s7 = inlined_call_operand.vmem [shape: f32[32,8], index: 7, kind: output, shape index: {2}]
  %s8 = inlined_call_operand.vmem [shape: f32[32,8,8], index: 8, kind: output, shape index: {3}]
  %s9 = inlined_call_operand.vmem [shape: f32[32,10], index: 9, kind: output, shape index: {4}]
  %10 = xla_tuple %s5, %s6, %s7, %s8, %s9
  %s11 = sld [smem:[#allocation0]]
  $region89: #{tpu_custom_call.1} parent=0
    _
  %s13 = ssub.s32 1, %s11
  %s14 = scalar_select 0, %s13, %s11
  $region1: #{tpu_custom_call.1} parent=0
    #allocation2 [shape = 'u8[131072]{0}', space=vmem, size = 0x20000, scoped, tag = 'input window, operand 0']
    #allocation3 [shape = 's32[2]{0}', space=sflag, size = 0x8, scoped, tag = 'scoped memory for tpu_custom_call.1']
    %15 = vsyncpa [#allocation3], 0
    %s16 = scalar_lea.sflag [#allocation3], 1
    %17 = vsyncpa %s16, 0
    loop: start=0, step=1, limit=4
    $region2: #{tpu_custom_call.1} parent=1 // loop_pre_header
      _
    $region3: #{tpu_custom_call.1} parent=1 // loop_header
      %s19 = sphi 0, %s23
      %p20 = scmp.ge.s32.totalorder %s19, 4
      %s29 = sphi 0, %s31
      %s32 = sphi 0, %s29
      %s33 = sphi 0, %s32
      %s49 = sphi 0, %s33
      %s55 = sphi 0, %s57
      %s58 = sphi 0, %s55
      %s59 = sphi 0, %s58
      %s75 = sphi 0, %s59
      %s79 = sphi 0, %s79
      %s81 = sphi 0, %s79
      %s82 = sphi 0, %s81
      %s96 = sphi 0, %s82
      %s100 = sphi 0, %s100
      %s102 = sphi 0, %s100
      %s103 = sphi 0, %s102
      %s117 = sphi 0, %s103
      %s121 = sphi 0, %s121
      %s123 = sphi 0, %s121
      %s124 = sphi 0, %s123
      %s138 = sphi 0, %s124
      %s144 = sphi 0, %s146
      %s147 = sphi 0, %s144
      %s148 = sphi 0, %s147
      %s164 = sphi 0, %s148
      %s170 = sphi 0, %s172
      %s173 = sphi 0, %s170
      %s174 = sphi 0, %s173
      %s190 = sphi 0, %s174
      %s196 = sphi 0, %s198
      %s199 = sphi 0, %s196
      %s200 = sphi 0, %s199
      %s216 = sphi 0, %s200
      %s222 = sphi 0, %s224
      %s225 = sphi 0, %s222
      %s226 = sphi 0, %s225
      %s242 = sphi 0, %s226
      %s248 = sphi 0, %s250
      %s251 = sphi 0, %s248
      %s252 = sphi 0, %s251
      %s268 = sphi 0, %s252
    $region4: #{tpu_custom_call.1} parent=1 // loop_header_branch
      %22 = sbr.rel (%p20) target = $region8
    $region5: #{tpu_custom_call.1} parent=1 // loop_body
      %s24 = ssub.s32 %s19, 1
      %s25 = ssub.s32 %s19, 2
      %s26 = sadd.s32 %s19, 1
      %s27 = ssub.s32 %s19, %s26
      %p28 = scmp.eq.s32.totalorder %s27, 0
      %s30 = sadd.s32 %s29, 1
      %s31 = scalar_select %p28, %s29, %s30
      %p34 = pneg %p28
      %p35 = scmp.eq.s32.totalorder %s19, 1
      %p36 = por %p34, %p35
      %p37 = scmp.ne.s32.totalorder %s29, %s32
      %p38 = scmp.eq.s32.totalorder %s19, 0
      %p39 = por %p37, %p38
      %p40 = scmp.ne.s32.totalorder %s29, %s32
      %p41 = scmp.eq.s32.totalorder %s24, 1
      %p42 = por %p40, %p41
      %p43 = scmp.ne.s32.totalorder %s32, %s33
      %p44 = scmp.eq.s32.totalorder %s24, 0
      %p45 = por %p43, %p44
      %p46 = scmp.ne.s32.totalorder %s32, %s33
      %p47 = scmp.eq.s32.totalorder %s25, 1
      %p48 = por %p46, %p47
      %p50 = scmp.ne.s32.totalorder %s33, %s49
      %p51 = scmp.eq.s32.totalorder %s25, 0
      %p52 = por %p50, %p51
      %s53 = ssub.s32 %s19, %s26
      %p54 = scmp.eq.s32.totalorder %s53, 0
      %s56 = sadd.s32 %s55, 1
      %s57 = scalar_select %p54, %s55, %s56
      %p60 = pneg %p54
      %p61 = scmp.eq.s32.totalorder %s19, 1
      %p62 = por %p60, %p61
      %p63 = scmp.ne.s32.totalorder %s55, %s58
      %p64 = scmp.eq.s32.totalorder %s19, 0
      %p65 = por %p63, %p64
      %p66 = scmp.ne.s32.totalorder %s55, %s58
      %p67 = scmp.eq.s32.totalorder %s24, 1
      %p68 = por %p66, %p67
      %p69 = scmp.ne.s32.totalorder %s58, %s59
      %p70 = scmp.eq.s32.totalorder %s24, 0
      %p71 = por %p69, %p70
      %p72 = scmp.ne.s32.totalorder %s58, %s59
      %p73 = scmp.eq.s32.totalorder %s25, 1
      %p74 = por %p72, %p73
      %p76 = scmp.ne.s32.totalorder %s59, %s75
      %p77 = scmp.eq.s32.totalorder %s25, 0
      %p78 = por %p76, %p77
      %s80 = sadd.s32 %s79, 1
      %p83 = scmp.eq.s32.totalorder %s19, 1
      %p84 = scmp.ne.s32.totalorder %s79, %s81
      %p85 = scmp.eq.s32.totalorder %s19, 0
      %p86 = por %p84, %p85
      %p87 = scmp.ne.s32.totalorder %s79, %s81
      %p88 = scmp.eq.s32.totalorder %s24, 1
      %p89 = por %p87, %p88
      %p90 = scmp.ne.s32.totalorder %s81, %s82
      %p91 = scmp.eq.s32.totalorder %s24, 0
      %p92 = por %p90, %p91
      %p93 = scmp.ne.s32.totalorder %s81, %s82
      %p94 = scmp.eq.s32.totalorder %s25, 1
      %p95 = por %p93, %p94
      %p97 = scmp.ne.s32.totalorder %s82, %s96
      %p98 = scmp.eq.s32.totalorder %s25, 0
      %p99 = por %p97, %p98
      %s101 = sadd.s32 %s100, 1
      %p104 = scmp.eq.s32.totalorder %s19, 1
      %p105 = scmp.ne.s32.totalorder %s100, %s102
      %p106 = scmp.eq.s32.totalorder %s19, 0
      %p107 = por %p105, %p106
      %p108 = scmp.ne.s32.totalorder %s100, %s102
      %p109 = scmp.eq.s32.totalorder %s24, 1
      %p110 = por %p108, %p109
      %p111 = scmp.ne.s32.totalorder %s102, %s103
      %p112 = scmp.eq.s32.totalorder %s24, 0
      %p113 = por %p111, %p112
      %p114 = scmp.ne.s32.totalorder %s102, %s103
      %p115 = scmp.eq.s32.totalorder %s25, 1
      %p116 = por %p114, %p115
      %p118 = scmp.ne.s32.totalorder %s103, %s117
      %p119 = scmp.eq.s32.totalorder %s25, 0
      %p120 = por %p118, %p119
      %s122 = sadd.s32 %s121, 1
      %p125 = scmp.eq.s32.totalorder %s19, 1
      %p126 = scmp.ne.s32.totalorder %s121, %s123
      %p127 = scmp.eq.s32.totalorder %s19, 0
      %p128 = por %p126, %p127
      %p129 = scmp.ne.s32.totalorder %s121, %s123
      %p130 = scmp.eq.s32.totalorder %s24, 1
      %p131 = por %p129, %p130
      %p132 = scmp.ne.s32.totalorder %s123, %s124
      %p133 = scmp.eq.s32.totalorder %s24, 0
      %p134 = por %p132, %p133
      %p135 = scmp.ne.s32.totalorder %s123, %s124
      %p136 = scmp.eq.s32.totalorder %s25, 1
      %p137 = por %p135, %p136
      %p139 = scmp.ne.s32.totalorder %s124, %s138
      %p140 = scmp.eq.s32.totalorder %s25, 0
      %p141 = por %p139, %p140
      %s142 = ssub.s32 %s19, %s26
      %p143 = scmp.eq.s32.totalorder %s142, 0
      %s145 = sadd.s32 %s144, 1
      %s146 = scalar_select %p143, %s144, %s145
      %p149 = pneg %p143
      %p150 = scmp.eq.s32.totalorder %s19, 1
      %p151 = por %p149, %p150
      %p152 = scmp.ne.s32.totalorder %s144, %s147
      %p153 = scmp.eq.s32.totalorder %s19, 0
      %p154 = por %p152, %p153
      %p155 = scmp.ne.s32.totalorder %s144, %s147
      %p156 = scmp.eq.s32.totalorder %s24, 1
      %p157 = por %p155, %p156
      %p158 = scmp.ne.s32.totalorder %s147, %s148
      %p159 = scmp.eq.s32.totalorder %s24, 0
      %p160 = por %p158, %p159
      %p161 = scmp.ne.s32.totalorder %s147, %s148
      %p162 = scmp.eq.s32.totalorder %s25, 1
      %p163 = por %p161, %p162
      %p165 = scmp.ne.s32.totalorder %s148, %s164
      %p166 = scmp.eq.s32.totalorder %s25, 0
      %p167 = por %p165, %p166
      %s168 = ssub.s32 %s19, %s26
      %p169 = scmp.eq.s32.totalorder %s168, 0
      %s171 = sadd.s32 %s170, 1
      %s172 = scalar_select %p169, %s170, %s171
      %p175 = pneg %p169
      %p176 = scmp.eq.s32.totalorder %s19, 1
      %p177 = por %p175, %p176
      %p178 = scmp.ne.s32.totalorder %s170, %s173
      %p179 = scmp.eq.s32.totalorder %s19, 0
      %p180 = por %p178, %p179
      %p181 = scmp.ne.s32.totalorder %s170, %s173
      %p182 = scmp.eq.s32.totalorder %s24, 1
      %p183 = por %p181, %p182
      %p184 = scmp.ne.s32.totalorder %s173, %s174
      %p185 = scmp.eq.s32.totalorder %s24, 0
      %p186 = por %p184, %p185
      %p187 = scmp.ne.s32.totalorder %s173, %s174
      %p188 = scmp.eq.s32.totalorder %s25, 1
      %p189 = por %p187, %p188
      %p191 = scmp.ne.s32.totalorder %s174, %s190
      %p192 = scmp.eq.s32.totalorder %s25, 0
      %p193 = por %p191, %p192
      %s194 = ssub.s32 %s19, %s26
      %p195 = scmp.eq.s32.totalorder %s194, 0
      %s197 = sadd.s32 %s196, 1
      %s198 = scalar_select %p195, %s196, %s197
      %p201 = pneg %p195
      %p202 = scmp.eq.s32.totalorder %s19, 1
      %p203 = por %p201, %p202
      %p204 = scmp.ne.s32.totalorder %s196, %s199
      %p205 = scmp.eq.s32.totalorder %s19, 0
      %p206 = por %p204, %p205
      %p207 = scmp.ne.s32.totalorder %s196, %s199
      %p208 = scmp.eq.s32.totalorder %s24, 1
      %p209 = por %p207, %p208
      %p210 = scmp.ne.s32.totalorder %s199, %s200
      %p211 = scmp.eq.s32.totalorder %s24, 0
      %p212 = por %p210, %p211
      %p213 = scmp.ne.s32.totalorder %s199, %s200
      %p214 = scmp.eq.s32.totalorder %s25, 1
      %p215 = por %p213, %p214
      %p217 = scmp.ne.s32.totalorder %s200, %s216
      %p218 = scmp.eq.s32.totalorder %s25, 0
      %p219 = por %p217, %p218
      %s220 = ssub.s32 %s19, %s26
      %p221 = scmp.eq.s32.totalorder %s220, 0
      %s223 = sadd.s32 %s222, 1
      %s224 = scalar_select %p221, %s222, %s223
      %p227 = pneg %p221
      %p228 = scmp.eq.s32.totalorder %s19, 1
      %p229 = por %p227, %p228
      %p230 = scmp.ne.s32.totalorder %s222, %s225
      %p231 = scmp.eq.s32.totalorder %s19, 0
      %p232 = por %p230, %p231
      %p233 = scmp.ne.s32.totalorder %s222, %s225
      %p234 = scmp.eq.s32.totalorder %s24, 1
      %p235 = por %p233, %p234
      %p236 = scmp.ne.s32.totalorder %s225, %s226
      %p237 = scmp.eq.s32.totalorder %s24, 0
      %p238 = por %p236, %p237
      %p239 = scmp.ne.s32.totalorder %s225, %s226
      %p240 = scmp.eq.s32.totalorder %s25, 1
      %p241 = por %p239, %p240
      %p243 = scmp.ne.s32.totalorder %s226, %s242
      %p244 = scmp.eq.s32.totalorder %s25, 0
      %p245 = por %p243, %p244
      %s246 = ssub.s32 %s19, %s26
      %p247 = scmp.eq.s32.totalorder %s246, 0
      %s249 = sadd.s32 %s248, 1
      %s250 = scalar_select %p247, %s248, %s249
      %p253 = pneg %p247
      %p254 = scmp.eq.s32.totalorder %s19, 1
      %p255 = por %p253, %p254
      %p256 = scmp.ne.s32.totalorder %s248, %s251
      %p257 = scmp.eq.s32.totalorder %s19, 0
      %p258 = por %p256, %p257
      %p259 = scmp.ne.s32.totalorder %s248, %s251
      %p260 = scmp.eq.s32.totalorder %s24, 1
      %p261 = por %p259, %p260
      %p262 = scmp.ne.s32.totalorder %s251, %s252
      %p263 = scmp.eq.s32.totalorder %s24, 0
      %p264 = por %p262, %p263
      %p265 = scmp.ne.s32.totalorder %s251, %s252
      %p266 = scmp.eq.s32.totalorder %s25, 1
      %p267 = por %p265, %p266
      %p269 = scmp.ne.s32.totalorder %s252, %s268
      %p270 = scmp.eq.s32.totalorder %s25, 0
      %p271 = por %p269, %p270
      %p272 = scmp.le.s32.totalorder 1, %s19
      %p273 = scmp.lt.s32.totalorder %s19, 3
      %p274 = pnand %p272, %p273
      %p275 = pneg %p274
      // Predicated region
      $region9: #{tpu_custom_call.1} parent=5 // pred_check
        _
      $region10: #{tpu_custom_call.1} parent=5 // pred_check_branch
        %277 = sbr.rel (%p274) target = $region12
      $region11: #{tpu_custom_call.1} parent=5 // pred_region
        %s278 = ssub.s32 %s19, 1
        // Predicated region
        $region13: #{tpu_custom_call.1} parent=11 // pred_check
          %p279 = pneg %p92
        $region14: #{tpu_custom_call.1} parent=11 // pred_check_branch
          %281 = sbr.rel (%p279) target = $region16
        $region15: #{tpu_custom_call.1} parent=11 // pred_region
          _
        $region16: #{tpu_custom_call.1} parent=11 // pred_fallthru
          _
        // Predicated region
        $region17: #{tpu_custom_call.1} parent=11 // pred_check
          %p282 = pneg %p113
        $region18: #{tpu_custom_call.1} parent=11 // pred_check_branch
          %284 = sbr.rel (%p282) target = $region20
        $region19: #{tpu_custom_call.1} parent=11 // pred_region
          _
        $region20: #{tpu_custom_call.1} parent=11 // pred_fallthru
          _
        // Predicated region
        $region21: #{tpu_custom_call.1} parent=11 // pred_check
          %p285 = pneg %p134
        $region22: #{tpu_custom_call.1} parent=11 // pred_check_branch
          %287 = sbr.rel (%p285) target = $region24
        $region23: #{tpu_custom_call.1} parent=11 // pred_region
          _
        $region24: #{tpu_custom_call.1} parent=11 // pred_fallthru
          _
      $region12: #{tpu_custom_call.1} parent=5 // pred_fallthru
        _
      %p288 = scmp.lt.s32.totalorder %s19, 2
      // Predicated region
      $region25: #{tpu_custom_call.1} parent=5 // pred_check
        %p289 = pneg %p288
      $region26: #{tpu_custom_call.1} parent=5 // pred_check_branch
        %291 = sbr.rel (%p289) target = $region28
      $region27: #{tpu_custom_call.1} parent=5 // pred_region
        // Predicated region
        $region29: #{tpu_custom_call.1} parent=27 // pred_check
          %p292 = pneg %p39
        $region30: #{tpu_custom_call.1} parent=27 // pred_check_branch
          %294 = sbr.rel (%p292) target = $region32
        $region31: #{tpu_custom_call.1} parent=27 // pred_region
          %s295 = sand.u32 %s29, 1
          %s296 = scalar_lea.sflag [#allocation3], %s295
          %s297 = sand.u32 %s29, 1
          %s298 = smul.addr %s297, 128
          %s299 = scalar_lea.vmem [#allocation2], %s298
          %s300 = smul.u32 16, %s19
          %s302 = ssub.s32 2048, 2048
          %303 = vsyncadd %s296, %s302
          %s304 = smul.addr %s300, 128
          %s305 = scalar_lea.hbm %s0, %s304
          %s306 = sshll.u32 %s299, 4
          %s307 = int_to_ptr.vmem [resolvable:$true] %s306
          %312 = dma.hbm_to_vmem [thread:$0]  %s305, 2048, %s307, %s296, 128, 128, 8
        $region32: #{tpu_custom_call.1} parent=27 // pred_fallthru
          _
        // Predicated region
        $region33: #{tpu_custom_call.1} parent=27 // pred_check
          %p313 = pneg %p65
        $region34: #{tpu_custom_call.1} parent=27 // pred_check_branch
          %315 = sbr.rel (%p313) target = $region36
        $region35: #{tpu_custom_call.1} parent=27 // pred_region
          %s316 = smul.u32 2, %s19
          %p317 = scmp.lt.s32.totalorder %s316, 3
          %s318 = scalar_select %p317, %s316, 3
          %s319 = smul.addr %s318, 8
          %s320 = scalar_lea.vmem %s1, %s319
          %s321 = smul.u32 2, %s19
        $region36: #{tpu_custom_call.1} parent=27 // pred_fallthru
          _
      $region28: #{tpu_custom_call.1} parent=5 // pred_fallthru
        _
      %p322 = scmp.le.s32.totalorder 1, %s19
      %p323 = scmp.lt.s32.totalorder %s19, 3
      %p324 = pnand %p322, %p323
      %p325 = pneg %p324
      // Predicated region
      $region37: #{tpu_custom_call.1} parent=5 // pred_check
        _
      $region38: #{tpu_custom_call.1} parent=5 // pred_check_branch
        %327 = sbr.rel (%p324) target = $region40
      $region39: #{tpu_custom_call.1} parent=5 // pred_region
        %s328 = ssub.s32 %s19, 1
        %s329 = sand.u32 %s32, 1
        %s330 = scalar_lea.sflag [#allocation3], %s329
        %s331 = sand.u32 %s32, 1
        %s332 = smul.addr %s331, 128
        %s333 = scalar_lea.vmem [#allocation2], %s332
        // Predicated region
        $region41: #{tpu_custom_call.1} parent=39 // pred_check
          %p334 = pneg %p45
        $region42: #{tpu_custom_call.1} parent=39 // pred_check_branch
          %336 = sbr.rel (%p334) target = $region44
        $region43: #{tpu_custom_call.1} parent=39 // pred_region
          %337 = dma.done %s330, 2048
        $region44: #{tpu_custom_call.1} parent=39 // pred_fallthru
          _
        %s338 = sand.u32 %s32, 1
        %s339 = scalar_lea.sflag [#allocation3], %s338
        %s340 = sand.u32 %s32, 1
        %s341 = smul.addr %s340, 128
        %s342 = scalar_lea.vmem [#allocation2], %s341
        %p343 = pneg %p45
        %p344 = pneg %p42
        %s345 = smul.u32 2, %s24
        %p346 = scmp.lt.s32.totalorder %s345, 3
        %s347 = scalar_select %p346, %s345, 3
        %s348 = smul.addr %s347, 8
        %s349 = scalar_lea.vmem %s1, %s348
        %p350 = pneg %p71
        %p351 = pneg %p68
        %p352 = pneg %p92
        %p353 = pneg %p89
        %p354 = pneg %p113
        %p355 = pneg %p110
        %p356 = pneg %p134
        %p357 = pneg %p131
        %p358 = pneg %p160
        %p359 = pneg %p157
        %s360 = smul.u32 16, %s24
        %p361 = scmp.lt.s32.totalorder %s360, 31
        %s362 = scalar_select %p361, %s360, 31
        %s363 = smul.addr %s362, 8
        %s364 = scalar_lea.vmem %s5, %s363
        %p365 = pneg %p186
        %p366 = pneg %p183
        %s367 = smul.u32 16, %s24
        %p368 = scmp.lt.s32.totalorder %s367, 31
        %s369 = scalar_select %p368, %s367, 31
        %s370 = smul.addr %s369, 8
        %s371 = scalar_lea.vmem %s6, %s370
        %p372 = pneg %p212
        %p373 = pneg %p209
        %s374 = smul.u32 2, %s24
        %p375 = scmp.lt.s32.totalorder %s374, 3
        %s376 = scalar_select %p375, %s374, 3
        %s377 = smul.addr %s376, 8
        %s378 = scalar_lea.vmem %s7, %s377
        %p379 = pneg %p238
        %p380 = pneg %p235
        %s381 = smul.u32 16, %s24
        %p382 = scmp.lt.s32.totalorder %s381, 31
        %s383 = scalar_select %p382, %s381, 31
        %s384 = smul.addr %s383, 8
        %s385 = scalar_lea.vmem %s8, %s384
        %p386 = pneg %p264
        %p387 = pneg %p261
        %s388 = smul.u32 2, %s24
        %p389 = scmp.lt.s32.totalorder %s388, 3
        %s390 = scalar_select %p389, %s388, 3
        %s391 = smul.addr %s390, 8
        %s392 = scalar_lea.vmem %s9, %s391
        %s393 = smul.u32 16, %s24
        %s394 = smul.u32 2, %s24
        %p395 = scmp.lt.s32.totalorder %s394, 3
        %s396 = scalar_select %p395, %s394, 3
        %s397 = smul.addr %s396, 8
        %s398 = scalar_lea.vmem %s1, %s397
        %s399 = smul.u32 2, %s24
        %s400 = smul.u32 16, %s24
        %p401 = scmp.lt.s32.totalorder %s400, 31
        %s402 = scalar_select %p401, %s400, 31
        %s403 = smul.addr %s402, 8
        %s404 = scalar_lea.vmem %s5, %s403
        %s405 = smul.u32 16, %s24
        %s406 = smul.u32 16, %s24
        %p407 = scmp.lt.s32.totalorder %s406, 31
        %s408 = scalar_select %p407, %s406, 31
        %s409 = smul.addr %s408, 8
        %s410 = scalar_lea.vmem %s6, %s409
        %s411 = smul.u32 16, %s24
        %s412 = smul.u32 2, %s24
        %p413 = scmp.lt.s32.totalorder %s412, 3
        %s414 = scalar_select %p413, %s412, 3
        %s415 = smul.addr %s414, 8
        %s416 = scalar_lea.vmem %s7, %s415
        %s417 = smul.u32 2, %s24
        %s418 = smul.u32 16, %s24
        %p419 = scmp.lt.s32.totalorder %s418, 31
        %s420 = scalar_select %p419, %s418, 31
        %s421 = smul.addr %s420, 8
        %s422 = scalar_lea.vmem %s8, %s421
        %s423 = smul.u32 16, %s24
        %s424 = smul.u32 2, %s24
        %p425 = scmp.lt.s32.totalorder %s424, 3
        %s426 = scalar_select %p425, %s424, 3
        %s427 = smul.addr %s426, 8
        %s428 = scalar_lea.vmem %s9, %s427
        %s429 = smul.u32 2, %s24
        %v430 = vld [vmem:[%s333] sm:$0xff]
        %v431 = vld [vmem:[%s333 + $0x8] sm:$0xff]
        %v432 = vld [vmem:[%s333 + $0x10] sm:$0xff]
        %v433 = vld [vmem:[%s333 + $0x18] sm:$0xff]
        %v434 = vld [vmem:[%s333 + $0x20] sm:$0xff]
        %v435 = vld [vmem:[%s333 + $0x28] sm:$0xff]
        %v436 = vld [vmem:[%s333 + $0x30] sm:$0xff]
        %v437 = vld [vmem:[%s333 + $0x38] sm:$0xff]
        %v438 = vld [vmem:[%s333 + $0x40] sm:$0xff]
        %v439 = vld [vmem:[%s333 + $0x48] sm:$0xff]
        %v440 = vld [vmem:[%s333 + $0x50] sm:$0xff]
        %v441 = vld [vmem:[%s333 + $0x58] sm:$0xff]
        %v442 = vld [vmem:[%s333 + $0x60] sm:$0xff]
        %v443 = vld [vmem:[%s333 + $0x68] sm:$0xff]
        %v444 = vld [vmem:[%s333 + $0x70] sm:$0xff]
        %v445 = vld [vmem:[%s333 + $0x78] sm:$0xff]
        %v446 = vld [vmem:[%s398] sm:$0xff]
        %v447 = vld [vmem:[%s398 + $0x8] sm:$0xff]
        %v448 = vld [vmem:[%s2] sm:$0xff]
        %v449 = vld [vmem:[%s2 + $0x8] sm:$0xff]
        %v450 = vld [vmem:[%s2 + $0x10] sm:$0xff]
        %v451 = vld [vmem:[%s2 + $0x18] sm:$0xff]
        %vm452 = vcmask 261120
        %v454 = vsel %vm452, %v430, 0
        %v457 = vsel %vm452, %v431, 0
        %v460 = vsel %vm452, %v432, 0
        %v463 = vsel %vm452, %v433, 0
        %v466 = vsel %vm452, %v434, 0
        %v469 = vsel %vm452, %v435, 0
        %v472 = vsel %vm452, %v436, 0
        %v475 = vsel %vm452, %v437, 0
        %v478 = vsel %vm452, %v438, 0
        %v481 = vsel %vm452, %v439, 0
        %v484 = vsel %vm452, %v440, 0
        %v487 = vsel %vm452, %v441, 0
        %v490 = vsel %vm452, %v442, 0
        %v493 = vsel %vm452, %v443, 0
        %v496 = vsel %vm452, %v444, 0
        %v499 = vsel %vm452, %v445, 0
        %501 = vmatprep.subr.mxu0 0.0
        %502 = vmatpush1.msra.mxu0 %v448
        %503 = vmatprep.subr.mxu0 0.0
        %504 = vmatpush1.msra.mxu0 %v449
        %505 = vmatprep.subr.mxu0 0.0
        %506 = vmatpush1.msra.mxu0 %v450
        %507 = vmatprep.subr.mxu0 0.0
        %508 = vmatpush1.msra.mxu0 %v451
        %509 = vmatprep.subr.mxu0 0.0
        %510 = vmatpush1.msra.mxu0 0.0
        %511 = vmatprep.subr.mxu0 0.0
        %512 = vmatpush1.msra.mxu0 0.0
        %513 = vmatprep.subr.mxu0 0.0
        %514 = vmatpush1.msra.mxu0 0.0
        %515 = vmatprep.subr.mxu0 0.0
        %516 = vmatpush1.msra.mxu0 0.0
        %517 = vmatprep.subr.mxu0 0.0
        %518 = vmatpush1.msra.mxu0 0.0
        %519 = vmatprep.subr.mxu0 0.0
        %520 = vmatpush1.msra.mxu0 0.0
        %521 = vmatprep.subr.mxu0 0.0
        %522 = vmatpush1.msra.mxu0 0.0
        %523 = vmatprep.subr.mxu0 0.0
        %524 = vmatpush1.msra.mxu0 0.0
        %525 = vmatprep.subr.mxu0 0.0
        %526 = vmatpush1.msra.mxu0 0.0
        %527 = vmatprep.subr.mxu0 0.0
        %528 = vmatpush1.msra.mxu0 0.0
        %529 = vmatprep.subr.mxu0 0.0
        %530 = vmatpush1.msra.mxu0 0.0
        %531 = vmatprep.subr.mxu0 0.0
        %532 = vmatpush1.msra.mxu0 0.0
        %533 = vmatprep.subr.mxu0 0.0
        %534 = vmatpush1.msra.mxu0 0.0
        %535 = vmatprep.subr.mxu0 0.0
        %536 = vmatpush1.msra.mxu0 0.0
        %537 = vmatprep.subr.mxu0 0.0
        %538 = vmatpush1.msra.mxu0 0.0
        %539 = vmatprep.subr.mxu0 0.0
        %540 = vmatpush1.msra.mxu0 0.0
        %541 = vmatprep.subr.mxu0 0.0
        %542 = vmatpush1.msra.mxu0 0.0
        %543 = vmatprep.subr.mxu0 0.0
        %544 = vmatpush1.msra.mxu0 0.0
        %545 = vmatprep.subr.mxu0 0.0
        %546 = vmatpush1.msra.mxu0 0.0
        %547 = vmatprep.subr.mxu0 0.0
        %548 = vmatpush1.msra.mxu0 0.0
        %549 = vmatprep.subr.mxu0 0.0
        %550 = vmatpush1.msra.mxu0 0.0
        %551 = vmatprep.subr.mxu0 0.0
        %552 = vmatpush1.msra.mxu0 0.0
        %553 = vmatprep.subr.mxu0 0.0
        %554 = vmatpush1.msra.mxu0 0.0
        %555 = vmatprep.subr.mxu0 0.0
        %556 = vmatpush1.msra.mxu0 0.0
        %557 = vmatprep.subr.mxu0 0.0
        %558 = vmatpush1.msra.mxu0 0.0
        %559 = vmatprep.subr.mxu0 0.0
        %560 = vmatpush1.msra.mxu0 0.0
        %561 = vmatprep.subr.mxu0 0.0
        %562 = vmatpush1.msra.mxu0 0.0
        %563 = vmatprep.subr.mxu0 0.0
        %564 = vmatpush1.msra.mxu0 0.0
        %565 = vmatprep.mubr.f32.mxu0 0.0
        %566 = vmatmul.mubr.f32.gmra.mrb[0].mxu0 %v454
        %v567 = vpop.f32.mrb[0].mxu0
        %v568 = vadd.f32 0.0, %v567
        %v569 = vpop.f32.mrb[0].mxu0
        %570 = vmatprep.mubr.f32.mxu0 0.0
        %571 = vmatmul.mubr.f32.gmra.mrb[0].mxu0 %v457
        %v572 = vpop.f32.mrb[0].mxu0
        %v573 = vadd.f32 0.0, %v572
        %v574 = vpop.f32.mrb[0].mxu0
        %575 = vmatprep.mubr.f32.mxu0 0.0
        %576 = vmatmul.mubr.f32.gmra.mrb[0].mxu0 %v460
        %v577 = vpop.f32.mrb[0].mxu0
        %v578 = vadd.f32 0.0, %v577
        %v579 = vpop.f32.mrb[0].mxu0
        %580 = vmatprep.mubr.f32.mxu0 0.0
        %581 = vmatmul.mubr.f32.gmra.mrb[0].mxu0 %v463
        %v582 = vpop.f32.mrb[0].mxu0
        %v583 = vadd.f32 0.0, %v582
        %v584 = vpop.f32.mrb[0].mxu0
        %585 = vmatprep.mubr.f32.mxu0 0.0
        %586 = vmatmul.mubr.f32.gmra.mrb[0].mxu0 %v466
        %v587 = vpop.f32.mrb[0].mxu0
        %v588 = vadd.f32 0.0, %v587
        %v589 = vpop.f32.mrb[0].mxu0
        %590 = vmatprep.mubr.f32.mxu0 0.0
        %591 = vmatmul.mubr.f32.gmra.mrb[0].mxu0 %v469
        %v592 = vpop.f32.mrb[0].mxu0
        %v593 = vadd.f32 0.0, %v592
        %v594 = vpop.f32.mrb[0].mxu0
        %595 = vmatprep.mubr.f32.mxu0 0.0
        %596 = vmatmul.mubr.f32.gmra.mrb[0].mxu0 %v472
        %v597 = vpop.f32.mrb[0].mxu0
        %v598 = vadd.f32 0.0, %v597
        %v599 = vpop.f32.mrb[0].mxu0
        %600 = vmatprep.mubr.f32.mxu0 0.0
        %601 = vmatmul.mubr.f32.gmra.mrb[0].mxu0 %v475
        %v602 = vpop.f32.mrb[0].mxu0
        %v603 = vadd.f32 0.0, %v602
        %v604 = vpop.f32.mrb[0].mxu0
        %605 = vmatprep.mubr.f32.mxu0 0.0
        %606 = vmatmul.mubr.f32.gmra.mrb[0].mxu0 %v478
        %v607 = vpop.f32.mrb[0].mxu0
        %v608 = vadd.f32 0.0, %v607
        %v609 = vpop.f32.mrb[0].mxu0
        %610 = vmatprep.mubr.f32.mxu0 0.0
        %611 = vmatmul.mubr.f32.gmra.mrb[0].mxu0 %v481
        %v612 = vpop.f32.mrb[0].mxu0
        %v613 = vadd.f32 0.0, %v612
        %v614 = vpop.f32.mrb[0].mxu0
        %615 = vmatprep.mubr.f32.mxu0 0.0
        %616 = vmatmul.mubr.f32.gmra.mrb[0].mxu0 %v484
        %v617 = vpop.f32.mrb[0].mxu0
        %v618 = vadd.f32 0.0, %v617
        %v619 = vpop.f32.mrb[0].mxu0
        %620 = vmatprep.mubr.f32.mxu0 0.0
        %621 = vmatmul.mubr.f32.gmra.mrb[0].mxu0 %v487
        %v622 = vpop.f32.mrb[0].mxu0
        %v623 = vadd.f32 0.0, %v622
        %v624 = vpop.f32.mrb[0].mxu0
        %625 = vmatprep.mubr.f32.mxu0 0.0
        %626 = vmatmul.mubr.f32.gmra.mrb[0].mxu0 %v490
        %v627 = vpop.f32.mrb[0].mxu0
        %v628 = vadd.f32 0.0, %v627
        %v629 = vpop.f32.mrb[0].mxu0
        %630 = vmatprep.mubr.f32.mxu0 0.0
        %631 = vmatmul.mubr.f32.gmra.mrb[0].mxu0 %v493
        %v632 = vpop.f32.mrb[0].mxu0
        %v633 = vadd.f32 0.0, %v632
        %v634 = vpop.f32.mrb[0].mxu0
        %635 = vmatprep.mubr.f32.mxu0 0.0
        %636 = vmatmul.mubr.f32.gmra.mrb[0].mxu0 %v496
        %v637 = vpop.f32.mrb[0].mxu0
        %v638 = vadd.f32 0.0, %v637
        %v639 = vpop.f32.mrb[0].mxu0
        %640 = vmatprep.mubr.f32.mxu0 0.0
        %641 = vmatmul.mubr.f32.gmra.mrb[0].mxu0 %v499
        %v642 = vpop.f32.mrb[0].mxu0
        %v643 = vadd.f32 0.0, %v642
        %v644 = vpop.f32.mrb[0].mxu0
        %645 = vdwg.mxu0
        %v647 = vsel %vm452, %v568, 0
        %649 = vmatprep.subr.mxu0 0.0
        %650 = vmatpush1.xpose.msra.mxu0 %v454
        %651 = vmatprep.subr.mxu0 0.0
        %652 = vmatpush1.xpose.msra.mxu0 0.0
        %653 = vmatprep.subr.mxu0 0.0
        %654 = vmatpush1.xpose.msra.mxu0 0.0
        %655 = vmatprep.subr.mxu0 0.0
        %656 = vmatpush1.xpose.msra.mxu0 0.0
        %657 = vmatprep.subr.mxu0 0.0
        %658 = vmatpush1.xpose.msra.mxu0 0.0
        %659 = vmatprep.subr.mxu0 0.0
        %660 = vmatpush1.xpose.msra.mxu0 0.0
        %661 = vmatprep.subr.mxu0 0.0
        %662 = vmatpush1.xpose.msra.mxu0 0.0
        %663 = vmatprep.subr.mxu0 0.0
        %664 = vmatpush1.xpose.msra.mxu0 0.0
        %665 = vmatprep.subr.mxu0 0.0
        %666 = vmatpush1.xpose.msra.mxu0 0.0
        %667 = vmatprep.subr.mxu0 0.0
        %668 = vmatpush1.xpose.msra.mxu0 0.0
        %669 = vmatprep.subr.mxu0 0.0
        %670 = vmatpush1.xpose.msra.mxu0 0.0
        %671 = vmatprep.subr.mxu0 0.0
        %672 = vmatpush1.xpose.msra.mxu0 0.0
        %673 = vmatprep.subr.mxu0 0.0
        %674 = vmatpush1.xpose.msra.mxu0 0.0
        %675 = vmatprep.subr.mxu0 0.0
        %676 = vmatpush1.xpose.msra.mxu0 0.0
        %677 = vmatprep.subr.mxu0 0.0
        %678 = vmatpush1.xpose.msra.mxu0 0.0
        %679 = vmatprep.subr.mxu0 0.0
        %680 = vmatpush1.xpose.msra.mxu0 0.0
        %681 = vmatprep.subr.mxu0 0.0
        %682 = vmatpush1.xpose.msra.mxu0 0.0
        %683 = vmatprep.subr.mxu0 0.0
        %684 = vmatpush1.xpose.msra.mxu0 0.0
        %685 = vmatprep.subr.mxu0 0.0
        %686 = vmatpush1.xpose.msra.mxu0 0.0
        %687 = vmatprep.subr.mxu0 0.0
        %688 = vmatpush1.xpose.msra.mxu0 0.0
        %689 = vmatprep.subr.mxu0 0.0
        %690 = vmatpush1.xpose.msra.mxu0 0.0
        %691 = vmatprep.subr.mxu0 0.0
        %692 = vmatpush1.xpose.msra.mxu0 0.0
        %693 = vmatprep.subr.mxu0 0.0
        %694 = vmatpush1.xpose.msra.mxu0 0.0
        %695 = vmatprep.subr.mxu0 0.0
        %696 = vmatpush1.xpose.msra.mxu0 0.0
        %697 = vmatprep.subr.mxu0 0.0
        %698 = vmatpush1.xpose.msra.mxu0 0.0
        %699 = vmatprep.subr.mxu0 0.0
        %700 = vmatpush1.xpose.msra.mxu0 0.0
        %701 = vmatprep.subr.mxu0 0.0
        %702 = vmatpush1.xpose.msra.mxu0 0.0
        %703 = vmatprep.subr.mxu0 0.0
        %704 = vmatpush1.xpose.msra.mxu0 0.0
        %705 = vmatprep.subr.mxu0 0.0
        %706 = vmatpush1.xpose.msra.mxu0 0.0
        %707 = vmatprep.subr.mxu0 0.0
        %708 = vmatpush1.xpose.msra.mxu0 0.0
        %709 = vmatprep.subr.mxu0 0.0
        %710 = vmatpush1.xpose.msra.mxu0 0.0
        %711 = vmatprep.subr.mxu0 0.0
        %712 = vmatpush1.xpose.msra.mxu0 0.0
        %713 = vmatprep.mubr.f32.mxu0 0.0
        %714 = vmatmul.mubr.f32.gmra.mrb[0].mxu0 %v647
        %v715 = vpop.f32.mrb[0].mxu0
        %v716 = vadd.f32 0.0, %v715
        %v717 = vpop.f32.mrb[0].mxu0
        %718 = vdwg.mxu0
        %v720 = vsel %vm452, %v573, 0
        %722 = vmatprep.subr.mxu0 0.0
        %723 = vmatpush1.xpose.msra.mxu0 %v457
        %724 = vmatprep.subr.mxu0 0.0
        %725 = vmatpush1.xpose.msra.mxu0 0.0
        %726 = vmatprep.subr.mxu0 0.0
        %727 = vmatpush1.xpose.msra.mxu0 0.0
        %728 = vmatprep.subr.mxu0 0.0
        %729 = vmatpush1.xpose.msra.mxu0 0.0
        %730 = vmatprep.subr.mxu0 0.0
        %731 = vmatpush1.xpose.msra.mxu0 0.0
        %732 = vmatprep.subr.mxu0 0.0
        %733 = vmatpush1.xpose.msra.mxu0 0.0
        %734 = vmatprep.subr.mxu0 0.0
        %735 = vmatpush1.xpose.msra.mxu0 0.0
        %736 = vmatprep.subr.mxu0 0.0
        %737 = vmatpush1.xpose.msra.mxu0 0.0
        %738 = vmatprep.subr.mxu0 0.0
        %739 = vmatpush1.xpose.msra.mxu0 0.0
        %740 = vmatprep.subr.mxu0 0.0
        %741 = vmatpush1.xpose.msra.mxu0 0.0
        %742 = vmatprep.subr.mxu0 0.0
        %743 = vmatpush1.xpose.msra.mxu0 0.0
        %744 = vmatprep.subr.mxu0 0.0
        %745 = vmatpush1.xpose.msra.mxu0 0.0
        %746 = vmatprep.subr.mxu0 0.0
        %747 = vmatpush1.xpose.msra.mxu0 0.0
        %748 = vmatprep.subr.mxu0 0.0
        %749 = vmatpush1.xpose.msra.mxu0 0.0
        %750 = vmatprep.subr.mxu0 0.0
        %751 = vmatpush1.xpose.msra.mxu0 0.0
        %752 = vmatprep.subr.mxu0 0.0
        %753 = vmatpush1.xpose.msra.mxu0 0.0
        %754 = vmatprep.subr.mxu0 0.0
        %755 = vmatpush1.xpose.msra.mxu0 0.0
        %756 = vmatprep.subr.mxu0 0.0
        %757 = vmatpush1.xpose.msra.mxu0 0.0
        %758 = vmatprep.subr.mxu0 0.0
        %759 = vmatpush1.xpose.msra.mxu0 0.0
        %760 = vmatprep.subr.mxu0 0.0
        %761 = vmatpush1.xpose.msra.mxu0 0.0
        %762 = vmatprep.subr.mxu0 0.0
        %763 = vmatpush1.xpose.msra.mxu0 0.0
        %764 = vmatprep.subr.mxu0 0.0
        %765 = vmatpush1.xpose.msra.mxu0 0.0
        %766 = vmatprep.subr.mxu0 0.0
        %767 = vmatpush1.xpose.msra.mxu0 0.0
        %768 = vmatprep.subr.mxu0 0.0
        %769 = vmatpush1.xpose.msra.mxu0 0.0
        %770 = vmatprep.subr.mxu0 0.0
        %771 = vmatpush1.xpose.msra.mxu0 0.0
        %772 = vmatprep.subr.mxu0 0.0
        %773 = vmatpush1.xpose.msra.mxu0 0.0
        %774 = vmatprep.subr.mxu0 0.0
        %775 = vmatpush1.xpose.msra.mxu0 0.0
        %776 = vmatprep.subr.mxu0 0.0
        %777 = vmatpush1.xpose.msra.mxu0 0.0
        %778 = vmatprep.subr.mxu0 0.0
        %779 = vmatpush1.xpose.msra.mxu0 0.0
        %780 = vmatprep.subr.mxu0 0.0
        %781 = vmatpush1.xpose.msra.mxu0 0.0
        %782 = vmatprep.subr.mxu0 0.0
        %783 = vmatpush1.xpose.msra.mxu0 0.0
        %784 = vmatprep.subr.mxu0 0.0
        %785 = vmatpush1.xpose.msra.mxu0 0.0
        %786 = vmatprep.mubr.f32.mxu0 0.0
        %787 = vmatmul.mubr.f32.gmra.mrb[0].mxu0 %v720
        %v788 = vpop.f32.mrb[0].mxu0
        %v789 = vadd.f32 0.0, %v788
        %v790 = vpop.f32.mrb[0].mxu0
        %791 = vdwg.mxu0
        %v793 = vsel %vm452, %v578, 0
        %795 = vmatprep.subr.mxu0 0.0
        %796 = vmatpush1.xpose.msra.mxu0 %v460
        %797 = vmatprep.subr.mxu0 0.0
        %798 = vmatpush1.xpose.msra.mxu0 0.0
        %799 = vmatprep.subr.mxu0 0.0
        %800 = vmatpush1.xpose.msra.mxu0 0.0
        %801 = vmatprep.subr.mxu0 0.0
        %802 = vmatpush1.xpose.msra.mxu0 0.0
        %803 = vmatprep.subr.mxu0 0.0
        %804 = vmatpush1.xpose.msra.mxu0 0.0
        %805 = vmatprep.subr.mxu0 0.0
        %806 = vmatpush1.xpose.msra.mxu0 0.0
        %807 = vmatprep.subr.mxu0 0.0
        %808 = vmatpush1.xpose.msra.mxu0 0.0
        %809 = vmatprep.subr.mxu0 0.0
        %810 = vmatpush1.xpose.msra.mxu0 0.0
        %811 = vmatprep.subr.mxu0 0.0
        %812 = vmatpush1.xpose.msra.mxu0 0.0
        %813 = vmatprep.subr.mxu0 0.0
        %814 = vmatpush1.xpose.msra.mxu0 0.0
        %815 = vmatprep.subr.mxu0 0.0
        %816 = vmatpush1.xpose.msra.mxu0 0.0
        %817 = vmatprep.subr.mxu0 0.0
        %818 = vmatpush1.xpose.msra.mxu0 0.0
        %819 = vmatprep.subr.mxu0 0.0
        %820 = vmatpush1.xpose.msra.mxu0 0.0
        %821 = vmatprep.subr.mxu0 0.0
        %822 = vmatpush1.xpose.msra.mxu0 0.0
        %823 = vmatprep.subr.mxu0 0.0
        %824 = vmatpush1.xpose.msra.mxu0 0.0
        %825 = vmatprep.subr.mxu0 0.0
        %826 = vmatpush1.xpose.msra.mxu0 0.0
        %827 = vmatprep.subr.mxu0 0.0
        %828 = vmatpush1.xpose.msra.mxu0 0.0
        %829 = vmatprep.subr.mxu0 0.0
        %830 = vmatpush1.xpose.msra.mxu0 0.0
        %831 = vmatprep.subr.mxu0 0.0
        %832 = vmatpush1.xpose.msra.mxu0 0.0
        %833 = vmatprep.subr.mxu0 0.0
        %834 = vmatpush1.xpose.msra.mxu0 0.0
        %835 = vmatprep.subr.mxu0 0.0
        %836 = vmatpush1.xpose.msra.mxu0 0.0
        %837 = vmatprep.subr.mxu0 0.0
        %838 = vmatpush1.xpose.msra.mxu0 0.0
        %839 = vmatprep.subr.mxu0 0.0
        %840 = vmatpush1.xpose.msra.mxu0 0.0
        %841 = vmatprep.subr.mxu0 0.0
        %842 = vmatpush1.xpose.msra.mxu0 0.0
        %843 = vmatprep.subr.mxu0 0.0
        %844 = vmatpush1.xpose.msra.mxu0 0.0
        %845 = vmatprep.subr.mxu0 0.0
        %846 = vmatpush1.xpose.msra.mxu0 0.0
        %847 = vmatprep.subr.mxu0 0.0
        %848 = vmatpush1.xpose.msra.mxu0 0.0
        %849 = vmatprep.subr.mxu0 0.0
        %850 = vmatpush1.xpose.msra.mxu0 0.0
        %851 = vmatprep.subr.mxu0 0.0
        %852 = vmatpush1.xpose.msra.mxu0 0.0
        %853 = vmatprep.subr.mxu0 0.0
        %854 = vmatpush1.xpose.msra.mxu0 0.0
        %855 = vmatprep.subr.mxu0 0.0
        %856 = vmatpush1.xpose.msra.mxu0 0.0
        %857 = vmatprep.subr.mxu0 0.0
        %858 = vmatpush1.xpose.msra.mxu0 0.0
        %859 = vmatprep.mubr.f32.mxu0 0.0
        %860 = vmatmul.mubr.f32.gmra.mrb[0].mxu0 %v793
        %v861 = vpop.f32.mrb[0].mxu0
        %v862 = vadd.f32 0.0, %v861
        %v863 = vpop.f32.mrb[0].mxu0
        %864 = vdwg.mxu0
        %v866 = vsel %vm452, %v583, 0
        %868 = vmatprep.subr.mxu0 0.0
        %869 = vmatpush1.xpose.msra.mxu0 %v463
        %870 = vmatprep.subr.mxu0 0.0
        %871 = vmatpush1.xpose.msra.mxu0 0.0
        %872 = vmatprep.subr.mxu0 0.0
        %873 = vmatpush1.xpose.msra.mxu0 0.0
        %874 = vmatprep.subr.mxu0 0.0
        %875 = vmatpush1.xpose.msra.mxu0 0.0
        %876 = vmatprep.subr.mxu0 0.0
        %877 = vmatpush1.xpose.msra.mxu0 0.0
        %878 = vmatprep.subr.mxu0 0.0
        %879 = vmatpush1.xpose.msra.mxu0 0.0
        %880 = vmatprep.subr.mxu0 0.0
        %881 = vmatpush1.xpose.msra.mxu0 0.0
        %882 = vmatprep.subr.mxu0 0.0
        %883 = vmatpush1.xpose.msra.mxu0 0.0
        %884 = vmatprep.subr.mxu0 0.0
        %885 = vmatpush1.xpose.msra.mxu0 0.0
        %886 = vmatprep.subr.mxu0 0.0
        %887 = vmatpush1.xpose.msra.mxu0 0.0
        %888 = vmatprep.subr.mxu0 0.0
        %889 = vmatpush1.xpose.msra.mxu0 0.0
        %890 = vmatprep.subr.mxu0 0.0
        %891 = vmatpush1.xpose.msra.mxu0 0.0
        %892 = vmatprep.subr.mxu0 0.0
        %893 = vmatpush1.xpose.msra.mxu0 0.0
        %894 = vmatprep.subr.mxu0 0.0
        %895 = vmatpush1.xpose.msra.mxu0 0.0
        %896 = vmatprep.subr.mxu0 0.0
        %897 = vmatpush1.xpose.msra.mxu0 0.0
        %898 = vmatprep.subr.mxu0 0.0
        %899 = vmatpush1.xpose.msra.mxu0 0.0
        %900 = vmatprep.subr.mxu0 0.0
        %901 = vmatpush1.xpose.msra.mxu0 0.0
        %902 = vmatprep.subr.mxu0 0.0
        %903 = vmatpush1.xpose.msra.mxu0 0.0
        %904 = vmatprep.subr.mxu0 0.0
        %905 = vmatpush1.xpose.msra.mxu0 0.0
        %906 = vmatprep.subr.mxu0 0.0
        %907 = vmatpush1.xpose.msra.mxu0 0.0
        %908 = vmatprep.subr.mxu0 0.0
        %909 = vmatpush1.xpose.msra.mxu0 0.0
        %910 = vmatprep.subr.mxu0 0.0
        %911 = vmatpush1.xpose.msra.mxu0 0.0
        %912 = vmatprep.subr.mxu0 0.0
        %913 = vmatpush1.xpose.msra.mxu0 0.0
        %914 = vmatprep.subr.mxu0 0.0
        %915 = vmatpush1.xpose.msra.mxu0 0.0
        %916 = vmatprep.subr.mxu0 0.0
        %917 = vmatpush1.xpose.msra.mxu0 0.0
        %918 = vmatprep.subr.mxu0 0.0
        %919 = vmatpush1.xpose.msra.mxu0 0.0
        %920 = vmatprep.subr.mxu0 0.0
        %921 = vmatpush1.xpose.msra.mxu0 0.0
        %922 = vmatprep.subr.mxu0 0.0
        %923 = vmatpush1.xpose.msra.mxu0 0.0
        %924 = vmatprep.subr.mxu0 0.0
        %925 = vmatpush1.xpose.msra.mxu0 0.0
        %926 = vmatprep.subr.mxu0 0.0
        %927 = vmatpush1.xpose.msra.mxu0 0.0
        %928 = vmatprep.subr.mxu0 0.0
        %929 = vmatpush1.xpose.msra.mxu0 0.0
        %930 = vmatprep.subr.mxu0 0.0
        %931 = vmatpush1.xpose.msra.mxu0 0.0
        %932 = vmatprep.mubr.f32.mxu0 0.0
        %933 = vmatmul.mubr.f32.gmra.mrb[0].mxu0 %v866
        %v934 = vpop.f32.mrb[0].mxu0
        %v935 = vadd.f32 0.0, %v934
        %v936 = vpop.f32.mrb[0].mxu0
        %937 = vdwg.mxu0
        %v939 = vsel %vm452, %v588, 0
        %941 = vmatprep.subr.mxu0 0.0
        %942 = vmatpush1.xpose.msra.mxu0 %v466
        %943 = vmatprep.subr.mxu0 0.0
        %944 = vmatpush1.xpose.msra.mxu0 0.0
        %945 = vmatprep.subr.mxu0 0.0
        %946 = vmatpush1.xpose.msra.mxu0 0.0
        %947 = vmatprep.subr.mxu0 0.0
        %948 = vmatpush1.xpose.msra.mxu0 0.0
        %949 = vmatprep.subr.mxu0 0.0
        %950 = vmatpush1.xpose.msra.mxu0 0.0
        %951 = vmatprep.subr.mxu0 0.0
        %952 = vmatpush1.xpose.msra.mxu0 0.0
        %953 = vmatprep.subr.mxu0 0.0
        %954 = vmatpush1.xpose.msra.mxu0 0.0
        %955 = vmatprep.subr.mxu0 0.0
        %956 = vmatpush1.xpose.msra.mxu0 0.0
        %957 = vmatprep.subr.mxu0 0.0
        %958 = vmatpush1.xpose.msra.mxu0 0.0
        %959 = vmatprep.subr.mxu0 0.0
        %960 = vmatpush1.xpose.msra.mxu0 0.0
        %961 = vmatprep.subr.mxu0 0.0
        %962 = vmatpush1.xpose.msra.mxu0 0.0
        %963 = vmatprep.subr.mxu0 0.0
        %964 = vmatpush1.xpose.msra.mxu0 0.0
        %965 = vmatprep.subr.mxu0 0.0
        %966 = vmatpush1.xpose.msra.mxu0 0.0
        %967 = vmatprep.subr.mxu0 0.0
        %968 = vmatpush1.xpose.msra.mxu0 0.0
        %969 = vmatprep.subr.mxu0 0.0
        %970 = vmatpush1.xpose.msra.mxu0 0.0
        %971 = vmatprep.subr.mxu0 0.0
        %972 = vmatpush1.xpose.msra.mxu0 0.0
        %973 = vmatprep.subr.mxu0 0.0
        %974 = vmatpush1.xpose.msra.mxu0 0.0
        %975 = vmatprep.subr.mxu0 0.0
        %976 = vmatpush1.xpose.msra.mxu0 0.0
        %977 = vmatprep.subr.mxu0 0.0
        %978 = vmatpush1.xpose.msra.mxu0 0.0
        %979 = vmatprep.subr.mxu0 0.0
        %980 = vmatpush1.xpose.msra.mxu0 0.0
        %981 = vmatprep.subr.mxu0 0.0
        %982 = vmatpush1.xpose.msra.mxu0 0.0
        %983 = vmatprep.subr.mxu0 0.0
        %984 = vmatpush1.xpose.msra.mxu0 0.0
        %985 = vmatprep.subr.mxu0 0.0
        %986 = vmatpush1.xpose.msra.mxu0 0.0
        %987 = vmatprep.subr.mxu0 0.0
        %988 = vmatpush1.xpose.msra.mxu0 0.0
        %989 = vmatprep.subr.mxu0 0.0
        %990 = vmatpush1.xpose.msra.mxu0 0.0
        %991 = vmatprep.subr.mxu0 0.0
        %992 = vmatpush1.xpose.msra.mxu0 0.0
        %993 = vmatprep.subr.mxu0 0.0
        %994 = vmatpush1.xpose.msra.mxu0 0.0
        %995 = vmatprep.subr.mxu0 0.0
        %996 = vmatpush1.xpose.msra.mxu0 0.0
        %997 = vmatprep.subr.mxu0 0.0
        %998 = vmatpush1.xpose.msra.mxu0 0.0
        %999 = vmatprep.subr.mxu0 0.0
        %1000 = vmatpush1.xpose.msra.mxu0 0.0
        %1001 = vmatprep.subr.mxu0 0.0
        %1002 = vmatpush1.xpose.msra.mxu0 0.0
        %1003 = vmatprep.subr.mxu0 0.0
        %1004 = vmatpush1.xpose.msra.mxu0 0.0
        %1005 = vmatprep.mubr.f32.mxu0 0.0
        %1006 = vmatmul.mubr.f32.gmra.mrb[0].mxu0 %v939
        %v1007 = vpop.f32.mrb[0].mxu0
        %v1008 = vadd.f32 0.0, %v1007
        %v1009 = vpop.f32.mrb[0].mxu0
        %1010 = vdwg.mxu0
        %v1012 = vsel %vm452, %v593, 0
        %1014 = vmatprep.subr.mxu0 0.0
        %1015 = vmatpush1.xpose.msra.mxu0 %v469
        %1016 = vmatprep.subr.mxu0 0.0
        %1017 = vmatpush1.xpose.msra.mxu0 0.0
        %1018 = vmatprep.subr.mxu0 0.0
        %1019 = vmatpush1.xpose.msra.mxu0 0.0
        %1020 = vmatprep.subr.mxu0 0.0
        %1021 = vmatpush1.xpose.msra.mxu0 0.0
        %1022 = vmatprep.subr.mxu0 0.0
        %1023 = vmatpush1.xpose.msra.mxu0 0.0
        %1024 = vmatprep.subr.mxu0 0.0
        %1025 = vmatpush1.xpose.msra.mxu0 0.0
        %1026 = vmatprep.subr.mxu0 0.0
        %1027 = vmatpush1.xpose.msra.mxu0 0.0
        %1028 = vmatprep.subr.mxu0 0.0
        %1029 = vmatpush1.xpose.msra.mxu0 0.0
        %1030 = vmatprep.subr.mxu0 0.0
        %1031 = vmatpush1.xpose.msra.mxu0 0.0
        %1032 = vmatprep.subr.mxu0 0.0
        %1033 = vmatpush1.xpose.msra.mxu0 0.0
        %1034 = vmatprep.subr.mxu0 0.0
        %1035 = vmatpush1.xpose.msra.mxu0 0.0
        %1036 = vmatprep.subr.mxu0 0.0
        %1037 = vmatpush1.xpose.msra.mxu0 0.0
        %1038 = vmatprep.subr.mxu0 0.0
        %1039 = vmatpush1.xpose.msra.mxu0 0.0
        %1040 = vmatprep.subr.mxu0 0.0
        %1041 = vmatpush1.xpose.msra.mxu0 0.0
        %1042 = vmatprep.subr.mxu0 0.0
        %1043 = vmatpush1.xpose.msra.mxu0 0.0
        %1044 = vmatprep.subr.mxu0 0.0
        %1045 = vmatpush1.xpose.msra.mxu0 0.0
        %1046 = vmatprep.subr.mxu0 0.0
        %1047 = vmatpush1.xpose.msra.mxu0 0.0
        %1048 = vmatprep.subr.mxu0 0.0
        %1049 = vmatpush1.xpose.msra.mxu0 0.0
        %1050 = vmatprep.subr.mxu0 0.0
        %1051 = vmatpush1.xpose.msra.mxu0 0.0
        %1052 = vmatprep.subr.mxu0 0.0
        %1053 = vmatpush1.xpose.msra.mxu0 0.0
        %1054 = vmatprep.subr.mxu0 0.0
        %1055 = vmatpush1.xpose.msra.mxu0 0.0
        %1056 = vmatprep.subr.mxu0 0.0
        %1057 = vmatpush1.xpose.msra.mxu0 0.0
        %1058 = vmatprep.subr.mxu0 0.0
        %1059 = vmatpush1.xpose.msra.mxu0 0.0
        %1060 = vmatprep.subr.mxu0 0.0
        %1061 = vmatpush1.xpose.msra.mxu0 0.0
        %1062 = vmatprep.subr.mxu0 0.0
        %1063 = vmatpush1.xpose.msra.mxu0 0.0
        %1064 = vmatprep.subr.mxu0 0.0
        %1065 = vmatpush1.xpose.msra.mxu0 0.0
        %1066 = vmatprep.subr.mxu0 0.0
        %1067 = vmatpush1.xpose.msra.mxu0 0.0
        %1068 = vmatprep.subr.mxu0 0.0
        %1069 = vmatpush1.xpose.msra.mxu0 0.0
        %1070 = vmatprep.subr.mxu0 0.0
        %1071 = vmatpush1.xpose.msra.mxu0 0.0
        %1072 = vmatprep.subr.mxu0 0.0
        %1073 = vmatpush1.xpose.msra.mxu0 0.0
        %1074 = vmatprep.subr.mxu0 0.0
        %1075 = vmatpush1.xpose.msra.mxu0 0.0
        %1076 = vmatprep.subr.mxu0 0.0
        %1077 = vmatpush1.xpose.msra.mxu0 0.0
        %1078 = vmatprep.mubr.f32.mxu0 0.0
        %1079 = vmatmul.mubr.f32.gmra.mrb[0].mxu0 %v1012
        %v1080 = vpop.f32.mrb[0].mxu0
        %v1081 = vadd.f32 0.0, %v1080
        %v1082 = vpop.f32.mrb[0].mxu0
        %1083 = vdwg.mxu0
        %v1085 = vsel %vm452, %v598, 0
        %1087 = vmatprep.subr.mxu0 0.0
        %1088 = vmatpush1.xpose.msra.mxu0 %v472
        %1089 = vmatprep.subr.mxu0 0.0
        %1090 = vmatpush1.xpose.msra.mxu0 0.0
        %1091 = vmatprep.subr.mxu0 0.0
        %1092 = vmatpush1.xpose.msra.mxu0 0.0
        %1093 = vmatprep.subr.mxu0 0.0
        %1094 = vmatpush1.xpose.msra.mxu0 0.0
        %1095 = vmatprep.subr.mxu0 0.0
        %1096 = vmatpush1.xpose.msra.mxu0 0.0
        %1097 = vmatprep.subr.mxu0 0.0
        %1098 = vmatpush1.xpose.msra.mxu0 0.0
        %1099 = vmatprep.subr.mxu0 0.0
        %1100 = vmatpush1.xpose.msra.mxu0 0.0
        %1101 = vmatprep.subr.mxu0 0.0
        %1102 = vmatpush1.xpose.msra.mxu0 0.0
        %1103 = vmatprep.subr.mxu0 0.0
        %1104 = vmatpush1.xpose.msra.mxu0 0.0
        %1105 = vmatprep.subr.mxu0 0.0
        %1106 = vmatpush1.xpose.msra.mxu0 0.0
        %1107 = vmatprep.subr.mxu0 0.0
        %1108 = vmatpush1.xpose.msra.mxu0 0.0
        %1109 = vmatprep.subr.mxu0 0.0
        %1110 = vmatpush1.xpose.msra.mxu0 0.0
        %1111 = vmatprep.subr.mxu0 0.0
        %1112 = vmatpush1.xpose.msra.mxu0 0.0
        %1113 = vmatprep.subr.mxu0 0.0
        %1114 = vmatpush1.xpose.msra.mxu0 0.0
        %1115 = vmatprep.subr.mxu0 0.0
        %1116 = vmatpush1.xpose.msra.mxu0 0.0
        %1117 = vmatprep.subr.mxu0 0.0
        %1118 = vmatpush1.xpose.msra.mxu0 0.0
        %1119 = vmatprep.subr.mxu0 0.0
        %1120 = vmatpush1.xpose.msra.mxu0 0.0
        %1121 = vmatprep.subr.mxu0 0.0
        %1122 = vmatpush1.xpose.msra.mxu0 0.0
        %1123 = vmatprep.subr.mxu0 0.0
        %1124 = vmatpush1.xpose.msra.mxu0 0.0
        %1125 = vmatprep.subr.mxu0 0.0
        %1126 = vmatpush1.xpose.msra.mxu0 0.0
        %1127 = vmatprep.subr.mxu0 0.0
        %1128 = vmatpush1.xpose.msra.mxu0 0.0
        %1129 = vmatprep.subr.mxu0 0.0
        %1130 = vmatpush1.xpose.msra.mxu0 0.0
        %1131 = vmatprep.subr.mxu0 0.0
        %1132 = vmatpush1.xpose.msra.mxu0 0.0
        %1133 = vmatprep.subr.mxu0 0.0
        %1134 = vmatpush1.xpose.msra.mxu0 0.0
        %1135 = vmatprep.subr.mxu0 0.0
        %1136 = vmatpush1.xpose.msra.mxu0 0.0
        %1137 = vmatprep.subr.mxu0 0.0
        %1138 = vmatpush1.xpose.msra.mxu0 0.0
        %1139 = vmatprep.subr.mxu0 0.0
        %1140 = vmatpush1.xpose.msra.mxu0 0.0
        %1141 = vmatprep.subr.mxu0 0.0
        %1142 = vmatpush1.xpose.msra.mxu0 0.0
        %1143 = vmatprep.subr.mxu0 0.0
        %1144 = vmatpush1.xpose.msra.mxu0 0.0
        %1145 = vmatprep.subr.mxu0 0.0
        %1146 = vmatpush1.xpose.msra.mxu0 0.0
        %1147 = vmatprep.subr.mxu0 0.0
        %1148 = vmatpush1.xpose.msra.mxu0 0.0
        %1149 = vmatprep.subr.mxu0 0.0
        %1150 = vmatpush1.xpose.msra.mxu0 0.0
        %1151 = vmatprep.mubr.f32.mxu0 0.0
        %1152 = vmatmul.mubr.f32.gmra.mrb[0].mxu0 %v1085
        %v1153 = vpop.f32.mrb[0].mxu0
        %v1154 = vadd.f32 0.0, %v1153
        %v1155 = vpop.f32.mrb[0].mxu0
        %1156 = vdwg.mxu0
        %v1158 = vsel %vm452, %v603, 0
        %1160 = vmatprep.subr.mxu0 0.0
        %1161 = vmatpush1.xpose.msra.mxu0 %v475
        %1162 = vmatprep.subr.mxu0 0.0
        %1163 = vmatpush1.xpose.msra.mxu0 0.0
        %1164 = vmatprep.subr.mxu0 0.0
        %1165 = vmatpush1.xpose.msra.mxu0 0.0
        %1166 = vmatprep.subr.mxu0 0.0
        %1167 = vmatpush1.xpose.msra.mxu0 0.0
        %1168 = vmatprep.subr.mxu0 0.0
        %1169 = vmatpush1.xpose.msra.mxu0 0.0
        %1170 = vmatprep.subr.mxu0 0.0
        %1171 = vmatpush1.xpose.msra.mxu0 0.0
        %1172 = vmatprep.subr.mxu0 0.0
        %1173 = vmatpush1.xpose.msra.mxu0 0.0
        %1174 = vmatprep.subr.mxu0 0.0
        %1175 = vmatpush1.xpose.msra.mxu0 0.0
        %1176 = vmatprep.subr.mxu0 0.0
        %1177 = vmatpush1.xpose.msra.mxu0 0.0
        %1178 = vmatprep.subr.mxu0 0.0
        %1179 = vmatpush1.xpose.msra.mxu0 0.0
        %1180 = vmatprep.subr.mxu0 0.0
        %1181 = vmatpush1.xpose.msra.mxu0 0.0
        %1182 = vmatprep.subr.mxu0 0.0
        %1183 = vmatpush1.xpose.msra.mxu0 0.0
        %1184 = vmatprep.subr.mxu0 0.0
        %1185 = vmatpush1.xpose.msra.mxu0 0.0
        %1186 = vmatprep.subr.mxu0 0.0
        %1187 = vmatpush1.xpose.msra.mxu0 0.0
        %1188 = vmatprep.subr.mxu0 0.0
        %1189 = vmatpush1.xpose.msra.mxu0 0.0
        %1190 = vmatprep.subr.mxu0 0.0
        %1191 = vmatpush1.xpose.msra.mxu0 0.0
        %1192 = vmatprep.subr.mxu0 0.0
        %1193 = vmatpush1.xpose.msra.mxu0 0.0
        %1194 = vmatprep.subr.mxu0 0.0
        %1195 = vmatpush1.xpose.msra.mxu0 0.0
        %1196 = vmatprep.subr.mxu0 0.0
        %1197 = vmatpush1.xpose.msra.mxu0 0.0
        %1198 = vmatprep.subr.mxu0 0.0
        %1199 = vmatpush1.xpose.msra.mxu0 0.0
        %1200 = vmatprep.subr.mxu0 0.0
        %1201 = vmatpush1.xpose.msra.mxu0 0.0
        %1202 = vmatprep.subr.mxu0 0.0
        %1203 = vmatpush1.xpose.msra.mxu0 0.0
        %1204 = vmatprep.subr.mxu0 0.0
        %1205 = vmatpush1.xpose.msra.mxu0 0.0
        %1206 = vmatprep.subr.mxu0 0.0
        %1207 = vmatpush1.xpose.msra.mxu0 0.0
        %1208 = vmatprep.subr.mxu0 0.0
        %1209 = vmatpush1.xpose.msra.mxu0 0.0
        %1210 = vmatprep.subr.mxu0 0.0
        %1211 = vmatpush1.xpose.msra.mxu0 0.0
        %1212 = vmatprep.subr.mxu0 0.0
        %1213 = vmatpush1.xpose.msra.mxu0 0.0
        %1214 = vmatprep.subr.mxu0 0.0
        %1215 = vmatpush1.xpose.msra.mxu0 0.0
        %1216 = vmatprep.subr.mxu0 0.0
        %1217 = vmatpush1.xpose.msra.mxu0 0.0
        %1218 = vmatprep.subr.mxu0 0.0
        %1219 = vmatpush1.xpose.msra.mxu0 0.0
        %1220 = vmatprep.subr.mxu0 0.0
        %1221 = vmatpush1.xpose.msra.mxu0 0.0
        %1222 = vmatprep.subr.mxu0 0.0
        %1223 = vmatpush1.xpose.msra.mxu0 0.0
        %1224 = vmatprep.mubr.f32.mxu0 0.0
        %1225 = vmatmul.mubr.f32.gmra.mrb[0].mxu0 %v1158
        %v1226 = vpop.f32.mrb[0].mxu0
        %v1227 = vadd.f32 0.0, %v1226
        %v1228 = vpop.f32.mrb[0].mxu0
        %1229 = vdwg.mxu0
        %v1231 = vsel %vm452, %v608, 0
        %1233 = vmatprep.subr.mxu0 0.0
        %1234 = vmatpush1.xpose.msra.mxu0 %v478
        %1235 = vmatprep.subr.mxu0 0.0
        %1236 = vmatpush1.xpose.msra.mxu0 0.0
        %1237 = vmatprep.subr.mxu0 0.0
        %1238 = vmatpush1.xpose.msra.mxu0 0.0
        %1239 = vmatprep.subr.mxu0 0.0
        %1240 = vmatpush1.xpose.msra.mxu0 0.0
        %1241 = vmatprep.subr.mxu0 0.0
        %1242 = vmatpush1.xpose.msra.mxu0 0.0
        %1243 = vmatprep.subr.mxu0 0.0
        %1244 = vmatpush1.xpose.msra.mxu0 0.0
        %1245 = vmatprep.subr.mxu0 0.0
        %1246 = vmatpush1.xpose.msra.mxu0 0.0
        %1247 = vmatprep.subr.mxu0 0.0
        %1248 = vmatpush1.xpose.msra.mxu0 0.0
        %1249 = vmatprep.subr.mxu0 0.0
        %1250 = vmatpush1.xpose.msra.mxu0 0.0
        %1251 = vmatprep.subr.mxu0 0.0
        %1252 = vmatpush1.xpose.msra.mxu0 0.0
        %1253 = vmatprep.subr.mxu0 0.0
        %1254 = vmatpush1.xpose.msra.mxu0 0.0
        %1255 = vmatprep.subr.mxu0 0.0
        %1256 = vmatpush1.xpose.msra.mxu0 0.0
        %1257 = vmatprep.subr.mxu0 0.0
        %1258 = vmatpush1.xpose.msra.mxu0 0.0
        %1259 = vmatprep.subr.mxu0 0.0
        %1260 = vmatpush1.xpose.msra.mxu0 0.0
        %1261 = vmatprep.subr.mxu0 0.0
        %1262 = vmatpush1.xpose.msra.mxu0 0.0
        %1263 = vmatprep.subr.mxu0 0.0
        %1264 = vmatpush1.xpose.msra.mxu0 0.0
        %1265 = vmatprep.subr.mxu0 0.0
        %1266 = vmatpush1.xpose.msra.mxu0 0.0
        %1267 = vmatprep.subr.mxu0 0.0
        %1268 = vmatpush1.xpose.msra.mxu0 0.0
        %1269 = vmatprep.subr.mxu0 0.0
        %1270 = vmatpush1.xpose.msra.mxu0 0.0
        %1271 = vmatprep.subr.mxu0 0.0
        %1272 = vmatpush1.xpose.msra.mxu0 0.0
        %1273 = vmatprep.subr.mxu0 0.0
        %1274 = vmatpush1.xpose.msra.mxu0 0.0
        %1275 = vmatprep.subr.mxu0 0.0
        %1276 = vmatpush1.xpose.msra.mxu0 0.0
        %1277 = vmatprep.subr.mxu0 0.0
        %1278 = vmatpush1.xpose.msra.mxu0 0.0
        %1279 = vmatprep.subr.mxu0 0.0
        %1280 = vmatpush1.xpose.msra.mxu0 0.0
        %1281 = vmatprep.subr.mxu0 0.0
        %1282 = vmatpush1.xpose.msra.mxu0 0.0
        %1283 = vmatprep.subr.mxu0 0.0
        %1284 = vmatpush1.xpose.msra.mxu0 0.0
        %1285 = vmatprep.subr.mxu0 0.0
        %1286 = vmatpush1.xpose.msra.mxu0 0.0
        %1287 = vmatprep.subr.mxu0 0.0
        %1288 = vmatpush1.xpose.msra.mxu0 0.0
        %1289 = vmatprep.subr.mxu0 0.0
        %1290 = vmatpush1.xpose.msra.mxu0 0.0
        %1291 = vmatprep.subr.mxu0 0.0
        %1292 = vmatpush1.xpose.msra.mxu0 0.0
        %1293 = vmatprep.subr.mxu0 0.0
        %1294 = vmatpush1.xpose.msra.mxu0 0.0
        %1295 = vmatprep.subr.mxu0 0.0
        %1296 = vmatpush1.xpose.msra.mxu0 0.0
        %1297 = vmatprep.mubr.f32.mxu0 0.0
        %1298 = vmatmul.mubr.f32.gmra.mrb[0].mxu0 %v1231
        %v1299 = vpop.f32.mrb[0].mxu0
        %v1300 = vadd.f32 0.0, %v1299
        %v1301 = vpop.f32.mrb[0].mxu0
        %1302 = vdwg.mxu0
        %v1304 = vsel %vm452, %v613, 0
        %1306 = vmatprep.subr.mxu0 0.0
        %1307 = vmatpush1.xpose.msra.mxu0 %v481
        %1308 = vmatprep.subr.mxu0 0.0
        %1309 = vmatpush1.xpose.msra.mxu0 0.0
        %1310 = vmatprep.subr.mxu0 0.0
        %1311 = vmatpush1.xpose.msra.mxu0 0.0
        %1312 = vmatprep.subr.mxu0 0.0
        %1313 = vmatpush1.xpose.msra.mxu0 0.0
        %1314 = vmatprep.subr.mxu0 0.0
        %1315 = vmatpush1.xpose.msra.mxu0 0.0
        %1316 = vmatprep.subr.mxu0 0.0
        %1317 = vmatpush1.xpose.msra.mxu0 0.0
        %1318 = vmatprep.subr.mxu0 0.0
        %1319 = vmatpush1.xpose.msra.mxu0 0.0
        %1320 = vmatprep.subr.mxu0 0.0
        %1321 = vmatpush1.xpose.msra.mxu0 0.0
        %1322 = vmatprep.subr.mxu0 0.0
        %1323 = vmatpush1.xpose.msra.mxu0 0.0
        %1324 = vmatprep.subr.mxu0 0.0
        %1325 = vmatpush1.xpose.msra.mxu0 0.0
        %1326 = vmatprep.subr.mxu0 0.0
        %1327 = vmatpush1.xpose.msra.mxu0 0.0
        %1328 = vmatprep.subr.mxu0 0.0
        %1329 = vmatpush1.xpose.msra.mxu0 0.0
        %1330 = vmatprep.subr.mxu0 0.0
        %1331 = vmatpush1.xpose.msra.mxu0 0.0
        %1332 = vmatprep.subr.mxu0 0.0
        %1333 = vmatpush1.xpose.msra.mxu0 0.0
        %1334 = vmatprep.subr.mxu0 0.0
        %1335 = vmatpush1.xpose.msra.mxu0 0.0
        %1336 = vmatprep.subr.mxu0 0.0
        %1337 = vmatpush1.xpose.msra.mxu0 0.0
        %1338 = vmatprep.subr.mxu0 0.0
        %1339 = vmatpush1.xpose.msra.mxu0 0.0
        %1340 = vmatprep.subr.mxu0 0.0
        %1341 = vmatpush1.xpose.msra.mxu0 0.0
        %1342 = vmatprep.subr.mxu0 0.0
        %1343 = vmatpush1.xpose.msra.mxu0 0.0
        %1344 = vmatprep.subr.mxu0 0.0
        %1345 = vmatpush1.xpose.msra.mxu0 0.0
        %1346 = vmatprep.subr.mxu0 0.0
        %1347 = vmatpush1.xpose.msra.mxu0 0.0
        %1348 = vmatprep.subr.mxu0 0.0
        %1349 = vmatpush1.xpose.msra.mxu0 0.0
        %1350 = vmatprep.subr.mxu0 0.0
        %1351 = vmatpush1.xpose.msra.mxu0 0.0
        %1352 = vmatprep.subr.mxu0 0.0
        %1353 = vmatpush1.xpose.msra.mxu0 0.0
        %1354 = vmatprep.subr.mxu0 0.0
        %1355 = vmatpush1.xpose.msra.mxu0 0.0
        %1356 = vmatprep.subr.mxu0 0.0
        %1357 = vmatpush1.xpose.msra.mxu0 0.0
        %1358 = vmatprep.subr.mxu0 0.0
        %1359 = vmatpush1.xpose.msra.mxu0 0.0
        %1360 = vmatprep.subr.mxu0 0.0
        %1361 = vmatpush1.xpose.msra.mxu0 0.0
        %1362 = vmatprep.subr.mxu0 0.0
        %1363 = vmatpush1.xpose.msra.mxu0 0.0
        %1364 = vmatprep.subr.mxu0 0.0
        %1365 = vmatpush1.xpose.msra.mxu0 0.0
        %1366 = vmatprep.subr.mxu0 0.0
        %1367 = vmatpush1.xpose.msra.mxu0 0.0
        %1368 = vmatprep.subr.mxu0 0.0
        %1369 = vmatpush1.xpose.msra.mxu0 0.0
        %1370 = vmatprep.mubr.f32.mxu0 0.0
        %1371 = vmatmul.mubr.f32.gmra.mrb[0].mxu0 %v1304
        %v1372 = vpop.f32.mrb[0].mxu0
        %v1373 = vadd.f32 0.0, %v1372
        %v1374 = vpop.f32.mrb[0].mxu0
        %1375 = vdwg.mxu0
        %v1377 = vsel %vm452, %v618, 0
        %1379 = vmatprep.subr.mxu0 0.0
        %1380 = vmatpush1.xpose.msra.mxu0 %v484
        %1381 = vmatprep.subr.mxu0 0.0
        %1382 = vmatpush1.xpose.msra.mxu0 0.0
        %1383 = vmatprep.subr.mxu0 0.0
        %1384 = vmatpush1.xpose.msra.mxu0 0.0
        %1385 = vmatprep.subr.mxu0 0.0
        %1386 = vmatpush1.xpose.msra.mxu0 0.0
        %1387 = vmatprep.subr.mxu0 0.0
        %1388 = vmatpush1.xpose.msra.mxu0 0.0
        %1389 = vmatprep.subr.mxu0 0.0
        %1390 = vmatpush1.xpose.msra.mxu0 0.0
        %1391 = vmatprep.subr.mxu0 0.0
        %1392 = vmatpush1.xpose.msra.mxu0 0.0
        %1393 = vmatprep.subr.mxu0 0.0
        %1394 = vmatpush1.xpose.msra.mxu0 0.0
        %1395 = vmatprep.subr.mxu0 0.0
        %1396 = vmatpush1.xpose.msra.mxu0 0.0
        %1397 = vmatprep.subr.mxu0 0.0
        %1398 = vmatpush1.xpose.msra.mxu0 0.0
        %1399 = vmatprep.subr.mxu0 0.0
        %1400 = vmatpush1.xpose.msra.mxu0 0.0
        %1401 = vmatprep.subr.mxu0 0.0
        %1402 = vmatpush1.xpose.msra.mxu0 0.0
        %1403 = vmatprep.subr.mxu0 0.0
        %1404 = vmatpush1.xpose.msra.mxu0 0.0
        %1405 = vmatprep.subr.mxu0 0.0
        %1406 = vmatpush1.xpose.msra.mxu0 0.0
        %1407 = vmatprep.subr.mxu0 0.0
        %1408 = vmatpush1.xpose.msra.mxu0 0.0
        %1409 = vmatprep.subr.mxu0 0.0
        %1410 = vmatpush1.xpose.msra.mxu0 0.0
        %1411 = vmatprep.subr.mxu0 0.0
        %1412 = vmatpush1.xpose.msra.mxu0 0.0
        %1413 = vmatprep.subr.mxu0 0.0
        %1414 = vmatpush1.xpose.msra.mxu0 0.0
        %1415 = vmatprep.subr.mxu0 0.0
        %1416 = vmatpush1.xpose.msra.mxu0 0.0
        %1417 = vmatprep.subr.mxu0 0.0
        %1418 = vmatpush1.xpose.msra.mxu0 0.0
        %1419 = vmatprep.subr.mxu0 0.0
        %1420 = vmatpush1.xpose.msra.mxu0 0.0
        %1421 = vmatprep.subr.mxu0 0.0
        %1422 = vmatpush1.xpose.msra.mxu0 0.0
        %1423 = vmatprep.subr.mxu0 0.0
        %1424 = vmatpush1.xpose.msra.mxu0 0.0
        %1425 = vmatprep.subr.mxu0 0.0
        %1426 = vmatpush1.xpose.msra.mxu0 0.0
        %1427 = vmatprep.subr.mxu0 0.0
        %1428 = vmatpush1.xpose.msra.mxu0 0.0
        %1429 = vmatprep.subr.mxu0 0.0
        %1430 = vmatpush1.xpose.msra.mxu0 0.0
        %1431 = vmatprep.subr.mxu0 0.0
        %1432 = vmatpush1.xpose.msra.mxu0 0.0
        %1433 = vmatprep.subr.mxu0 0.0
        %1434 = vmatpush1.xpose.msra.mxu0 0.0
        %1435 = vmatprep.subr.mxu0 0.0
        %1436 = vmatpush1.xpose.msra.mxu0 0.0
        %1437 = vmatprep.subr.mxu0 0.0
        %1438 = vmatpush1.xpose.msra.mxu0 0.0
        %1439 = vmatprep.subr.mxu0 0.0
        %1440 = vmatpush1.xpose.msra.mxu0 0.0
        %1441 = vmatprep.subr.mxu0 0.0
        %1442 = vmatpush1.xpose.msra.mxu0 0.0
        %1443 = vmatprep.mubr.f32.mxu0 0.0
        %1444 = vmatmul.mubr.f32.gmra.mrb[0].mxu0 %v1377
        %v1445 = vpop.f32.mrb[0].mxu0
        %v1446 = vadd.f32 0.0, %v1445
        %v1447 = vpop.f32.mrb[0].mxu0
        %1448 = vdwg.mxu0
        %v1450 = vsel %vm452, %v623, 0
        %1452 = vmatprep.subr.mxu0 0.0
        %1453 = vmatpush1.xpose.msra.mxu0 %v487
        %1454 = vmatprep.subr.mxu0 0.0
        %1455 = vmatpush1.xpose.msra.mxu0 0.0
        %1456 = vmatprep.subr.mxu0 0.0
        %1457 = vmatpush1.xpose.msra.mxu0 0.0
        %1458 = vmatprep.subr.mxu0 0.0
        %1459 = vmatpush1.xpose.msra.mxu0 0.0
        %1460 = vmatprep.subr.mxu0 0.0
        %1461 = vmatpush1.xpose.msra.mxu0 0.0
        %1462 = vmatprep.subr.mxu0 0.0
        %1463 = vmatpush1.xpose.msra.mxu0 0.0
        %1464 = vmatprep.subr.mxu0 0.0
        %1465 = vmatpush1.xpose.msra.mxu0 0.0
        %1466 = vmatprep.subr.mxu0 0.0
        %1467 = vmatpush1.xpose.msra.mxu0 0.0
        %1468 = vmatprep.subr.mxu0 0.0
        %1469 = vmatpush1.xpose.msra.mxu0 0.0
        %1470 = vmatprep.subr.mxu0 0.0
        %1471 = vmatpush1.xpose.msra.mxu0 0.0
        %1472 = vmatprep.subr.mxu0 0.0
        %1473 = vmatpush1.xpose.msra.mxu0 0.0
        %1474 = vmatprep.subr.mxu0 0.0
        %1475 = vmatpush1.xpose.msra.mxu0 0.0
        %1476 = vmatprep.subr.mxu0 0.0
        %1477 = vmatpush1.xpose.msra.mxu0 0.0
        %1478 = vmatprep.subr.mxu0 0.0
        %1479 = vmatpush1.xpose.msra.mxu0 0.0
        %1480 = vmatprep.subr.mxu0 0.0
        %1481 = vmatpush1.xpose.msra.mxu0 0.0
        %1482 = vmatprep.subr.mxu0 0.0
        %1483 = vmatpush1.xpose.msra.mxu0 0.0
        %1484 = vmatprep.subr.mxu0 0.0
        %1485 = vmatpush1.xpose.msra.mxu0 0.0
        %1486 = vmatprep.subr.mxu0 0.0
        %1487 = vmatpush1.xpose.msra.mxu0 0.0
        %1488 = vmatprep.subr.mxu0 0.0
        %1489 = vmatpush1.xpose.msra.mxu0 0.0
        %1490 = vmatprep.subr.mxu0 0.0
        %1491 = vmatpush1.xpose.msra.mxu0 0.0
        %1492 = vmatprep.subr.mxu0 0.0
        %1493 = vmatpush1.xpose.msra.mxu0 0.0
        %1494 = vmatprep.subr.mxu0 0.0
        %1495 = vmatpush1.xpose.msra.mxu0 0.0
        %1496 = vmatprep.subr.mxu0 0.0
        %1497 = vmatpush1.xpose.msra.mxu0 0.0
        %1498 = vmatprep.subr.mxu0 0.0
        %1499 = vmatpush1.xpose.msra.mxu0 0.0
        %1500 = vmatprep.subr.mxu0 0.0
        %1501 = vmatpush1.xpose.msra.mxu0 0.0
        %1502 = vmatprep.subr.mxu0 0.0
        %1503 = vmatpush1.xpose.msra.mxu0 0.0
        %1504 = vmatprep.subr.mxu0 0.0
        %1505 = vmatpush1.xpose.msra.mxu0 0.0
        %1506 = vmatprep.subr.mxu0 0.0
        %1507 = vmatpush1.xpose.msra.mxu0 0.0
        %1508 = vmatprep.subr.mxu0 0.0
        %1509 = vmatpush1.xpose.msra.mxu0 0.0
        %1510 = vmatprep.subr.mxu0 0.0
        %1511 = vmatpush1.xpose.msra.mxu0 0.0
        %1512 = vmatprep.subr.mxu0 0.0
        %1513 = vmatpush1.xpose.msra.mxu0 0.0
        %1514 = vmatprep.subr.mxu0 0.0
        %1515 = vmatpush1.xpose.msra.mxu0 0.0
        %1516 = vmatprep.mubr.f32.mxu0 0.0
        %1517 = vmatmul.mubr.f32.gmra.mrb[0].mxu0 %v1450
        %v1518 = vpop.f32.mrb[0].mxu0
        %v1519 = vadd.f32 0.0, %v1518
        %v1520 = vpop.f32.mrb[0].mxu0
        %1521 = vdwg.mxu0
        %v1523 = vsel %vm452, %v628, 0
        %1525 = vmatprep.subr.mxu0 0.0
        %1526 = vmatpush1.xpose.msra.mxu0 %v490
        %1527 = vmatprep.subr.mxu0 0.0
        %1528 = vmatpush1.xpose.msra.mxu0 0.0
        %1529 = vmatprep.subr.mxu0 0.0
        %1530 = vmatpush1.xpose.msra.mxu0 0.0
        %1531 = vmatprep.subr.mxu0 0.0
        %1532 = vmatpush1.xpose.msra.mxu0 0.0
        %1533 = vmatprep.subr.mxu0 0.0
        %1534 = vmatpush1.xpose.msra.mxu0 0.0
        %1535 = vmatprep.subr.mxu0 0.0
        %1536 = vmatpush1.xpose.msra.mxu0 0.0
        %1537 = vmatprep.subr.mxu0 0.0
        %1538 = vmatpush1.xpose.msra.mxu0 0.0
        %1539 = vmatprep.subr.mxu0 0.0
        %1540 = vmatpush1.xpose.msra.mxu0 0.0
        %1541 = vmatprep.subr.mxu0 0.0
        %1542 = vmatpush1.xpose.msra.mxu0 0.0
        %1543 = vmatprep.subr.mxu0 0.0
        %1544 = vmatpush1.xpose.msra.mxu0 0.0
        %1545 = vmatprep.subr.mxu0 0.0
        %1546 = vmatpush1.xpose.msra.mxu0 0.0
        %1547 = vmatprep.subr.mxu0 0.0
        %1548 = vmatpush1.xpose.msra.mxu0 0.0
        %1549 = vmatprep.subr.mxu0 0.0
        %1550 = vmatpush1.xpose.msra.mxu0 0.0
        %1551 = vmatprep.subr.mxu0 0.0
        %1552 = vmatpush1.xpose.msra.mxu0 0.0
        %1553 = vmatprep.subr.mxu0 0.0
        %1554 = vmatpush1.xpose.msra.mxu0 0.0
        %1555 = vmatprep.subr.mxu0 0.0
        %1556 = vmatpush1.xpose.msra.mxu0 0.0
        %1557 = vmatprep.subr.mxu0 0.0
        %1558 = vmatpush1.xpose.msra.mxu0 0.0
        %1559 = vmatprep.subr.mxu0 0.0
        %1560 = vmatpush1.xpose.msra.mxu0 0.0
        %1561 = vmatprep.subr.mxu0 0.0
        %1562 = vmatpush1.xpose.msra.mxu0 0.0
        %1563 = vmatprep.subr.mxu0 0.0
        %1564 = vmatpush1.xpose.msra.mxu0 0.0
        %1565 = vmatprep.subr.mxu0 0.0
        %1566 = vmatpush1.xpose.msra.mxu0 0.0
        %1567 = vmatprep.subr.mxu0 0.0
        %1568 = vmatpush1.xpose.msra.mxu0 0.0
        %1569 = vmatprep.subr.mxu0 0.0
        %1570 = vmatpush1.xpose.msra.mxu0 0.0
        %1571 = vmatprep.subr.mxu0 0.0
        %1572 = vmatpush1.xpose.msra.mxu0 0.0
        %1573 = vmatprep.subr.mxu0 0.0
        %1574 = vmatpush1.xpose.msra.mxu0 0.0
        %1575 = vmatprep.subr.mxu0 0.0
        %1576 = vmatpush1.xpose.msra.mxu0 0.0
        %1577 = vmatprep.subr.mxu0 0.0
        %1578 = vmatpush1.xpose.msra.mxu0 0.0
        %1579 = vmatprep.subr.mxu0 0.0
        %1580 = vmatpush1.xpose.msra.mxu0 0.0
        %1581 = vmatprep.subr.mxu0 0.0
        %1582 = vmatpush1.xpose.msra.mxu0 0.0
        %1583 = vmatprep.subr.mxu0 0.0
        %1584 = vmatpush1.xpose.msra.mxu0 0.0
        %1585 = vmatprep.subr.mxu0 0.0
        %1586 = vmatpush1.xpose.msra.mxu0 0.0
        %1587 = vmatprep.subr.mxu0 0.0
        %1588 = vmatpush1.xpose.msra.mxu0 0.0
        %1589 = vmatprep.mubr.f32.mxu0 0.0
        %1590 = vmatmul.mubr.f32.gmra.mrb[0].mxu0 %v1523
        %v1591 = vpop.f32.mrb[0].mxu0
        %v1592 = vadd.f32 0.0, %v1591
        %v1593 = vpop.f32.mrb[0].mxu0
        %1594 = vdwg.mxu0
        %v1596 = vsel %vm452, %v633, 0
        %1598 = vmatprep.subr.mxu0 0.0
        %1599 = vmatpush1.xpose.msra.mxu0 %v493
        %1600 = vmatprep.subr.mxu0 0.0
        %1601 = vmatpush1.xpose.msra.mxu0 0.0
        %1602 = vmatprep.subr.mxu0 0.0
        %1603 = vmatpush1.xpose.msra.mxu0 0.0
        %1604 = vmatprep.subr.mxu0 0.0
        %1605 = vmatpush1.xpose.msra.mxu0 0.0
        %1606 = vmatprep.subr.mxu0 0.0
        %1607 = vmatpush1.xpose.msra.mxu0 0.0
        %1608 = vmatprep.subr.mxu0 0.0
        %1609 = vmatpush1.xpose.msra.mxu0 0.0
        %1610 = vmatprep.subr.mxu0 0.0
        %1611 = vmatpush1.xpose.msra.mxu0 0.0
        %1612 = vmatprep.subr.mxu0 0.0
        %1613 = vmatpush1.xpose.msra.mxu0 0.0
        %1614 = vmatprep.subr.mxu0 0.0
        %1615 = vmatpush1.xpose.msra.mxu0 0.0
        %1616 = vmatprep.subr.mxu0 0.0
        %1617 = vmatpush1.xpose.msra.mxu0 0.0
        %1618 = vmatprep.subr.mxu0 0.0
        %1619 = vmatpush1.xpose.msra.mxu0 0.0
        %1620 = vmatprep.subr.mxu0 0.0
        %1621 = vmatpush1.xpose.msra.mxu0 0.0
        %1622 = vmatprep.subr.mxu0 0.0
        %1623 = vmatpush1.xpose.msra.mxu0 0.0
        %1624 = vmatprep.subr.mxu0 0.0
        %1625 = vmatpush1.xpose.msra.mxu0 0.0
        %1626 = vmatprep.subr.mxu0 0.0
        %1627 = vmatpush1.xpose.msra.mxu0 0.0
        %1628 = vmatprep.subr.mxu0 0.0
        %1629 = vmatpush1.xpose.msra.mxu0 0.0
        %1630 = vmatprep.subr.mxu0 0.0
        %1631 = vmatpush1.xpose.msra.mxu0 0.0
        %1632 = vmatprep.subr.mxu0 0.0
        %1633 = vmatpush1.xpose.msra.mxu0 0.0
        %1634 = vmatprep.subr.mxu0 0.0
        %1635 = vmatpush1.xpose.msra.mxu0 0.0
        %1636 = vmatprep.subr.mxu0 0.0
        %1637 = vmatpush1.xpose.msra.mxu0 0.0
        %1638 = vmatprep.subr.mxu0 0.0
        %1639 = vmatpush1.xpose.msra.mxu0 0.0
        %1640 = vmatprep.subr.mxu0 0.0
        %1641 = vmatpush1.xpose.msra.mxu0 0.0
        %1642 = vmatprep.subr.mxu0 0.0
        %1643 = vmatpush1.xpose.msra.mxu0 0.0
        %1644 = vmatprep.subr.mxu0 0.0
        %1645 = vmatpush1.xpose.msra.mxu0 0.0
        %1646 = vmatprep.subr.mxu0 0.0
        %1647 = vmatpush1.xpose.msra.mxu0 0.0
        %1648 = vmatprep.subr.mxu0 0.0
        %1649 = vmatpush1.xpose.msra.mxu0 0.0
        %1650 = vmatprep.subr.mxu0 0.0
        %1651 = vmatpush1.xpose.msra.mxu0 0.0
        %1652 = vmatprep.subr.mxu0 0.0
        %1653 = vmatpush1.xpose.msra.mxu0 0.0
        %1654 = vmatprep.subr.mxu0 0.0
        %1655 = vmatpush1.xpose.msra.mxu0 0.0
        %1656 = vmatprep.subr.mxu0 0.0
        %1657 = vmatpush1.xpose.msra.mxu0 0.0
        %1658 = vmatprep.subr.mxu0 0.0
        %1659 = vmatpush1.xpose.msra.mxu0 0.0
        %1660 = vmatprep.subr.mxu0 0.0
        %1661 = vmatpush1.xpose.msra.mxu0 0.0
        %1662 = vmatprep.mubr.f32.mxu0 0.0
        %1663 = vmatmul.mubr.f32.gmra.mrb[0].mxu0 %v1596
        %v1664 = vpop.f32.mrb[0].mxu0
        %v1665 = vadd.f32 0.0, %v1664
        %v1666 = vpop.f32.mrb[0].mxu0
        %1667 = vdwg.mxu0
        %v1669 = vsel %vm452, %v638, 0
        %1671 = vmatprep.subr.mxu0 0.0
        %1672 = vmatpush1.xpose.msra.mxu0 %v496
        %1673 = vmatprep.subr.mxu0 0.0
        %1674 = vmatpush1.xpose.msra.mxu0 0.0
        %1675 = vmatprep.subr.mxu0 0.0
        %1676 = vmatpush1.xpose.msra.mxu0 0.0
        %1677 = vmatprep.subr.mxu0 0.0
        %1678 = vmatpush1.xpose.msra.mxu0 0.0
        %1679 = vmatprep.subr.mxu0 0.0
        %1680 = vmatpush1.xpose.msra.mxu0 0.0
        %1681 = vmatprep.subr.mxu0 0.0
        %1682 = vmatpush1.xpose.msra.mxu0 0.0
        %1683 = vmatprep.subr.mxu0 0.0
        %1684 = vmatpush1.xpose.msra.mxu0 0.0
        %1685 = vmatprep.subr.mxu0 0.0
        %1686 = vmatpush1.xpose.msra.mxu0 0.0
        %1687 = vmatprep.subr.mxu0 0.0
        %1688 = vmatpush1.xpose.msra.mxu0 0.0
        %1689 = vmatprep.subr.mxu0 0.0
        %1690 = vmatpush1.xpose.msra.mxu0 0.0
        %1691 = vmatprep.subr.mxu0 0.0
        %1692 = vmatpush1.xpose.msra.mxu0 0.0
        %1693 = vmatprep.subr.mxu0 0.0
        %1694 = vmatpush1.xpose.msra.mxu0 0.0
        %1695 = vmatprep.subr.mxu0 0.0
        %1696 = vmatpush1.xpose.msra.mxu0 0.0
        %1697 = vmatprep.subr.mxu0 0.0
        %1698 = vmatpush1.xpose.msra.mxu0 0.0
        %1699 = vmatprep.subr.mxu0 0.0
        %1700 = vmatpush1.xpose.msra.mxu0 0.0
        %1701 = vmatprep.subr.mxu0 0.0
        %1702 = vmatpush1.xpose.msra.mxu0 0.0
        %1703 = vmatprep.subr.mxu0 0.0
        %1704 = vmatpush1.xpose.msra.mxu0 0.0
        %1705 = vmatprep.subr.mxu0 0.0
        %1706 = vmatpush1.xpose.msra.mxu0 0.0
        %1707 = vmatprep.subr.mxu0 0.0
        %1708 = vmatpush1.xpose.msra.mxu0 0.0
        %1709 = vmatprep.subr.mxu0 0.0
        %1710 = vmatpush1.xpose.msra.mxu0 0.0
        %1711 = vmatprep.subr.mxu0 0.0
        %1712 = vmatpush1.xpose.msra.mxu0 0.0
        %1713 = vmatprep.subr.mxu0 0.0
        %1714 = vmatpush1.xpose.msra.mxu0 0.0
        %1715 = vmatprep.subr.mxu0 0.0
        %1716 = vmatpush1.xpose.msra.mxu0 0.0
        %1717 = vmatprep.subr.mxu0 0.0
        %1718 = vmatpush1.xpose.msra.mxu0 0.0
        %1719 = vmatprep.subr.mxu0 0.0
        %1720 = vmatpush1.xpose.msra.mxu0 0.0
        %1721 = vmatprep.subr.mxu0 0.0
        %1722 = vmatpush1.xpose.msra.mxu0 0.0
        %1723 = vmatprep.subr.mxu0 0.0
        %1724 = vmatpush1.xpose.msra.mxu0 0.0
        %1725 = vmatprep.subr.mxu0 0.0
        %1726 = vmatpush1.xpose.msra.mxu0 0.0
        %1727 = vmatprep.subr.mxu0 0.0
        %1728 = vmatpush1.xpose.msra.mxu0 0.0
        %1729 = vmatprep.subr.mxu0 0.0
        %1730 = vmatpush1.xpose.msra.mxu0 0.0
        %1731 = vmatprep.subr.mxu0 0.0
        %1732 = vmatpush1.xpose.msra.mxu0 0.0
        %1733 = vmatprep.subr.mxu0 0.0
        %1734 = vmatpush1.xpose.msra.mxu0 0.0
        %1735 = vmatprep.mubr.f32.mxu0 0.0
        %1736 = vmatmul.mubr.f32.gmra.mrb[0].mxu0 %v1669
        %v1737 = vpop.f32.mrb[0].mxu0
        %v1738 = vadd.f32 0.0, %v1737
        %v1739 = vpop.f32.mrb[0].mxu0
        %1740 = vdwg.mxu0
        %v1742 = vsel %vm452, %v643, 0
        %1744 = vmatprep.subr.mxu0 0.0
        %1745 = vmatpush1.xpose.msra.mxu0 %v499
        %1746 = vmatprep.subr.mxu0 0.0
        %1747 = vmatpush1.xpose.msra.mxu0 0.0
        %1748 = vmatprep.subr.mxu0 0.0
        %1749 = vmatpush1.xpose.msra.mxu0 0.0
        %1750 = vmatprep.subr.mxu0 0.0
        %1751 = vmatpush1.xpose.msra.mxu0 0.0
        %1752 = vmatprep.subr.mxu0 0.0
        %1753 = vmatpush1.xpose.msra.mxu0 0.0
        %1754 = vmatprep.subr.mxu0 0.0
        %1755 = vmatpush1.xpose.msra.mxu0 0.0
        %1756 = vmatprep.subr.mxu0 0.0
        %1757 = vmatpush1.xpose.msra.mxu0 0.0
        %1758 = vmatprep.subr.mxu0 0.0
        %1759 = vmatpush1.xpose.msra.mxu0 0.0
        %1760 = vmatprep.subr.mxu0 0.0
        %1761 = vmatpush1.xpose.msra.mxu0 0.0
        %1762 = vmatprep.subr.mxu0 0.0
        %1763 = vmatpush1.xpose.msra.mxu0 0.0
        %1764 = vmatprep.subr.mxu0 0.0
        %1765 = vmatpush1.xpose.msra.mxu0 0.0
        %1766 = vmatprep.subr.mxu0 0.0
        %1767 = vmatpush1.xpose.msra.mxu0 0.0
        %1768 = vmatprep.subr.mxu0 0.0
        %1769 = vmatpush1.xpose.msra.mxu0 0.0
        %1770 = vmatprep.subr.mxu0 0.0
        %1771 = vmatpush1.xpose.msra.mxu0 0.0
        %1772 = vmatprep.subr.mxu0 0.0
        %1773 = vmatpush1.xpose.msra.mxu0 0.0
        %1774 = vmatprep.subr.mxu0 0.0
        %1775 = vmatpush1.xpose.msra.mxu0 0.0
        %1776 = vmatprep.subr.mxu0 0.0
        %1777 = vmatpush1.xpose.msra.mxu0 0.0
        %1778 = vmatprep.subr.mxu0 0.0
        %1779 = vmatpush1.xpose.msra.mxu0 0.0
        %1780 = vmatprep.subr.mxu0 0.0
        %1781 = vmatpush1.xpose.msra.mxu0 0.0
        %1782 = vmatprep.subr.mxu0 0.0
        %1783 = vmatpush1.xpose.msra.mxu0 0.0
        %1784 = vmatprep.subr.mxu0 0.0
        %1785 = vmatpush1.xpose.msra.mxu0 0.0
        %1786 = vmatprep.subr.mxu0 0.0
        %1787 = vmatpush1.xpose.msra.mxu0 0.0
        %1788 = vmatprep.subr.mxu0 0.0
        %1789 = vmatpush1.xpose.msra.mxu0 0.0
        %1790 = vmatprep.subr.mxu0 0.0
        %1791 = vmatpush1.xpose.msra.mxu0 0.0
        %1792 = vmatprep.subr.mxu0 0.0
        %1793 = vmatpush1.xpose.msra.mxu0 0.0
        %1794 = vmatprep.subr.mxu0 0.0
        %1795 = vmatpush1.xpose.msra.mxu0 0.0
        %1796 = vmatprep.subr.mxu0 0.0
        %1797 = vmatpush1.xpose.msra.mxu0 0.0
        %1798 = vmatprep.subr.mxu0 0.0
        %1799 = vmatpush1.xpose.msra.mxu0 0.0
        %1800 = vmatprep.subr.mxu0 0.0
        %1801 = vmatpush1.xpose.msra.mxu0 0.0
        %1802 = vmatprep.subr.mxu0 0.0
        %1803 = vmatpush1.xpose.msra.mxu0 0.0
        %1804 = vmatprep.subr.mxu0 0.0
        %1805 = vmatpush1.xpose.msra.mxu0 0.0
        %1806 = vmatprep.subr.mxu0 0.0
        %1807 = vmatpush1.xpose.msra.mxu0 0.0
        %1808 = vmatprep.mubr.f32.mxu0 0.0
        %1809 = vmatmul.mubr.f32.gmra.mrb[0].mxu0 %v1742
        %v1810 = vpop.f32.mrb[0].mxu0
        %v1811 = vadd.f32 0.0, %v1810
        %v1812 = vpop.f32.mrb[0].mxu0
        %1813 = vdwg.mxu0
        %v1814 = vlaneseq
        %v1815 = vand.u32 %v1814, 127
        %v1816 = vcombine.high %v446, %v446
        %v1818 = vunpack.c.l.s4 1966171168
        %v1819 = vunpack.c.0.s8 %v1818
        %v1820 = vlaneseq
        %v1821 = vshrl.u32 %v1820, 7
        %v1822 = vsub.s32 %v1819, %v1821
        %v1823 = vrot.slane %v446, %v1822
        %v1825 = vunpack.c.l.s4 1966171168
        %v1826 = vunpack.c.0.s8 %v1825
        %v1827 = vlaneseq
        %v1828 = vshrl.u32 %v1827, 7
        %v1829 = vsub.s32 %v1826, %v1828
        %v1830 = vrot.slane %v1816, %v1829
        %v1831 = vcombine.high %v1823, %v1823
        %v1832 = vcombine.high %v1830, %v1830
        %v1834 = vunpack.c.l.s4 1966171168
        %v1835 = vunpack.c.0.s8 %v1834
        %v1836 = vlaneseq
        %v1837 = vshrl.u32 %v1836, 7
        %v1838 = vsub.s32 %v1835, %v1837
        %v1839 = vrot.slane %v1823, %v1838
        %v1841 = vunpack.c.l.s4 1966171168
        %v1842 = vunpack.c.0.s8 %v1841
        %v1843 = vlaneseq
        %v1844 = vshrl.u32 %v1843, 7
        %v1845 = vsub.s32 %v1842, %v1844
        %v1846 = vrot.slane %v1830, %v1845
        %v1848 = vunpack.c.l.s4 1966171168
        %v1849 = vunpack.c.0.s8 %v1848
        %v1850 = vlaneseq
        %v1851 = vshrl.u32 %v1850, 7
        %v1852 = vsub.s32 %v1849, %v1851
        %v1853 = vrot.slane %v1831, %v1852
        %v1855 = vunpack.c.l.s4 1966171168
        %v1856 = vunpack.c.0.s8 %v1855
        %v1857 = vlaneseq
        %v1858 = vshrl.u32 %v1857, 7
        %v1859 = vsub.s32 %v1856, %v1858
        %v1860 = vrot.slane %v1832, %v1859
        %v1861 = vcombine.high %v1839, %v1839
        %v1862 = vcombine.high %v1846, %v1846
        %v1863 = vcombine.high %v1853, %v1853
        %v1864 = vcombine.high %v1860, %v1860
        %v1865 = vcombine.high %v447, %v447
        %v1867 = vunpack.c.l.s4 1966171168
        %v1868 = vunpack.c.0.s8 %v1867
        %v1869 = vlaneseq
        %v1870 = vshrl.u32 %v1869, 7
        %v1871 = vsub.s32 %v1868, %v1870
        %v1872 = vrot.slane %v447, %v1871
        %v1874 = vunpack.c.l.s4 1966171168
        %v1875 = vunpack.c.0.s8 %v1874
        %v1876 = vlaneseq
        %v1877 = vshrl.u32 %v1876, 7
        %v1878 = vsub.s32 %v1875, %v1877
        %v1879 = vrot.slane %v1865, %v1878
        %v1880 = vcombine.high %v1872, %v1872
        %v1881 = vcombine.high %v1879, %v1879
        %v1883 = vunpack.c.l.s4 1966171168
        %v1884 = vunpack.c.0.s8 %v1883
        %v1885 = vlaneseq
        %v1886 = vshrl.u32 %v1885, 7
        %v1887 = vsub.s32 %v1884, %v1886
        %v1888 = vrot.slane %v1872, %v1887
        %v1890 = vunpack.c.l.s4 1966171168
        %v1891 = vunpack.c.0.s8 %v1890
        %v1892 = vlaneseq
        %v1893 = vshrl.u32 %v1892, 7
        %v1894 = vsub.s32 %v1891, %v1893
        %v1895 = vrot.slane %v1879, %v1894
        %v1897 = vunpack.c.l.s4 1966171168
        %v1898 = vunpack.c.0.s8 %v1897
        %v1899 = vlaneseq
        %v1900 = vshrl.u32 %v1899, 7
        %v1901 = vsub.s32 %v1898, %v1900
        %v1902 = vrot.slane %v1880, %v1901
        %v1904 = vunpack.c.l.s4 1966171168
        %v1905 = vunpack.c.0.s8 %v1904
        %v1906 = vlaneseq
        %v1907 = vshrl.u32 %v1906, 7
        %v1908 = vsub.s32 %v1905, %v1907
        %v1909 = vrot.slane %v1881, %v1908
        %v1910 = vcombine.high %v1888, %v1888
        %v1911 = vcombine.high %v1895, %v1895
        %v1912 = vcombine.high %v1902, %v1902
        %v1913 = vcombine.high %v1909, %v1909
        %1914 = vset.pattern.permute.xlu0 0
        %1915 = vperm.xlu0 %1914, %v1839
        %v1916 = vpop.permute.xlu0 %1915
        %v1917 = vlaneseq
        %v1918 = vshrl.u32 %v1917, 7
        %v1919 = vsub.s32 0, %v1918
        %v1920 = vrot.slane %v1916, %v1919
        %1921 = vset.pattern.permute.xlu0 0
        %1922 = vperm.xlu0 %1921, %v1853
        %v1923 = vpop.permute.xlu0 %1922
        %v1924 = vlaneseq
        %v1925 = vshrl.u32 %v1924, 7
        %v1926 = vsub.s32 0, %v1925
        %v1927 = vrot.slane %v1923, %v1926
        %1928 = vset.pattern.permute.xlu0 0
        %1929 = vperm.xlu0 %1928, %v1861
        %v1930 = vpop.permute.xlu0 %1929
        %v1931 = vlaneseq
        %v1932 = vshrl.u32 %v1931, 7
        %v1933 = vsub.s32 0, %v1932
        %v1934 = vrot.slane %v1930, %v1933
        %1935 = vset.pattern.permute.xlu0 0
        %1936 = vperm.xlu0 %1935, %v1863
        %v1937 = vpop.permute.xlu0 %1936
        %v1938 = vlaneseq
        %v1939 = vshrl.u32 %v1938, 7
        %v1940 = vsub.s32 0, %v1939
        %v1941 = vrot.slane %v1937, %v1940
        %1942 = vset.pattern.permute.xlu0 0
        %1943 = vperm.xlu0 %1942, %v1846
        %v1944 = vpop.permute.xlu0 %1943
        %v1945 = vlaneseq
        %v1946 = vshrl.u32 %v1945, 7
        %v1947 = vsub.s32 0, %v1946
        %v1948 = vrot.slane %v1944, %v1947
        %1949 = vset.pattern.permute.xlu0 0
        %1950 = vperm.xlu0 %1949, %v1860
        %v1951 = vpop.permute.xlu0 %1950
        %v1952 = vlaneseq
        %v1953 = vshrl.u32 %v1952, 7
        %v1954 = vsub.s32 0, %v1953
        %v1955 = vrot.slane %v1951, %v1954
        %1956 = vset.pattern.permute.xlu0 0
        %1957 = vperm.xlu0 %1956, %v1862
        %v1958 = vpop.permute.xlu0 %1957
        %v1959 = vlaneseq
        %v1960 = vshrl.u32 %v1959, 7
        %v1961 = vsub.s32 0, %v1960
        %v1962 = vrot.slane %v1958, %v1961
        %1963 = vset.pattern.permute.xlu0 0
        %1964 = vperm.xlu0 %1963, %v1864
        %v1965 = vpop.permute.xlu0 %1964
        %v1966 = vlaneseq
        %v1967 = vshrl.u32 %v1966, 7
        %v1968 = vsub.s32 0, %v1967
        %v1969 = vrot.slane %v1965, %v1968
        %1970 = vset.pattern.permute.xlu0 0
        %1971 = vperm.xlu0 %1970, %v1888
        %v1972 = vpop.permute.xlu0 %1971
        %v1973 = vlaneseq
        %v1974 = vshrl.u32 %v1973, 7
        %v1975 = vsub.s32 0, %v1974
        %v1976 = vrot.slane %v1972, %v1975
        %1977 = vset.pattern.permute.xlu0 0
        %1978 = vperm.xlu0 %1977, %v1902
        %v1979 = vpop.permute.xlu0 %1978
        %v1980 = vlaneseq
        %v1981 = vshrl.u32 %v1980, 7
        %v1982 = vsub.s32 0, %v1981
        %v1983 = vrot.slane %v1979, %v1982
        %1984 = vset.pattern.permute.xlu0 0
        %1985 = vperm.xlu0 %1984, %v1910
        %v1986 = vpop.permute.xlu0 %1985
        %v1987 = vlaneseq
        %v1988 = vshrl.u32 %v1987, 7
        %v1989 = vsub.s32 0, %v1988
        %v1990 = vrot.slane %v1986, %v1989
        %1991 = vset.pattern.permute.xlu0 0
        %1992 = vperm.xlu0 %1991, %v1912
        %v1993 = vpop.permute.xlu0 %1992
        %v1994 = vlaneseq
        %v1995 = vshrl.u32 %v1994, 7
        %v1996 = vsub.s32 0, %v1995
        %v1997 = vrot.slane %v1993, %v1996
        %1998 = vset.pattern.permute.xlu0 0
        %1999 = vperm.xlu0 %1998, %v1895
        %v2000 = vpop.permute.xlu0 %1999
        %v2001 = vlaneseq
        %v2002 = vshrl.u32 %v2001, 7
        %v2003 = vsub.s32 0, %v2002
        %v2004 = vrot.slane %v2000, %v2003
        %2005 = vset.pattern.permute.xlu0 0
        %2006 = vperm.xlu0 %2005, %v1909
        %v2007 = vpop.permute.xlu0 %2006
        %v2008 = vlaneseq
        %v2009 = vshrl.u32 %v2008, 7
        %v2010 = vsub.s32 0, %v2009
        %v2011 = vrot.slane %v2007, %v2010
        %2012 = vset.pattern.permute.xlu0 0
        %2013 = vperm.xlu0 %2012, %v1911
        %v2014 = vpop.permute.xlu0 %2013
        %v2015 = vlaneseq
        %v2016 = vshrl.u32 %v2015, 7
        %v2017 = vsub.s32 0, %v2016
        %v2018 = vrot.slane %v2014, %v2017
        %2019 = vset.pattern.permute.xlu0 0
        %2020 = vperm.xlu0 %2019, %v1913
        %v2021 = vpop.permute.xlu0 %2020
        %v2022 = vlaneseq
        %v2023 = vshrl.u32 %v2022, 7
        %v2024 = vsub.s32 0, %v2023
        %v2025 = vrot.slane %v2021, %v2024
        %vm2026 = vcmp.lt.s32.totalorder %v1815, %v1920
        %vm2027 = vcmp.lt.s32.totalorder %v1815, %v1927
        %vm2028 = vcmp.lt.s32.totalorder %v1815, %v1934
        %vm2029 = vcmp.lt.s32.totalorder %v1815, %v1941
        %vm2030 = vcmp.lt.s32.totalorder %v1815, %v1948
        %vm2031 = vcmp.lt.s32.totalorder %v1815, %v1955
        %vm2032 = vcmp.lt.s32.totalorder %v1815, %v1962
        %vm2033 = vcmp.lt.s32.totalorder %v1815, %v1969
        %vm2034 = vcmp.lt.s32.totalorder %v1815, %v1976
        %vm2035 = vcmp.lt.s32.totalorder %v1815, %v1983
        %vm2036 = vcmp.lt.s32.totalorder %v1815, %v1990
        %vm2037 = vcmp.lt.s32.totalorder %v1815, %v1997
        %vm2038 = vcmp.lt.s32.totalorder %v1815, %v2004
        %vm2039 = vcmp.lt.s32.totalorder %v1815, %v2011
        %vm2040 = vcmp.lt.s32.totalorder %v1815, %v2018
        %vm2041 = vcmp.lt.s32.totalorder %v1815, %v2025
        %v2042 = vsel %vm2026, 1, 0
        %v2043 = vsel %vm2027, 1, 0
        %v2044 = vsel %vm2028, 1, 0
        %v2045 = vsel %vm2029, 1, 0
        %v2046 = vsel %vm2030, 1, 0
        %v2047 = vsel %vm2031, 1, 0
        %v2048 = vsel %vm2032, 1, 0
        %v2049 = vsel %vm2033, 1, 0
        %v2050 = vsel %vm2034, 1, 0
        %v2051 = vsel %vm2035, 1, 0
        %v2052 = vsel %vm2036, 1, 0
        %v2053 = vsel %vm2037, 1, 0
        %v2054 = vsel %vm2038, 1, 0
        %v2055 = vsel %vm2039, 1, 0
        %v2056 = vsel %vm2040, 1, 0
        %v2057 = vsel %vm2041, 1, 0
        %vm2058 = vcmp.eq.s32.totalorder %v2042, 1
        %vm2059 = vcmp.eq.s32.totalorder %v2043, 1
        %vm2060 = vcmp.eq.s32.totalorder %v2044, 1
        %vm2061 = vcmp.eq.s32.totalorder %v2045, 1
        %vm2062 = vcmp.eq.s32.totalorder %v2046, 1
        %vm2063 = vcmp.eq.s32.totalorder %v2047, 1
        %vm2064 = vcmp.eq.s32.totalorder %v2048, 1
        %vm2065 = vcmp.eq.s32.totalorder %v2049, 1
        %vm2066 = vcmp.eq.s32.totalorder %v2050, 1
        %vm2067 = vcmp.eq.s32.totalorder %v2051, 1
        %vm2068 = vcmp.eq.s32.totalorder %v2052, 1
        %vm2069 = vcmp.eq.s32.totalorder %v2053, 1
        %vm2070 = vcmp.eq.s32.totalorder %v2054, 1
        %vm2071 = vcmp.eq.s32.totalorder %v2055, 1
        %vm2072 = vcmp.eq.s32.totalorder %v2056, 1
        %vm2073 = vcmp.eq.s32.totalorder %v2057, 1
        %v2074 = vsel %vm2058, %v716, -1e+09
        %v2075 = vsel %vm2059, %v789, -1e+09
        %v2076 = vsel %vm2060, %v862, -1e+09
        %v2077 = vsel %vm2061, %v935, -1e+09
        %v2078 = vsel %vm2062, %v1008, -1e+09
        %v2079 = vsel %vm2063, %v1081, -1e+09
        %v2080 = vsel %vm2064, %v1154, -1e+09
        %v2081 = vsel %vm2065, %v1227, -1e+09
        %v2082 = vsel %vm2066, %v1300, -1e+09
        %v2083 = vsel %vm2067, %v1373, -1e+09
        %v2084 = vsel %vm2068, %v1446, -1e+09
        %v2085 = vsel %vm2069, %v1519, -1e+09
        %v2086 = vsel %vm2070, %v1592, -1e+09
        %v2087 = vsel %vm2071, %v1665, -1e+09
        %v2088 = vsel %vm2072, %v1738, -1e+09
        %v2089 = vsel %vm2073, %v1811, -1e+09
        %vm2090 = vcmask 64512
        %2091 = vst.msk [vmem:[%s404] sm:$0xff] %vm2090, %v2074
        %2092 = vst.msk [vmem:[%s404 + $0x8] sm:$0xff] %vm2090, %v2075
        %2093 = vst.msk [vmem:[%s404 + $0x10] sm:$0xff] %vm2090, %v2076
        %2094 = vst.msk [vmem:[%s404 + $0x18] sm:$0xff] %vm2090, %v2077
        %2095 = vst.msk [vmem:[%s404 + $0x20] sm:$0xff] %vm2090, %v2078
        %2096 = vst.msk [vmem:[%s404 + $0x28] sm:$0xff] %vm2090, %v2079
        %2097 = vst.msk [vmem:[%s404 + $0x30] sm:$0xff] %vm2090, %v2080
        %2098 = vst.msk [vmem:[%s404 + $0x38] sm:$0xff] %vm2090, %v2081
        %2099 = vst.msk [vmem:[%s404 + $0x40] sm:$0xff] %vm2090, %v2082
        %2100 = vst.msk [vmem:[%s404 + $0x48] sm:$0xff] %vm2090, %v2083
        %2101 = vst.msk [vmem:[%s404 + $0x50] sm:$0xff] %vm2090, %v2084
        %2102 = vst.msk [vmem:[%s404 + $0x58] sm:$0xff] %vm2090, %v2085
        %2103 = vst.msk [vmem:[%s404 + $0x60] sm:$0xff] %vm2090, %v2086
        %2104 = vst.msk [vmem:[%s404 + $0x68] sm:$0xff] %vm2090, %v2087
        %2105 = vst.msk [vmem:[%s404 + $0x70] sm:$0xff] %vm2090, %v2088
        %2106 = vst.msk [vmem:[%s404 + $0x78] sm:$0xff] %vm2090, %v2089
        %v2107 = vsel %vm2090, %v2074, -inf
        %2108 = vmax.xlane.f32.xlu0 %v2107
        %v2109 = vpop.xlane.xlu0 %2108
        %v2110 = vsel %vm2090, %v2075, -inf
        %2111 = vmax.xlane.f32.xlu0 %v2110
        %v2112 = vpop.xlane.xlu0 %2111
        %v2113 = vsel %vm2090, %v2076, -inf
        %2114 = vmax.xlane.f32.xlu0 %v2113
        %v2115 = vpop.xlane.xlu0 %2114
        %v2116 = vsel %vm2090, %v2077, -inf
        %2117 = vmax.xlane.f32.xlu0 %v2116
        %v2118 = vpop.xlane.xlu0 %2117
        %v2119 = vsel %vm2090, %v2078, -inf
        %2120 = vmax.xlane.f32.xlu0 %v2119
        %v2121 = vpop.xlane.xlu0 %2120
        %v2122 = vsel %vm2090, %v2079, -inf
        %2123 = vmax.xlane.f32.xlu0 %v2122
        %v2124 = vpop.xlane.xlu0 %2123
        %v2125 = vsel %vm2090, %v2080, -inf
        %2126 = vmax.xlane.f32.xlu0 %v2125
        %v2127 = vpop.xlane.xlu0 %2126
        %v2128 = vsel %vm2090, %v2081, -inf
        %2129 = vmax.xlane.f32.xlu0 %v2128
        %v2130 = vpop.xlane.xlu0 %2129
        %v2131 = vsel %vm2090, %v2082, -inf
        %2132 = vmax.xlane.f32.xlu0 %v2131
        %v2133 = vpop.xlane.xlu0 %2132
        %v2134 = vsel %vm2090, %v2083, -inf
        %2135 = vmax.xlane.f32.xlu0 %v2134
        %v2136 = vpop.xlane.xlu0 %2135
        %v2137 = vsel %vm2090, %v2084, -inf
        %2138 = vmax.xlane.f32.xlu0 %v2137
        %v2139 = vpop.xlane.xlu0 %2138
        %v2140 = vsel %vm2090, %v2085, -inf
        %2141 = vmax.xlane.f32.xlu0 %v2140
        %v2142 = vpop.xlane.xlu0 %2141
        %v2143 = vsel %vm2090, %v2086, -inf
        %2144 = vmax.xlane.f32.xlu0 %v2143
        %v2145 = vpop.xlane.xlu0 %2144
        %v2146 = vsel %vm2090, %v2087, -inf
        %2147 = vmax.xlane.f32.xlu0 %v2146
        %v2148 = vpop.xlane.xlu0 %2147
        %v2149 = vsel %vm2090, %v2088, -inf
        %2150 = vmax.xlane.f32.xlu0 %v2149
        %v2151 = vpop.xlane.xlu0 %2150
        %v2152 = vsel %vm2090, %v2089, -inf
        %2153 = vmax.xlane.f32.xlu0 %v2152
        %v2154 = vpop.xlane.xlu0 %2153
        %v2155 = vsub.f32 %v2074, %v2109
        %v2156 = vsub.f32 %v2075, %v2112
        %v2157 = vsub.f32 %v2076, %v2115
        %v2158 = vsub.f32 %v2077, %v2118
        %v2159 = vsub.f32 %v2078, %v2121
        %v2160 = vsub.f32 %v2079, %v2124
        %v2161 = vsub.f32 %v2080, %v2127
        %v2162 = vsub.f32 %v2081, %v2130
        %v2163 = vsub.f32 %v2082, %v2133
        %v2164 = vsub.f32 %v2083, %v2136
        %v2165 = vsub.f32 %v2084, %v2139
        %v2166 = vsub.f32 %v2085, %v2142
        %v2167 = vsub.f32 %v2086, %v2145
        %v2168 = vsub.f32 %v2087, %v2148
        %v2169 = vsub.f32 %v2088, %v2151
        %v2170 = vsub.f32 %v2089, %v2154
        %v2171 = vmul.f32 %v2155, 1.442695
        %v2172 = vpow.pop %v2171
        %v2173 = vmul.f32 %v2156, 1.442695
        %v2174 = vpow.pop %v2173
        %v2175 = vmul.f32 %v2157, 1.442695
        %v2176 = vpow.pop %v2175
        %v2177 = vmul.f32 %v2158, 1.442695
        %v2178 = vpow.pop %v2177
        %v2179 = vmul.f32 %v2159, 1.442695
        %v2180 = vpow.pop %v2179
        %v2181 = vmul.f32 %v2160, 1.442695
        %v2182 = vpow.pop %v2181
        %v2183 = vmul.f32 %v2161, 1.442695
        %v2184 = vpow.pop %v2183
        %v2185 = vmul.f32 %v2162, 1.442695
        %v2186 = vpow.pop %v2185
        %v2187 = vmul.f32 %v2163, 1.442695
        %v2188 = vpow.pop %v2187
        %v2189 = vmul.f32 %v2164, 1.442695
        %v2190 = vpow.pop %v2189
        %v2191 = vmul.f32 %v2165, 1.442695
        %v2192 = vpow.pop %v2191
        %v2193 = vmul.f32 %v2166, 1.442695
        %v2194 = vpow.pop %v2193
        %v2195 = vmul.f32 %v2167, 1.442695
        %v2196 = vpow.pop %v2195
        %v2197 = vmul.f32 %v2168, 1.442695
        %v2198 = vpow.pop %v2197
        %v2199 = vmul.f32 %v2169, 1.442695
        %v2200 = vpow.pop %v2199
        %v2201 = vmul.f32 %v2170, 1.442695
        %v2202 = vpow.pop %v2201
        %v2203 = vsel %vm2090, %v2172, 0.0
        %2204 = vadd.xlane.f32.xlu0 %v2203
        %v2205 = vpop.xlane.xlu0 %2204
        %v2206 = vsel %vm2090, %v2174, 0.0
        %2207 = vadd.xlane.f32.xlu0 %v2206
        %v2208 = vpop.xlane.xlu0 %2207
        %v2209 = vsel %vm2090, %v2176, 0.0
        %2210 = vadd.xlane.f32.xlu0 %v2209
        %v2211 = vpop.xlane.xlu0 %2210
        %v2212 = vsel %vm2090, %v2178, 0.0
        %2213 = vadd.xlane.f32.xlu0 %v2212
        %v2214 = vpop.xlane.xlu0 %2213
        %v2215 = vsel %vm2090, %v2180, 0.0
        %2216 = vadd.xlane.f32.xlu0 %v2215
        %v2217 = vpop.xlane.xlu0 %2216
        %v2218 = vsel %vm2090, %v2182, 0.0
        %2219 = vadd.xlane.f32.xlu0 %v2218
        %v2220 = vpop.xlane.xlu0 %2219
        %v2221 = vsel %vm2090, %v2184, 0.0
        %2222 = vadd.xlane.f32.xlu0 %v2221
        %v2223 = vpop.xlane.xlu0 %2222
        %v2224 = vsel %vm2090, %v2186, 0.0
        %2225 = vadd.xlane.f32.xlu0 %v2224
        %v2226 = vpop.xlane.xlu0 %2225
        %v2227 = vsel %vm2090, %v2188, 0.0
        %2228 = vadd.xlane.f32.xlu0 %v2227
        %v2229 = vpop.xlane.xlu0 %2228
        %v2230 = vsel %vm2090, %v2190, 0.0
        %2231 = vadd.xlane.f32.xlu0 %v2230
        %v2232 = vpop.xlane.xlu0 %2231
        %v2233 = vsel %vm2090, %v2192, 0.0
        %2234 = vadd.xlane.f32.xlu0 %v2233
        %v2235 = vpop.xlane.xlu0 %2234
        %v2236 = vsel %vm2090, %v2194, 0.0
        %2237 = vadd.xlane.f32.xlu0 %v2236
        %v2238 = vpop.xlane.xlu0 %2237
        %v2239 = vsel %vm2090, %v2196, 0.0
        %2240 = vadd.xlane.f32.xlu0 %v2239
        %v2241 = vpop.xlane.xlu0 %2240
        %v2242 = vsel %vm2090, %v2198, 0.0
        %2243 = vadd.xlane.f32.xlu0 %v2242
        %v2244 = vpop.xlane.xlu0 %2243
        %v2245 = vsel %vm2090, %v2200, 0.0
        %2246 = vadd.xlane.f32.xlu0 %v2245
        %v2247 = vpop.xlane.xlu0 %2246
        %v2248 = vsel %vm2090, %v2202, 0.0
        %2249 = vadd.xlane.f32.xlu0 %v2248
        %v2250 = vpop.xlane.xlu0 %2249
        %v2251 = vrcp.pop %v2205
        %v2252 = vrcp.pop %v2208
        %v2253 = vrcp.pop %v2211
        %v2254 = vrcp.pop %v2214
        %v2255 = vrcp.pop %v2217
        %v2256 = vrcp.pop %v2220
        %v2257 = vrcp.pop %v2223
        %v2258 = vrcp.pop %v2226
        %v2259 = vrcp.pop %v2229
        %v2260 = vrcp.pop %v2232
        %v2261 = vrcp.pop %v2235
        %v2262 = vrcp.pop %v2238
        %v2263 = vrcp.pop %v2241
        %v2264 = vrcp.pop %v2244
        %v2265 = vrcp.pop %v2247
        %v2266 = vrcp.pop %v2250
        %v2267 = vmul.f32 %v2172, %v2251
        %v2268 = vmul.f32 %v2174, %v2252
        %v2269 = vmul.f32 %v2176, %v2253
        %v2270 = vmul.f32 %v2178, %v2254
        %v2271 = vmul.f32 %v2180, %v2255
        %v2272 = vmul.f32 %v2182, %v2256
        %v2273 = vmul.f32 %v2184, %v2257
        %v2274 = vmul.f32 %v2186, %v2258
        %v2275 = vmul.f32 %v2188, %v2259
        %v2276 = vmul.f32 %v2190, %v2260
        %v2277 = vmul.f32 %v2192, %v2261
        %v2278 = vmul.f32 %v2194, %v2262
        %v2279 = vmul.f32 %v2196, %v2263
        %v2280 = vmul.f32 %v2198, %v2264
        %v2281 = vmul.f32 %v2200, %v2265
        %v2282 = vmul.f32 %v2202, %v2266
        %v2283 = vlog2.pop %v2205
        %v2284 = vmul.f32 %v2283, 0.6931472
        %v2285 = vlog2.pop %v2208
        %v2286 = vmul.f32 %v2285, 0.6931472
        %v2287 = vlog2.pop %v2211
        %v2288 = vmul.f32 %v2287, 0.6931472
        %v2289 = vlog2.pop %v2214
        %v2290 = vmul.f32 %v2289, 0.6931472
        %v2291 = vlog2.pop %v2217
        %v2292 = vmul.f32 %v2291, 0.6931472
        %v2293 = vlog2.pop %v2220
        %v2294 = vmul.f32 %v2293, 0.6931472
        %v2295 = vlog2.pop %v2223
        %v2296 = vmul.f32 %v2295, 0.6931472
        %v2297 = vlog2.pop %v2226
        %v2298 = vmul.f32 %v2297, 0.6931472
        %v2299 = vlog2.pop %v2229
        %v2300 = vmul.f32 %v2299, 0.6931472
        %v2301 = vlog2.pop %v2232
        %v2302 = vmul.f32 %v2301, 0.6931472
        %v2303 = vlog2.pop %v2235
        %v2304 = vmul.f32 %v2303, 0.6931472
        %v2305 = vlog2.pop %v2238
        %v2306 = vmul.f32 %v2305, 0.6931472
        %v2307 = vlog2.pop %v2241
        %v2308 = vmul.f32 %v2307, 0.6931472
        %v2309 = vlog2.pop %v2244
        %v2310 = vmul.f32 %v2309, 0.6931472
        %v2311 = vlog2.pop %v2247
        %v2312 = vmul.f32 %v2311, 0.6931472
        %v2313 = vlog2.pop %v2250
        %v2314 = vmul.f32 %v2313, 0.6931472
        %v2315 = vsub.f32 %v2155, %v2284
        %v2316 = vsub.f32 %v2156, %v2286
        %v2317 = vsub.f32 %v2157, %v2288
        %v2318 = vsub.f32 %v2158, %v2290
        %v2319 = vsub.f32 %v2159, %v2292
        %v2320 = vsub.f32 %v2160, %v2294
        %v2321 = vsub.f32 %v2161, %v2296
        %v2322 = vsub.f32 %v2162, %v2298
        %v2323 = vsub.f32 %v2163, %v2300
        %v2324 = vsub.f32 %v2164, %v2302
        %v2325 = vsub.f32 %v2165, %v2304
        %v2326 = vsub.f32 %v2166, %v2306
        %v2327 = vsub.f32 %v2167, %v2308
        %v2328 = vsub.f32 %v2168, %v2310
        %v2329 = vsub.f32 %v2169, %v2312
        %v2330 = vsub.f32 %v2170, %v2314
        %2331 = vst.msk [vmem:[%s410] sm:$0xff] %vm2090, %v2267
        %2332 = vst.msk [vmem:[%s410 + $0x8] sm:$0xff] %vm2090, %v2268
        %2333 = vst.msk [vmem:[%s410 + $0x10] sm:$0xff] %vm2090, %v2269
        %2334 = vst.msk [vmem:[%s410 + $0x18] sm:$0xff] %vm2090, %v2270
        %2335 = vst.msk [vmem:[%s410 + $0x20] sm:$0xff] %vm2090, %v2271
        %2336 = vst.msk [vmem:[%s410 + $0x28] sm:$0xff] %vm2090, %v2272
        %2337 = vst.msk [vmem:[%s410 + $0x30] sm:$0xff] %vm2090, %v2273
        %2338 = vst.msk [vmem:[%s410 + $0x38] sm:$0xff] %vm2090, %v2274
        %2339 = vst.msk [vmem:[%s410 + $0x40] sm:$0xff] %vm2090, %v2275
        %2340 = vst.msk [vmem:[%s410 + $0x48] sm:$0xff] %vm2090, %v2276
        %2341 = vst.msk [vmem:[%s410 + $0x50] sm:$0xff] %vm2090, %v2277
        %2342 = vst.msk [vmem:[%s410 + $0x58] sm:$0xff] %vm2090, %v2278
        %2343 = vst.msk [vmem:[%s410 + $0x60] sm:$0xff] %vm2090, %v2279
        %2344 = vst.msk [vmem:[%s410 + $0x68] sm:$0xff] %vm2090, %v2280
        %2345 = vst.msk [vmem:[%s410 + $0x70] sm:$0xff] %vm2090, %v2281
        %2346 = vst.msk [vmem:[%s410 + $0x78] sm:$0xff] %vm2090, %v2282
        %2347 = vst.msk [vmem:[%s422] sm:$0xff] %vm2090, %v2315
        %2348 = vst.msk [vmem:[%s422 + $0x8] sm:$0xff] %vm2090, %v2316
        %2349 = vst.msk [vmem:[%s422 + $0x10] sm:$0xff] %vm2090, %v2317
        %2350 = vst.msk [vmem:[%s422 + $0x18] sm:$0xff] %vm2090, %v2318
        %2351 = vst.msk [vmem:[%s422 + $0x20] sm:$0xff] %vm2090, %v2319
        %2352 = vst.msk [vmem:[%s422 + $0x28] sm:$0xff] %vm2090, %v2320
        %2353 = vst.msk [vmem:[%s422 + $0x30] sm:$0xff] %vm2090, %v2321
        %2354 = vst.msk [vmem:[%s422 + $0x38] sm:$0xff] %vm2090, %v2322
        %2355 = vst.msk [vmem:[%s422 + $0x40] sm:$0xff] %vm2090, %v2323
        %2356 = vst.msk [vmem:[%s422 + $0x48] sm:$0xff] %vm2090, %v2324
        %2357 = vst.msk [vmem:[%s422 + $0x50] sm:$0xff] %vm2090, %v2325
        %2358 = vst.msk [vmem:[%s422 + $0x58] sm:$0xff] %vm2090, %v2326
        %2359 = vst.msk [vmem:[%s422 + $0x60] sm:$0xff] %vm2090, %v2327
        %2360 = vst.msk [vmem:[%s422 + $0x68] sm:$0xff] %vm2090, %v2328
        %2361 = vst.msk [vmem:[%s422 + $0x70] sm:$0xff] %vm2090, %v2329
        %2362 = vst.msk [vmem:[%s422 + $0x78] sm:$0xff] %vm2090, %v2330
        %2363 = vset.pattern.permute.xlu0 0
        %2364 = vperm.xlu0 %2363, %v446
        %v2365 = vpop.permute.xlu0 %2364
        %2366 = vset.pattern.permute.xlu0 0
        %2367 = vperm.xlu0 %2366, %v447
        %v2368 = vpop.permute.xlu0 %2367
        %vm2369 = vcmp.lt.s32.totalorder %v1815, %v2365
        %vm2370 = vcmp.lt.s32.totalorder %v1815, %v2368
        %v2371 = vsel %vm2369, 1, 0
        %v2372 = vsel %vm2370, 1, 0
        %v2373 = vcvt.s32.f32 %v2371
        %v2374 = vcvt.s32.f32 %v2372
        %v2375 = vmul.f32 %v2267, %v2315
        %v2376 = vmul.f32 %v2268, %v2316
        %v2377 = vmul.f32 %v2269, %v2317
        %v2378 = vmul.f32 %v2270, %v2318
        %v2379 = vmul.f32 %v2271, %v2319
        %v2380 = vmul.f32 %v2272, %v2320
        %v2381 = vmul.f32 %v2273, %v2321
        %v2382 = vmul.f32 %v2274, %v2322
        %v2383 = vmul.f32 %v2275, %v2323
        %v2384 = vmul.f32 %v2276, %v2324
        %v2385 = vmul.f32 %v2277, %v2325
        %v2386 = vmul.f32 %v2278, %v2326
        %v2387 = vmul.f32 %v2279, %v2327
        %v2388 = vmul.f32 %v2280, %v2328
        %v2389 = vmul.f32 %v2281, %v2329
        %v2390 = vmul.f32 %v2282, %v2330
        %v2391 = vsel %vm2090, %v2375, 0.0
        %2392 = vadd.xlane.f32.xlu0 %v2391
        %v2393 = vpop.xlane.xlu0 %2392
        %v2394 = vsel %vm2090, %v2376, 0.0
        %2395 = vadd.xlane.f32.xlu0 %v2394
        %v2396 = vpop.xlane.xlu0 %2395
        %v2397 = vsel %vm2090, %v2377, 0.0
        %2398 = vadd.xlane.f32.xlu0 %v2397
        %v2399 = vpop.xlane.xlu0 %2398
        %v2400 = vsel %vm2090, %v2378, 0.0
        %2401 = vadd.xlane.f32.xlu0 %v2400
        %v2402 = vpop.xlane.xlu0 %2401
        %v2403 = vsel %vm2090, %v2379, 0.0
        %2404 = vadd.xlane.f32.xlu0 %v2403
        %v2405 = vpop.xlane.xlu0 %2404
        %v2406 = vsel %vm2090, %v2380, 0.0
        %2407 = vadd.xlane.f32.xlu0 %v2406
        %v2408 = vpop.xlane.xlu0 %2407
        %v2409 = vsel %vm2090, %v2381, 0.0
        %2410 = vadd.xlane.f32.xlu0 %v2409
        %v2411 = vpop.xlane.xlu0 %2410
        %v2412 = vsel %vm2090, %v2382, 0.0
        %2413 = vadd.xlane.f32.xlu0 %v2412
        %v2414 = vpop.xlane.xlu0 %2413
        %v2415 = vsel %vm2090, %v2383, 0.0
        %2416 = vadd.xlane.f32.xlu0 %v2415
        %v2417 = vpop.xlane.xlu0 %2416
        %v2418 = vsel %vm2090, %v2384, 0.0
        %2419 = vadd.xlane.f32.xlu0 %v2418
        %v2420 = vpop.xlane.xlu0 %2419
        %v2421 = vsel %vm2090, %v2385, 0.0
        %2422 = vadd.xlane.f32.xlu0 %v2421
        %v2423 = vpop.xlane.xlu0 %2422
        %v2424 = vsel %vm2090, %v2386, 0.0
        %2425 = vadd.xlane.f32.xlu0 %v2424
        %v2426 = vpop.xlane.xlu0 %2425
        %v2427 = vsel %vm2090, %v2387, 0.0
        %2428 = vadd.xlane.f32.xlu0 %v2427
        %v2429 = vpop.xlane.xlu0 %2428
        %v2430 = vsel %vm2090, %v2388, 0.0
        %2431 = vadd.xlane.f32.xlu0 %v2430
        %v2432 = vpop.xlane.xlu0 %2431
        %v2433 = vsel %vm2090, %v2389, 0.0
        %2434 = vadd.xlane.f32.xlu0 %v2433
        %v2435 = vpop.xlane.xlu0 %2434
        %v2436 = vsel %vm2090, %v2390, 0.0
        %2437 = vadd.xlane.f32.xlu0 %v2436
        %v2438 = vpop.xlane.xlu0 %2437
        %v2439 = vsub.f32 0.0, %v2393
        %v2440 = vsub.f32 0.0, %v2396
        %v2441 = vsub.f32 0.0, %v2399
        %v2442 = vsub.f32 0.0, %v2402
        %v2443 = vsub.f32 0.0, %v2405
        %v2444 = vsub.f32 0.0, %v2408
        %v2445 = vsub.f32 0.0, %v2411
        %v2446 = vsub.f32 0.0, %v2414
        %v2447 = vsub.f32 0.0, %v2417
        %v2448 = vsub.f32 0.0, %v2420
        %v2449 = vsub.f32 0.0, %v2423
        %v2450 = vsub.f32 0.0, %v2426
        %v2451 = vsub.f32 0.0, %v2429
        %v2452 = vsub.f32 0.0, %v2432
        %v2453 = vsub.f32 0.0, %v2435
        %v2454 = vsub.f32 0.0, %v2438
        %v2457 = vlaneseq
        %v2458 = vshrl.u32 %v2457, 7
        %v2459 = vsub.s32 0, %v2458
        %v2460 = vrot.slane %v2373, %v2459
        %2462 = vbcast.lane.b32.xlu0 %v2460, 256
        %v2463 = vpop.permute.xlu0 %2462
        %v2464 = vlaneseq
        %v2465 = vshrl.u32 %v2464, 7
        %v2466 = vsub.s32 1, %v2465
        %v2467 = vrot.slane %v2373, %v2466
        %2469 = vbcast.lane.b32.xlu0 %v2467, 256
        %v2470 = vpop.permute.xlu0 %2469
        %v2471 = vlaneseq
        %v2472 = vshrl.u32 %v2471, 7
        %v2473 = vsub.s32 2, %v2472
        %v2474 = vrot.slane %v2373, %v2473
        %2476 = vbcast.lane.b32.xlu0 %v2474, 256
        %v2477 = vpop.permute.xlu0 %2476
        %v2478 = vlaneseq
        %v2479 = vshrl.u32 %v2478, 7
        %v2480 = vsub.s32 3, %v2479
        %v2481 = vrot.slane %v2373, %v2480
        %2483 = vbcast.lane.b32.xlu0 %v2481, 256
        %v2484 = vpop.permute.xlu0 %2483
        %v2485 = vlaneseq
        %v2486 = vshrl.u32 %v2485, 7
        %v2487 = vsub.s32 4, %v2486
        %v2488 = vrot.slane %v2373, %v2487
        %2490 = vbcast.lane.b32.xlu0 %v2488, 256
        %v2491 = vpop.permute.xlu0 %2490
        %v2492 = vlaneseq
        %v2493 = vshrl.u32 %v2492, 7
        %v2494 = vsub.s32 5, %v2493
        %v2495 = vrot.slane %v2373, %v2494
        %2497 = vbcast.lane.b32.xlu0 %v2495, 256
        %v2498 = vpop.permute.xlu0 %2497
        %v2499 = vlaneseq
        %v2500 = vshrl.u32 %v2499, 7
        %v2501 = vsub.s32 6, %v2500
        %v2502 = vrot.slane %v2373, %v2501
        %2504 = vbcast.lane.b32.xlu0 %v2502, 256
        %v2505 = vpop.permute.xlu0 %2504
        %v2506 = vlaneseq
        %v2507 = vshrl.u32 %v2506, 7
        %v2508 = vsub.s32 7, %v2507
        %v2509 = vrot.slane %v2373, %v2508
        %2511 = vbcast.lane.b32.xlu0 %v2509, 256
        %v2512 = vpop.permute.xlu0 %2511
        %v2513 = vlaneseq
        %v2514 = vshrl.u32 %v2513, 7
        %v2515 = vsub.s32 0, %v2514
        %v2516 = vrot.slane %v2374, %v2515
        %2518 = vbcast.lane.b32.xlu0 %v2516, 256
        %v2519 = vpop.permute.xlu0 %2518
        %v2520 = vlaneseq
        %v2521 = vshrl.u32 %v2520, 7
        %v2522 = vsub.s32 1, %v2521
        %v2523 = vrot.slane %v2374, %v2522
        %2525 = vbcast.lane.b32.xlu0 %v2523, 256
        %v2526 = vpop.permute.xlu0 %2525
        %v2527 = vlaneseq
        %v2528 = vshrl.u32 %v2527, 7
        %v2529 = vsub.s32 2, %v2528
        %v2530 = vrot.slane %v2374, %v2529
        %2532 = vbcast.lane.b32.xlu0 %v2530, 256
        %v2533 = vpop.permute.xlu0 %2532
        %v2534 = vlaneseq
        %v2535 = vshrl.u32 %v2534, 7
        %v2536 = vsub.s32 3, %v2535
        %v2537 = vrot.slane %v2374, %v2536
        %2539 = vbcast.lane.b32.xlu0 %v2537, 256
        %v2540 = vpop.permute.xlu0 %2539
        %v2541 = vlaneseq
        %v2542 = vshrl.u32 %v2541, 7
        %v2543 = vsub.s32 4, %v2542
        %v2544 = vrot.slane %v2374, %v2543
        %2546 = vbcast.lane.b32.xlu0 %v2544, 256
        %v2547 = vpop.permute.xlu0 %2546
        %v2548 = vlaneseq
        %v2549 = vshrl.u32 %v2548, 7
        %v2550 = vsub.s32 5, %v2549
        %v2551 = vrot.slane %v2374, %v2550
        %2553 = vbcast.lane.b32.xlu0 %v2551, 256
        %v2554 = vpop.permute.xlu0 %2553
        %v2555 = vlaneseq
        %v2556 = vshrl.u32 %v2555, 7
        %v2557 = vsub.s32 6, %v2556
        %v2558 = vrot.slane %v2374, %v2557
        %2560 = vbcast.lane.b32.xlu0 %v2558, 256
        %v2561 = vpop.permute.xlu0 %2560
        %v2562 = vlaneseq
        %v2563 = vshrl.u32 %v2562, 7
        %v2564 = vsub.s32 7, %v2563
        %v2565 = vrot.slane %v2374, %v2564
        %2567 = vbcast.lane.b32.xlu0 %v2565, 256
        %v2568 = vpop.permute.xlu0 %2567
        %v2585 = vmul.f32 %v2439, %v2463
        %v2586 = vmul.f32 %v2440, %v2470
        %v2587 = vmul.f32 %v2441, %v2477
        %v2588 = vmul.f32 %v2442, %v2484
        %v2589 = vmul.f32 %v2443, %v2491
        %v2590 = vmul.f32 %v2444, %v2498
        %v2591 = vmul.f32 %v2445, %v2505
        %v2592 = vmul.f32 %v2446, %v2512
        %v2593 = vmul.f32 %v2447, %v2519
        %v2594 = vmul.f32 %v2448, %v2526
        %v2595 = vmul.f32 %v2449, %v2533
        %v2596 = vmul.f32 %v2450, %v2540
        %v2597 = vmul.f32 %v2451, %v2547
        %v2598 = vmul.f32 %v2452, %v2554
        %v2599 = vmul.f32 %v2453, %v2561
        %v2600 = vmul.f32 %v2454, %v2568
        %2617 = vset.pattern.permute.xlu0 0
        %2618 = vperm.xlu0 %2617, %v2585
        %v2619 = vpop.permute.xlu0 %2618
        %2620 = vset.pattern.permute.xlu0 0
        %2621 = vperm.xlu0 %2620, %v2586
        %v2622 = vpop.permute.xlu0 %2621
        %2623 = vset.pattern.permute.xlu0 0
        %2624 = vperm.xlu0 %2623, %v2587
        %v2625 = vpop.permute.xlu0 %2624
        %2626 = vset.pattern.permute.xlu0 0
        %2627 = vperm.xlu0 %2626, %v2588
        %v2628 = vpop.permute.xlu0 %2627
        %2629 = vset.pattern.permute.xlu0 0
        %2630 = vperm.xlu0 %2629, %v2589
        %v2631 = vpop.permute.xlu0 %2630
        %2632 = vset.pattern.permute.xlu0 0
        %2633 = vperm.xlu0 %2632, %v2590
        %v2634 = vpop.permute.xlu0 %2633
        %2635 = vset.pattern.permute.xlu0 0
        %2636 = vperm.xlu0 %2635, %v2591
        %v2637 = vpop.permute.xlu0 %2636
        %2638 = vset.pattern.permute.xlu0 0
        %2639 = vperm.xlu0 %2638, %v2592
        %v2640 = vpop.permute.xlu0 %2639
        %2641 = vset.pattern.permute.xlu0 0
        %2642 = vperm.xlu0 %2641, %v2593
        %v2643 = vpop.permute.xlu0 %2642
        %2644 = vset.pattern.permute.xlu0 0
        %2645 = vperm.xlu0 %2644, %v2594
        %v2646 = vpop.permute.xlu0 %2645
        %2647 = vset.pattern.permute.xlu0 0
        %2648 = vperm.xlu0 %2647, %v2595
        %v2649 = vpop.permute.xlu0 %2648
        %2650 = vset.pattern.permute.xlu0 0
        %2651 = vperm.xlu0 %2650, %v2596
        %v2652 = vpop.permute.xlu0 %2651
        %2653 = vset.pattern.permute.xlu0 0
        %2654 = vperm.xlu0 %2653, %v2597
        %v2655 = vpop.permute.xlu0 %2654
        %2656 = vset.pattern.permute.xlu0 0
        %2657 = vperm.xlu0 %2656, %v2598
        %v2658 = vpop.permute.xlu0 %2657
        %2659 = vset.pattern.permute.xlu0 0
        %2660 = vperm.xlu0 %2659, %v2599
        %v2661 = vpop.permute.xlu0 %2660
        %2662 = vset.pattern.permute.xlu0 0
        %2663 = vperm.xlu0 %2662, %v2600
        %v2664 = vpop.permute.xlu0 %2663
        %v2665 = vlaneseq
        %v2666 = vshrl.u32 %v2665, 7
        %v2667 = vsub.s32 %v1815, %v2666
        %v2668 = vrot.slane %v2619, %v2667
        %v2669 = vlaneseq
        %v2670 = vshrl.u32 %v2669, 7
        %v2671 = vsub.s32 %v1815, %v2670
        %v2672 = vrot.slane %v2622, %v2671
        %v2673 = vlaneseq
        %v2674 = vshrl.u32 %v2673, 7
        %v2675 = vsub.s32 %v1815, %v2674
        %v2676 = vrot.slane %v2625, %v2675
        %v2677 = vlaneseq
        %v2678 = vshrl.u32 %v2677, 7
        %v2679 = vsub.s32 %v1815, %v2678
        %v2680 = vrot.slane %v2628, %v2679
        %v2681 = vlaneseq
        %v2682 = vshrl.u32 %v2681, 7
        %v2683 = vsub.s32 %v1815, %v2682
        %v2684 = vrot.slane %v2631, %v2683
        %v2685 = vlaneseq
        %v2686 = vshrl.u32 %v2685, 7
        %v2687 = vsub.s32 %v1815, %v2686
        %v2688 = vrot.slane %v2634, %v2687
        %v2689 = vlaneseq
        %v2690 = vshrl.u32 %v2689, 7
        %v2691 = vsub.s32 %v1815, %v2690
        %v2692 = vrot.slane %v2637, %v2691
        %v2693 = vlaneseq
        %v2694 = vshrl.u32 %v2693, 7
        %v2695 = vsub.s32 %v1815, %v2694
        %v2696 = vrot.slane %v2640, %v2695
        %v2697 = vlaneseq
        %v2698 = vshrl.u32 %v2697, 7
        %v2699 = vsub.s32 %v1815, %v2698
        %v2700 = vrot.slane %v2643, %v2699
        %v2701 = vlaneseq
        %v2702 = vshrl.u32 %v2701, 7
        %v2703 = vsub.s32 %v1815, %v2702
        %v2704 = vrot.slane %v2646, %v2703
        %v2705 = vlaneseq
        %v2706 = vshrl.u32 %v2705, 7
        %v2707 = vsub.s32 %v1815, %v2706
        %v2708 = vrot.slane %v2649, %v2707
        %v2709 = vlaneseq
        %v2710 = vshrl.u32 %v2709, 7
        %v2711 = vsub.s32 %v1815, %v2710
        %v2712 = vrot.slane %v2652, %v2711
        %v2713 = vlaneseq
        %v2714 = vshrl.u32 %v2713, 7
        %v2715 = vsub.s32 %v1815, %v2714
        %v2716 = vrot.slane %v2655, %v2715
        %v2717 = vlaneseq
        %v2718 = vshrl.u32 %v2717, 7
        %v2719 = vsub.s32 %v1815, %v2718
        %v2720 = vrot.slane %v2658, %v2719
        %v2721 = vlaneseq
        %v2722 = vshrl.u32 %v2721, 7
        %v2723 = vsub.s32 %v1815, %v2722
        %v2724 = vrot.slane %v2661, %v2723
        %v2725 = vlaneseq
        %v2726 = vshrl.u32 %v2725, 7
        %v2727 = vsub.s32 %v1815, %v2726
        %v2728 = vrot.slane %v2664, %v2727
        %vm2729 = vcmask 1041409
        %v2730 = vsel %vm2729, %v2672, %v2668
        %vm2731 = vcmask 1042434
        %v2732 = vsel %vm2731, %v2676, %v2730
        %vm2733 = vcmask 1043459
        %v2734 = vsel %vm2733, %v2680, %v2732
        %vm2735 = vcmask 1044484
        %v2736 = vsel %vm2735, %v2684, %v2734
        %vm2737 = vcmask 1045509
        %v2738 = vsel %vm2737, %v2688, %v2736
        %vm2739 = vcmask 1046534
        %v2740 = vsel %vm2739, %v2692, %v2738
        %vm2741 = vcmask 1047559
        %v2742 = vsel %vm2741, %v2696, %v2740
        %v2743 = vsel %vm2729, %v2704, %v2700
        %v2744 = vsel %vm2731, %v2708, %v2743
        %v2745 = vsel %vm2733, %v2712, %v2744
        %v2746 = vsel %vm2735, %v2716, %v2745
        %v2747 = vsel %vm2737, %v2720, %v2746
        %v2748 = vsel %vm2739, %v2724, %v2747
        %v2749 = vsel %vm2741, %v2728, %v2748
        %2752 = vst.msk [vmem:[%s416] sm:$0xff] %vm2090, %v2742
        %2753 = vst.msk [vmem:[%s416 + $0x8] sm:$0xff] %vm2090, %v2749
        %v2755 = vsel %vm2090, %v2267, 0
        %2757 = vmatprep.subr.mxu0 0.0
        %2758 = vmatpush1.msra.mxu0 %v430
        %2759 = vmatprep.subr.mxu0 0.0
        %2760 = vmatpush1.msra.mxu0 0.0
        %2761 = vmatprep.subr.mxu0 0.0
        %2762 = vmatpush1.msra.mxu0 0.0
        %2763 = vmatprep.subr.mxu0 0.0
        %2764 = vmatpush1.msra.mxu0 0.0
        %2765 = vmatprep.subr.mxu0 0.0
        %2766 = vmatpush1.msra.mxu0 0.0
        %2767 = vmatprep.subr.mxu0 0.0
        %2768 = vmatpush1.msra.mxu0 0.0
        %2769 = vmatprep.subr.mxu0 0.0
        %2770 = vmatpush1.msra.mxu0 0.0
        %2771 = vmatprep.subr.mxu0 0.0
        %2772 = vmatpush1.msra.mxu0 0.0
        %2773 = vmatprep.subr.mxu0 0.0
        %2774 = vmatpush1.msra.mxu0 0.0
        %2775 = vmatprep.subr.mxu0 0.0
        %2776 = vmatpush1.msra.mxu0 0.0
        %2777 = vmatprep.subr.mxu0 0.0
        %2778 = vmatpush1.msra.mxu0 0.0
        %2779 = vmatprep.subr.mxu0 0.0
        %2780 = vmatpush1.msra.mxu0 0.0
        %2781 = vmatprep.subr.mxu0 0.0
        %2782 = vmatpush1.msra.mxu0 0.0
        %2783 = vmatprep.subr.mxu0 0.0
        %2784 = vmatpush1.msra.mxu0 0.0
        %2785 = vmatprep.subr.mxu0 0.0
        %2786 = vmatpush1.msra.mxu0 0.0
        %2787 = vmatprep.subr.mxu0 0.0
        %2788 = vmatpush1.msra.mxu0 0.0
        %2789 = vmatprep.subr.mxu0 0.0
        %2790 = vmatpush1.msra.mxu0 0.0
        %2791 = vmatprep.subr.mxu0 0.0
        %2792 = vmatpush1.msra.mxu0 0.0
        %2793 = vmatprep.subr.mxu0 0.0
        %2794 = vmatpush1.msra.mxu0 0.0
        %2795 = vmatprep.subr.mxu0 0.0
        %2796 = vmatpush1.msra.mxu0 0.0
        %2797 = vmatprep.subr.mxu0 0.0
        %2798 = vmatpush1.msra.mxu0 0.0
        %2799 = vmatprep.subr.mxu0 0.0
        %2800 = vmatpush1.msra.mxu0 0.0
        %2801 = vmatprep.subr.mxu0 0.0
        %2802 = vmatpush1.msra.mxu0 0.0
        %2803 = vmatprep.subr.mxu0 0.0
        %2804 = vmatpush1.msra.mxu0 0.0
        %2805 = vmatprep.subr.mxu0 0.0
        %2806 = vmatpush1.msra.mxu0 0.0
        %2807 = vmatprep.subr.mxu0 0.0
        %2808 = vmatpush1.msra.mxu0 0.0
        %2809 = vmatprep.subr.mxu0 0.0
        %2810 = vmatpush1.msra.mxu0 0.0
        %2811 = vmatprep.subr.mxu0 0.0
        %2812 = vmatpush1.msra.mxu0 0.0
        %2813 = vmatprep.subr.mxu0 0.0
        %2814 = vmatpush1.msra.mxu0 0.0
        %2815 = vmatprep.subr.mxu0 0.0
        %2816 = vmatpush1.msra.mxu0 0.0
        %2817 = vmatprep.subr.mxu0 0.0
        %2818 = vmatpush1.msra.mxu0 0.0
        %2819 = vmatprep.subr.mxu0 0.0
        %2820 = vmatpush1.msra.mxu0 0.0
        %2821 = vmatprep.mubr.f32.mxu0 0.0
        %2822 = vmatmul.mubr.f32.gmra.mrb[0].mxu0 %v2755
        %v2823 = vpop.f32.mrb[0].mxu0
        %v2824 = vadd.f32 0.0, %v2823
        %v2825 = vpop.f32.mrb[0].mxu0
        %2826 = vdwg.mxu0
        %v2828 = vsel %vm2090, %v2268, 0
        %2830 = vmatprep.subr.mxu0 0.0
        %2831 = vmatpush1.msra.mxu0 %v431
        %2832 = vmatprep.subr.mxu0 0.0
        %2833 = vmatpush1.msra.mxu0 0.0
        %2834 = vmatprep.subr.mxu0 0.0
        %2835 = vmatpush1.msra.mxu0 0.0
        %2836 = vmatprep.subr.mxu0 0.0
        %2837 = vmatpush1.msra.mxu0 0.0
        %2838 = vmatprep.subr.mxu0 0.0
        %2839 = vmatpush1.msra.mxu0 0.0
        %2840 = vmatprep.subr.mxu0 0.0
        %2841 = vmatpush1.msra.mxu0 0.0
        %2842 = vmatprep.subr.mxu0 0.0
        %2843 = vmatpush1.msra.mxu0 0.0
        %2844 = vmatprep.subr.mxu0 0.0
        %2845 = vmatpush1.msra.mxu0 0.0
        %2846 = vmatprep.subr.mxu0 0.0
        %2847 = vmatpush1.msra.mxu0 0.0
        %2848 = vmatprep.subr.mxu0 0.0
        %2849 = vmatpush1.msra.mxu0 0.0
        %2850 = vmatprep.subr.mxu0 0.0
        %2851 = vmatpush1.msra.mxu0 0.0
        %2852 = vmatprep.subr.mxu0 0.0
        %2853 = vmatpush1.msra.mxu0 0.0
        %2854 = vmatprep.subr.mxu0 0.0
        %2855 = vmatpush1.msra.mxu0 0.0
        %2856 = vmatprep.subr.mxu0 0.0
        %2857 = vmatpush1.msra.mxu0 0.0
        %2858 = vmatprep.subr.mxu0 0.0
        %2859 = vmatpush1.msra.mxu0 0.0
        %2860 = vmatprep.subr.mxu0 0.0
        %2861 = vmatpush1.msra.mxu0 0.0
        %2862 = vmatprep.subr.mxu0 0.0
        %2863 = vmatpush1.msra.mxu0 0.0
        %2864 = vmatprep.subr.mxu0 0.0
        %2865 = vmatpush1.msra.mxu0 0.0
        %2866 = vmatprep.subr.mxu0 0.0
        %2867 = vmatpush1.msra.mxu0 0.0
        %2868 = vmatprep.subr.mxu0 0.0
        %2869 = vmatpush1.msra.mxu0 0.0
        %2870 = vmatprep.subr.mxu0 0.0
        %2871 = vmatpush1.msra.mxu0 0.0
        %2872 = vmatprep.subr.mxu0 0.0
        %2873 = vmatpush1.msra.mxu0 0.0
        %2874 = vmatprep.subr.mxu0 0.0
        %2875 = vmatpush1.msra.mxu0 0.0
        %2876 = vmatprep.subr.mxu0 0.0
        %2877 = vmatpush1.msra.mxu0 0.0
        %2878 = vmatprep.subr.mxu0 0.0
        %2879 = vmatpush1.msra.mxu0 0.0
        %2880 = vmatprep.subr.mxu0 0.0
        %2881 = vmatpush1.msra.mxu0 0.0
        %2882 = vmatprep.subr.mxu0 0.0
        %2883 = vmatpush1.msra.mxu0 0.0
        %2884 = vmatprep.subr.mxu0 0.0
        %2885 = vmatpush1.msra.mxu0 0.0
        %2886 = vmatprep.subr.mxu0 0.0
        %2887 = vmatpush1.msra.mxu0 0.0
        %2888 = vmatprep.subr.mxu0 0.0
        %2889 = vmatpush1.msra.mxu0 0.0
        %2890 = vmatprep.subr.mxu0 0.0
        %2891 = vmatpush1.msra.mxu0 0.0
        %2892 = vmatprep.subr.mxu0 0.0
        %2893 = vmatpush1.msra.mxu0 0.0
        %2894 = vmatprep.mubr.f32.mxu0 0.0
        %2895 = vmatmul.mubr.f32.gmra.mrb[0].mxu0 %v2828
        %v2896 = vpop.f32.mrb[0].mxu0
        %v2897 = vadd.f32 0.0, %v2896
        %v2898 = vpop.f32.mrb[0].mxu0
        %2899 = vdwg.mxu0
        %v2901 = vsel %vm2090, %v2269, 0
        %2903 = vmatprep.subr.mxu0 0.0
        %2904 = vmatpush1.msra.mxu0 %v432
        %2905 = vmatprep.subr.mxu0 0.0
        %2906 = vmatpush1.msra.mxu0 0.0
        %2907 = vmatprep.subr.mxu0 0.0
        %2908 = vmatpush1.msra.mxu0 0.0
        %2909 = vmatprep.subr.mxu0 0.0
        %2910 = vmatpush1.msra.mxu0 0.0
        %2911 = vmatprep.subr.mxu0 0.0
        %2912 = vmatpush1.msra.mxu0 0.0
        %2913 = vmatprep.subr.mxu0 0.0
        %2914 = vmatpush1.msra.mxu0 0.0
        %2915 = vmatprep.subr.mxu0 0.0
        %2916 = vmatpush1.msra.mxu0 0.0
        %2917 = vmatprep.subr.mxu0 0.0
        %2918 = vmatpush1.msra.mxu0 0.0
        %2919 = vmatprep.subr.mxu0 0.0
        %2920 = vmatpush1.msra.mxu0 0.0
        %2921 = vmatprep.subr.mxu0 0.0
        %2922 = vmatpush1.msra.mxu0 0.0
        %2923 = vmatprep.subr.mxu0 0.0
        %2924 = vmatpush1.msra.mxu0 0.0
        %2925 = vmatprep.subr.mxu0 0.0
        %2926 = vmatpush1.msra.mxu0 0.0
        %2927 = vmatprep.subr.mxu0 0.0
        %2928 = vmatpush1.msra.mxu0 0.0
        %2929 = vmatprep.subr.mxu0 0.0
        %2930 = vmatpush1.msra.mxu0 0.0
        %2931 = vmatprep.subr.mxu0 0.0
        %2932 = vmatpush1.msra.mxu0 0.0
        %2933 = vmatprep.subr.mxu0 0.0
        %2934 = vmatpush1.msra.mxu0 0.0
        %2935 = vmatprep.subr.mxu0 0.0
        %2936 = vmatpush1.msra.mxu0 0.0
        %2937 = vmatprep.subr.mxu0 0.0
        %2938 = vmatpush1.msra.mxu0 0.0
        %2939 = vmatprep.subr.mxu0 0.0
        %2940 = vmatpush1.msra.mxu0 0.0
        %2941 = vmatprep.subr.mxu0 0.0
        %2942 = vmatpush1.msra.mxu0 0.0
        %2943 = vmatprep.subr.mxu0 0.0
        %2944 = vmatpush1.msra.mxu0 0.0
        %2945 = vmatprep.subr.mxu0 0.0
        %2946 = vmatpush1.msra.mxu0 0.0
        %2947 = vmatprep.subr.mxu0 0.0
        %2948 = vmatpush1.msra.mxu0 0.0
        %2949 = vmatprep.subr.mxu0 0.0
        %2950 = vmatpush1.msra.mxu0 0.0
        %2951 = vmatprep.subr.mxu0 0.0
        %2952 = vmatpush1.msra.mxu0 0.0
        %2953 = vmatprep.subr.mxu0 0.0
        %2954 = vmatpush1.msra.mxu0 0.0
        %2955 = vmatprep.subr.mxu0 0.0
        %2956 = vmatpush1.msra.mxu0 0.0
        %2957 = vmatprep.subr.mxu0 0.0
        %2958 = vmatpush1.msra.mxu0 0.0
        %2959 = vmatprep.subr.mxu0 0.0
        %2960 = vmatpush1.msra.mxu0 0.0
        %2961 = vmatprep.subr.mxu0 0.0
        %2962 = vmatpush1.msra.mxu0 0.0
        %2963 = vmatprep.subr.mxu0 0.0
        %2964 = vmatpush1.msra.mxu0 0.0
        %2965 = vmatprep.subr.mxu0 0.0
        %2966 = vmatpush1.msra.mxu0 0.0
        %2967 = vmatprep.mubr.f32.mxu0 0.0
        %2968 = vmatmul.mubr.f32.gmra.mrb[0].mxu0 %v2901
        %v2969 = vpop.f32.mrb[0].mxu0
        %v2970 = vadd.f32 0.0, %v2969
        %v2971 = vpop.f32.mrb[0].mxu0
        %2972 = vdwg.mxu0
        %v2974 = vsel %vm2090, %v2270, 0
        %2976 = vmatprep.subr.mxu0 0.0
        %2977 = vmatpush1.msra.mxu0 %v433
        %2978 = vmatprep.subr.mxu0 0.0
        %2979 = vmatpush1.msra.mxu0 0.0
        %2980 = vmatprep.subr.mxu0 0.0
        %2981 = vmatpush1.msra.mxu0 0.0
        %2982 = vmatprep.subr.mxu0 0.0
        %2983 = vmatpush1.msra.mxu0 0.0
        %2984 = vmatprep.subr.mxu0 0.0
        %2985 = vmatpush1.msra.mxu0 0.0
        %2986 = vmatprep.subr.mxu0 0.0
        %2987 = vmatpush1.msra.mxu0 0.0
        %2988 = vmatprep.subr.mxu0 0.0
        %2989 = vmatpush1.msra.mxu0 0.0
        %2990 = vmatprep.subr.mxu0 0.0
        %2991 = vmatpush1.msra.mxu0 0.0
        %2992 = vmatprep.subr.mxu0 0.0
        %2993 = vmatpush1.msra.mxu0 0.0
        %2994 = vmatprep.subr.mxu0 0.0
        %2995 = vmatpush1.msra.mxu0 0.0
        %2996 = vmatprep.subr.mxu0 0.0
        %2997 = vmatpush1.msra.mxu0 0.0
        %2998 = vmatprep.subr.mxu0 0.0
        %2999 = vmatpush1.msra.mxu0 0.0
        %3000 = vmatprep.subr.mxu0 0.0
        %3001 = vmatpush1.msra.mxu0 0.0
        %3002 = vmatprep.subr.mxu0 0.0
        %3003 = vmatpush1.msra.mxu0 0.0
        %3004 = vmatprep.subr.mxu0 0.0
        %3005 = vmatpush1.msra.mxu0 0.0
        %3006 = vmatprep.subr.mxu0 0.0
        %3007 = vmatpush1.msra.mxu0 0.0
        %3008 = vmatprep.subr.mxu0 0.0
        %3009 = vmatpush1.msra.mxu0 0.0
        %3010 = vmatprep.subr.mxu0 0.0
        %3011 = vmatpush1.msra.mxu0 0.0
        %3012 = vmatprep.subr.mxu0 0.0
        %3013 = vmatpush1.msra.mxu0 0.0
        %3014 = vmatprep.subr.mxu0 0.0
        %3015 = vmatpush1.msra.mxu0 0.0
        %3016 = vmatprep.subr.mxu0 0.0
        %3017 = vmatpush1.msra.mxu0 0.0
        %3018 = vmatprep.subr.mxu0 0.0
        %3019 = vmatpush1.msra.mxu0 0.0
        %3020 = vmatprep.subr.mxu0 0.0
        %3021 = vmatpush1.msra.mxu0 0.0
        %3022 = vmatprep.subr.mxu0 0.0
        %3023 = vmatpush1.msra.mxu0 0.0
        %3024 = vmatprep.subr.mxu0 0.0
        %3025 = vmatpush1.msra.mxu0 0.0
        %3026 = vmatprep.subr.mxu0 0.0
        %3027 = vmatpush1.msra.mxu0 0.0
        %3028 = vmatprep.subr.mxu0 0.0
        %3029 = vmatpush1.msra.mxu0 0.0
        %3030 = vmatprep.subr.mxu0 0.0
        %3031 = vmatpush1.msra.mxu0 0.0
        %3032 = vmatprep.subr.mxu0 0.0
        %3033 = vmatpush1.msra.mxu0 0.0
        %3034 = vmatprep.subr.mxu0 0.0
        %3035 = vmatpush1.msra.mxu0 0.0
        %3036 = vmatprep.subr.mxu0 0.0
        %3037 = vmatpush1.msra.mxu0 0.0
        %3038 = vmatprep.subr.mxu0 0.0
        %3039 = vmatpush1.msra.mxu0 0.0
        %3040 = vmatprep.mubr.f32.mxu0 0.0
        %3041 = vmatmul.mubr.f32.gmra.mrb[0].mxu0 %v2974
        %v3042 = vpop.f32.mrb[0].mxu0
        %v3043 = vadd.f32 0.0, %v3042
        %v3044 = vpop.f32.mrb[0].mxu0
        %3045 = vdwg.mxu0
        %v3047 = vsel %vm2090, %v2271, 0
        %3049 = vmatprep.subr.mxu0 0.0
        %3050 = vmatpush1.msra.mxu0 %v434
        %3051 = vmatprep.subr.mxu0 0.0
        %3052 = vmatpush1.msra.mxu0 0.0
        %3053 = vmatprep.subr.mxu0 0.0
        %3054 = vmatpush1.msra.mxu0 0.0
        %3055 = vmatprep.subr.mxu0 0.0
        %3056 = vmatpush1.msra.mxu0 0.0
        %3057 = vmatprep.subr.mxu0 0.0
        %3058 = vmatpush1.msra.mxu0 0.0
        %3059 = vmatprep.subr.mxu0 0.0
        %3060 = vmatpush1.msra.mxu0 0.0
        %3061 = vmatprep.subr.mxu0 0.0
        %3062 = vmatpush1.msra.mxu0 0.0
        %3063 = vmatprep.subr.mxu0 0.0
        %3064 = vmatpush1.msra.mxu0 0.0
        %3065 = vmatprep.subr.mxu0 0.0
        %3066 = vmatpush1.msra.mxu0 0.0
        %3067 = vmatprep.subr.mxu0 0.0
        %3068 = vmatpush1.msra.mxu0 0.0
        %3069 = vmatprep.subr.mxu0 0.0
        %3070 = vmatpush1.msra.mxu0 0.0
        %3071 = vmatprep.subr.mxu0 0.0
        %3072 = vmatpush1.msra.mxu0 0.0
        %3073 = vmatprep.subr.mxu0 0.0
        %3074 = vmatpush1.msra.mxu0 0.0
        %3075 = vmatprep.subr.mxu0 0.0
        %3076 = vmatpush1.msra.mxu0 0.0
        %3077 = vmatprep.subr.mxu0 0.0
        %3078 = vmatpush1.msra.mxu0 0.0
        %3079 = vmatprep.subr.mxu0 0.0
        %3080 = vmatpush1.msra.mxu0 0.0
        %3081 = vmatprep.subr.mxu0 0.0
        %3082 = vmatpush1.msra.mxu0 0.0
        %3083 = vmatprep.subr.mxu0 0.0
        %3084 = vmatpush1.msra.mxu0 0.0
        %3085 = vmatprep.subr.mxu0 0.0
        %3086 = vmatpush1.msra.mxu0 0.0
        %3087 = vmatprep.subr.mxu0 0.0
        %3088 = vmatpush1.msra.mxu0 0.0
        %3089 = vmatprep.subr.mxu0 0.0
        %3090 = vmatpush1.msra.mxu0 0.0
        %3091 = vmatprep.subr.mxu0 0.0
        %3092 = vmatpush1.msra.mxu0 0.0
        %3093 = vmatprep.subr.mxu0 0.0
        %3094 = vmatpush1.msra.mxu0 0.0
        %3095 = vmatprep.subr.mxu0 0.0
        %3096 = vmatpush1.msra.mxu0 0.0
        %3097 = vmatprep.subr.mxu0 0.0
        %3098 = vmatpush1.msra.mxu0 0.0
        %3099 = vmatprep.subr.mxu0 0.0
        %3100 = vmatpush1.msra.mxu0 0.0
        %3101 = vmatprep.subr.mxu0 0.0
        %3102 = vmatpush1.msra.mxu0 0.0
        %3103 = vmatprep.subr.mxu0 0.0
        %3104 = vmatpush1.msra.mxu0 0.0
        %3105 = vmatprep.subr.mxu0 0.0
        %3106 = vmatpush1.msra.mxu0 0.0
        %3107 = vmatprep.subr.mxu0 0.0
        %3108 = vmatpush1.msra.mxu0 0.0
        %3109 = vmatprep.subr.mxu0 0.0
        %3110 = vmatpush1.msra.mxu0 0.0
        %3111 = vmatprep.subr.mxu0 0.0
        %3112 = vmatpush1.msra.mxu0 0.0
        %3113 = vmatprep.mubr.f32.mxu0 0.0
        %3114 = vmatmul.mubr.f32.gmra.mrb[0].mxu0 %v3047
        %v3115 = vpop.f32.mrb[0].mxu0
        %v3116 = vadd.f32 0.0, %v3115
        %v3117 = vpop.f32.mrb[0].mxu0
        %3118 = vdwg.mxu0
        %v3120 = vsel %vm2090, %v2272, 0
        %3122 = vmatprep.subr.mxu0 0.0
        %3123 = vmatpush1.msra.mxu0 %v435
        %3124 = vmatprep.subr.mxu0 0.0
        %3125 = vmatpush1.msra.mxu0 0.0
        %3126 = vmatprep.subr.mxu0 0.0
        %3127 = vmatpush1.msra.mxu0 0.0
        %3128 = vmatprep.subr.mxu0 0.0
        %3129 = vmatpush1.msra.mxu0 0.0
        %3130 = vmatprep.subr.mxu0 0.0
        %3131 = vmatpush1.msra.mxu0 0.0
        %3132 = vmatprep.subr.mxu0 0.0
        %3133 = vmatpush1.msra.mxu0 0.0
        %3134 = vmatprep.subr.mxu0 0.0
        %3135 = vmatpush1.msra.mxu0 0.0
        %3136 = vmatprep.subr.mxu0 0.0
        %3137 = vmatpush1.msra.mxu0 0.0
        %3138 = vmatprep.subr.mxu0 0.0
        %3139 = vmatpush1.msra.mxu0 0.0
        %3140 = vmatprep.subr.mxu0 0.0
        %3141 = vmatpush1.msra.mxu0 0.0
        %3142 = vmatprep.subr.mxu0 0.0
        %3143 = vmatpush1.msra.mxu0 0.0
        %3144 = vmatprep.subr.mxu0 0.0
        %3145 = vmatpush1.msra.mxu0 0.0
        %3146 = vmatprep.subr.mxu0 0.0
        %3147 = vmatpush1.msra.mxu0 0.0
        %3148 = vmatprep.subr.mxu0 0.0
        %3149 = vmatpush1.msra.mxu0 0.0
        %3150 = vmatprep.subr.mxu0 0.0
        %3151 = vmatpush1.msra.mxu0 0.0
        %3152 = vmatprep.subr.mxu0 0.0
        %3153 = vmatpush1.msra.mxu0 0.0
        %3154 = vmatprep.subr.mxu0 0.0
        %3155 = vmatpush1.msra.mxu0 0.0
        %3156 = vmatprep.subr.mxu0 0.0
        %3157 = vmatpush1.msra.mxu0 0.0
        %3158 = vmatprep.subr.mxu0 0.0
        %3159 = vmatpush1.msra.mxu0 0.0
        %3160 = vmatprep.subr.mxu0 0.0
        %3161 = vmatpush1.msra.mxu0 0.0
        %3162 = vmatprep.subr.mxu0 0.0
        %3163 = vmatpush1.msra.mxu0 0.0
        %3164 = vmatprep.subr.mxu0 0.0
        %3165 = vmatpush1.msra.mxu0 0.0
        %3166 = vmatprep.subr.mxu0 0.0
        %3167 = vmatpush1.msra.mxu0 0.0
        %3168 = vmatprep.subr.mxu0 0.0
        %3169 = vmatpush1.msra.mxu0 0.0
        %3170 = vmatprep.subr.mxu0 0.0
        %3171 = vmatpush1.msra.mxu0 0.0
        %3172 = vmatprep.subr.mxu0 0.0
        %3173 = vmatpush1.msra.mxu0 0.0
        %3174 = vmatprep.subr.mxu0 0.0
        %3175 = vmatpush1.msra.mxu0 0.0
        %3176 = vmatprep.subr.mxu0 0.0
        %3177 = vmatpush1.msra.mxu0 0.0
        %3178 = vmatprep.subr.mxu0 0.0
        %3179 = vmatpush1.msra.mxu0 0.0
        %3180 = vmatprep.subr.mxu0 0.0
        %3181 = vmatpush1.msra.mxu0 0.0
        %3182 = vmatprep.subr.mxu0 0.0
        %3183 = vmatpush1.msra.mxu0 0.0
        %3184 = vmatprep.subr.mxu0 0.0
        %3185 = vmatpush1.msra.mxu0 0.0
        %3186 = vmatprep.mubr.f32.mxu0 0.0
        %3187 = vmatmul.mubr.f32.gmra.mrb[0].mxu0 %v3120
        %v3188 = vpop.f32.mrb[0].mxu0
        %v3189 = vadd.f32 0.0, %v3188
        %v3190 = vpop.f32.mrb[0].mxu0
        %3191 = vdwg.mxu0
        %v3193 = vsel %vm2090, %v2273, 0
        %3195 = vmatprep.subr.mxu0 0.0
        %3196 = vmatpush1.msra.mxu0 %v436
        %3197 = vmatprep.subr.mxu0 0.0
        %3198 = vmatpush1.msra.mxu0 0.0
        %3199 = vmatprep.subr.mxu0 0.0
        %3200 = vmatpush1.msra.mxu0 0.0
        %3201 = vmatprep.subr.mxu0 0.0
        %3202 = vmatpush1.msra.mxu0 0.0
        %3203 = vmatprep.subr.mxu0 0.0
        %3204 = vmatpush1.msra.mxu0 0.0
        %3205 = vmatprep.subr.mxu0 0.0
        %3206 = vmatpush1.msra.mxu0 0.0
        %3207 = vmatprep.subr.mxu0 0.0
        %3208 = vmatpush1.msra.mxu0 0.0
        %3209 = vmatprep.subr.mxu0 0.0
        %3210 = vmatpush1.msra.mxu0 0.0
        %3211 = vmatprep.subr.mxu0 0.0
        %3212 = vmatpush1.msra.mxu0 0.0
        %3213 = vmatprep.subr.mxu0 0.0
        %3214 = vmatpush1.msra.mxu0 0.0
        %3215 = vmatprep.subr.mxu0 0.0
        %3216 = vmatpush1.msra.mxu0 0.0
        %3217 = vmatprep.subr.mxu0 0.0
        %3218 = vmatpush1.msra.mxu0 0.0
        %3219 = vmatprep.subr.mxu0 0.0
        %3220 = vmatpush1.msra.mxu0 0.0
        %3221 = vmatprep.subr.mxu0 0.0
        %3222 = vmatpush1.msra.mxu0 0.0
        %3223 = vmatprep.subr.mxu0 0.0
        %3224 = vmatpush1.msra.mxu0 0.0
        %3225 = vmatprep.subr.mxu0 0.0
        %3226 = vmatpush1.msra.mxu0 0.0
        %3227 = vmatprep.subr.mxu0 0.0
        %3228 = vmatpush1.msra.mxu0 0.0
        %3229 = vmatprep.subr.mxu0 0.0
        %3230 = vmatpush1.msra.mxu0 0.0
        %3231 = vmatprep.subr.mxu0 0.0
        %3232 = vmatpush1.msra.mxu0 0.0
        %3233 = vmatprep.subr.mxu0 0.0
        %3234 = vmatpush1.msra.mxu0 0.0
        %3235 = vmatprep.subr.mxu0 0.0
        %3236 = vmatpush1.msra.mxu0 0.0
        %3237 = vmatprep.subr.mxu0 0.0
        %3238 = vmatpush1.msra.mxu0 0.0
        %3239 = vmatprep.subr.mxu0 0.0
        %3240 = vmatpush1.msra.mxu0 0.0
        %3241 = vmatprep.subr.mxu0 0.0
        %3242 = vmatpush1.msra.mxu0 0.0
        %3243 = vmatprep.subr.mxu0 0.0
        %3244 = vmatpush1.msra.mxu0 0.0
        %3245 = vmatprep.subr.mxu0 0.0
        %3246 = vmatpush1.msra.mxu0 0.0
        %3247 = vmatprep.subr.mxu0 0.0
        %3248 = vmatpush1.msra.mxu0 0.0
        %3249 = vmatprep.subr.mxu0 0.0
        %3250 = vmatpush1.msra.mxu0 0.0
        %3251 = vmatprep.subr.mxu0 0.0
        %3252 = vmatpush1.msra.mxu0 0.0
        %3253 = vmatprep.subr.mxu0 0.0
        %3254 = vmatpush1.msra.mxu0 0.0
        %3255 = vmatprep.subr.mxu0 0.0
        %3256 = vmatpush1.msra.mxu0 0.0
        %3257 = vmatprep.subr.mxu0 0.0
        %3258 = vmatpush1.msra.mxu0 0.0
        %3259 = vmatprep.mubr.f32.mxu0 0.0
        %3260 = vmatmul.mubr.f32.gmra.mrb[0].mxu0 %v3193
        %v3261 = vpop.f32.mrb[0].mxu0
        %v3262 = vadd.f32 0.0, %v3261
        %v3263 = vpop.f32.mrb[0].mxu0
        %3264 = vdwg.mxu0
        %v3266 = vsel %vm2090, %v2274, 0
        %3268 = vmatprep.subr.mxu0 0.0
        %3269 = vmatpush1.msra.mxu0 %v437
        %3270 = vmatprep.subr.mxu0 0.0
        %3271 = vmatpush1.msra.mxu0 0.0
        %3272 = vmatprep.subr.mxu0 0.0
        %3273 = vmatpush1.msra.mxu0 0.0
        %3274 = vmatprep.subr.mxu0 0.0
        %3275 = vmatpush1.msra.mxu0 0.0
        %3276 = vmatprep.subr.mxu0 0.0
        %3277 = vmatpush1.msra.mxu0 0.0
        %3278 = vmatprep.subr.mxu0 0.0
        %3279 = vmatpush1.msra.mxu0 0.0
        %3280 = vmatprep.subr.mxu0 0.0
        %3281 = vmatpush1.msra.mxu0 0.0
        %3282 = vmatprep.subr.mxu0 0.0
        %3283 = vmatpush1.msra.mxu0 0.0
        %3284 = vmatprep.subr.mxu0 0.0
        %3285 = vmatpush1.msra.mxu0 0.0
        %3286 = vmatprep.subr.mxu0 0.0
        %3287 = vmatpush1.msra.mxu0 0.0
        %3288 = vmatprep.subr.mxu0 0.0
        %3289 = vmatpush1.msra.mxu0 0.0
        %3290 = vmatprep.subr.mxu0 0.0
        %3291 = vmatpush1.msra.mxu0 0.0
        %3292 = vmatprep.subr.mxu0 0.0
        %3293 = vmatpush1.msra.mxu0 0.0
        %3294 = vmatprep.subr.mxu0 0.0
        %3295 = vmatpush1.msra.mxu0 0.0
        %3296 = vmatprep.subr.mxu0 0.0
        %3297 = vmatpush1.msra.mxu0 0.0
        %3298 = vmatprep.subr.mxu0 0.0
        %3299 = vmatpush1.msra.mxu0 0.0
        %3300 = vmatprep.subr.mxu0 0.0
        %3301 = vmatpush1.msra.mxu0 0.0
        %3302 = vmatprep.subr.mxu0 0.0
        %3303 = vmatpush1.msra.mxu0 0.0
        %3304 = vmatprep.subr.mxu0 0.0
        %3305 = vmatpush1.msra.mxu0 0.0
        %3306 = vmatprep.subr.mxu0 0.0
        %3307 = vmatpush1.msra.mxu0 0.0
        %3308 = vmatprep.subr.mxu0 0.0
        %3309 = vmatpush1.msra.mxu0 0.0
        %3310 = vmatprep.subr.mxu0 0.0
        %3311 = vmatpush1.msra.mxu0 0.0
        %3312 = vmatprep.subr.mxu0 0.0
        %3313 = vmatpush1.msra.mxu0 0.0
        %3314 = vmatprep.subr.mxu0 0.0
        %3315 = vmatpush1.msra.mxu0 0.0
        %3316 = vmatprep.subr.mxu0 0.0
        %3317 = vmatpush1.msra.mxu0 0.0
        %3318 = vmatprep.subr.mxu0 0.0
        %3319 = vmatpush1.msra.mxu0 0.0
        %3320 = vmatprep.subr.mxu0 0.0
        %3321 = vmatpush1.msra.mxu0 0.0
        %3322 = vmatprep.subr.mxu0 0.0
        %3323 = vmatpush1.msra.mxu0 0.0
        %3324 = vmatprep.subr.mxu0 0.0
        %3325 = vmatpush1.msra.mxu0 0.0
        %3326 = vmatprep.subr.mxu0 0.0
        %3327 = vmatpush1.msra.mxu0 0.0
        %3328 = vmatprep.subr.mxu0 0.0
        %3329 = vmatpush1.msra.mxu0 0.0
        %3330 = vmatprep.subr.mxu0 0.0
        %3331 = vmatpush1.msra.mxu0 0.0
        %3332 = vmatprep.mubr.f32.mxu0 0.0
        %3333 = vmatmul.mubr.f32.gmra.mrb[0].mxu0 %v3266
        %v3334 = vpop.f32.mrb[0].mxu0
        %v3335 = vadd.f32 0.0, %v3334
        %v3336 = vpop.f32.mrb[0].mxu0
        %3337 = vdwg.mxu0
        %v3339 = vsel %vm2090, %v2275, 0
        %3341 = vmatprep.subr.mxu0 0.0
        %3342 = vmatpush1.msra.mxu0 %v438
        %3343 = vmatprep.subr.mxu0 0.0
        %3344 = vmatpush1.msra.mxu0 0.0
        %3345 = vmatprep.subr.mxu0 0.0
        %3346 = vmatpush1.msra.mxu0 0.0
        %3347 = vmatprep.subr.mxu0 0.0
        %3348 = vmatpush1.msra.mxu0 0.0
        %3349 = vmatprep.subr.mxu0 0.0
        %3350 = vmatpush1.msra.mxu0 0.0
        %3351 = vmatprep.subr.mxu0 0.0
        %3352 = vmatpush1.msra.mxu0 0.0
        %3353 = vmatprep.subr.mxu0 0.0
        %3354 = vmatpush1.msra.mxu0 0.0
        %3355 = vmatprep.subr.mxu0 0.0
        %3356 = vmatpush1.msra.mxu0 0.0
        %3357 = vmatprep.subr.mxu0 0.0
        %3358 = vmatpush1.msra.mxu0 0.0
        %3359 = vmatprep.subr.mxu0 0.0
        %3360 = vmatpush1.msra.mxu0 0.0
        %3361 = vmatprep.subr.mxu0 0.0
        %3362 = vmatpush1.msra.mxu0 0.0
        %3363 = vmatprep.subr.mxu0 0.0
        %3364 = vmatpush1.msra.mxu0 0.0
        %3365 = vmatprep.subr.mxu0 0.0
        %3366 = vmatpush1.msra.mxu0 0.0
        %3367 = vmatprep.subr.mxu0 0.0
        %3368 = vmatpush1.msra.mxu0 0.0
        %3369 = vmatprep.subr.mxu0 0.0
        %3370 = vmatpush1.msra.mxu0 0.0
        %3371 = vmatprep.subr.mxu0 0.0
        %3372 = vmatpush1.msra.mxu0 0.0
        %3373 = vmatprep.subr.mxu0 0.0
        %3374 = vmatpush1.msra.mxu0 0.0
        %3375 = vmatprep.subr.mxu0 0.0
        %3376 = vmatpush1.msra.mxu0 0.0
        %3377 = vmatprep.subr.mxu0 0.0
        %3378 = vmatpush1.msra.mxu0 0.0
        %3379 = vmatprep.subr.mxu0 0.0
        %3380 = vmatpush1.msra.mxu0 0.0
        %3381 = vmatprep.subr.mxu0 0.0
        %3382 = vmatpush1.msra.mxu0 0.0
        %3383 = vmatprep.subr.mxu0 0.0
        %3384 = vmatpush1.msra.mxu0 0.0
        %3385 = vmatprep.subr.mxu0 0.0
        %3386 = vmatpush1.msra.mxu0 0.0
        %3387 = vmatprep.subr.mxu0 0.0
        %3388 = vmatpush1.msra.mxu0 0.0
        %3389 = vmatprep.subr.mxu0 0.0
        %3390 = vmatpush1.msra.mxu0 0.0
        %3391 = vmatprep.subr.mxu0 0.0
        %3392 = vmatpush1.msra.mxu0 0.0
        %3393 = vmatprep.subr.mxu0 0.0
        %3394 = vmatpush1.msra.mxu0 0.0
        %3395 = vmatprep.subr.mxu0 0.0
        %3396 = vmatpush1.msra.mxu0 0.0
        %3397 = vmatprep.subr.mxu0 0.0
        %3398 = vmatpush1.msra.mxu0 0.0
        %3399 = vmatprep.subr.mxu0 0.0
        %3400 = vmatpush1.msra.mxu0 0.0
        %3401 = vmatprep.subr.mxu0 0.0
        %3402 = vmatpush1.msra.mxu0 0.0
        %3403 = vmatprep.subr.mxu0 0.0
        %3404 = vmatpush1.msra.mxu0 0.0
        %3405 = vmatprep.mubr.f32.mxu0 0.0
        %3406 = vmatmul.mubr.f32.gmra.mrb[0].mxu0 %v3339
        %v3407 = vpop.f32.mrb[0].mxu0
        %v3408 = vadd.f32 0.0, %v3407
        %v3409 = vpop.f32.mrb[0].mxu0
        %3410 = vdwg.mxu0
        %v3412 = vsel %vm2090, %v2276, 0
        %3414 = vmatprep.subr.mxu0 0.0
        %3415 = vmatpush1.msra.mxu0 %v439
        %3416 = vmatprep.subr.mxu0 0.0
        %3417 = vmatpush1.msra.mxu0 0.0
        %3418 = vmatprep.subr.mxu0 0.0
        %3419 = vmatpush1.msra.mxu0 0.0
        %3420 = vmatprep.subr.mxu0 0.0
        %3421 = vmatpush1.msra.mxu0 0.0
        %3422 = vmatprep.subr.mxu0 0.0
        %3423 = vmatpush1.msra.mxu0 0.0
        %3424 = vmatprep.subr.mxu0 0.0
        %3425 = vmatpush1.msra.mxu0 0.0
        %3426 = vmatprep.subr.mxu0 0.0
        %3427 = vmatpush1.msra.mxu0 0.0
        %3428 = vmatprep.subr.mxu0 0.0
        %3429 = vmatpush1.msra.mxu0 0.0
        %3430 = vmatprep.subr.mxu0 0.0
        %3431 = vmatpush1.msra.mxu0 0.0
        %3432 = vmatprep.subr.mxu0 0.0
        %3433 = vmatpush1.msra.mxu0 0.0
        %3434 = vmatprep.subr.mxu0 0.0
        %3435 = vmatpush1.msra.mxu0 0.0
        %3436 = vmatprep.subr.mxu0 0.0
        %3437 = vmatpush1.msra.mxu0 0.0
        %3438 = vmatprep.subr.mxu0 0.0
        %3439 = vmatpush1.msra.mxu0 0.0
        %3440 = vmatprep.subr.mxu0 0.0
        %3441 = vmatpush1.msra.mxu0 0.0
        %3442 = vmatprep.subr.mxu0 0.0
        %3443 = vmatpush1.msra.mxu0 0.0
        %3444 = vmatprep.subr.mxu0 0.0
        %3445 = vmatpush1.msra.mxu0 0.0
        %3446 = vmatprep.subr.mxu0 0.0
        %3447 = vmatpush1.msra.mxu0 0.0
        %3448 = vmatprep.subr.mxu0 0.0
        %3449 = vmatpush1.msra.mxu0 0.0
        %3450 = vmatprep.subr.mxu0 0.0
        %3451 = vmatpush1.msra.mxu0 0.0
        %3452 = vmatprep.subr.mxu0 0.0
        %3453 = vmatpush1.msra.mxu0 0.0
        %3454 = vmatprep.subr.mxu0 0.0
        %3455 = vmatpush1.msra.mxu0 0.0
        %3456 = vmatprep.subr.mxu0 0.0
        %3457 = vmatpush1.msra.mxu0 0.0
        %3458 = vmatprep.subr.mxu0 0.0
        %3459 = vmatpush1.msra.mxu0 0.0
        %3460 = vmatprep.subr.mxu0 0.0
        %3461 = vmatpush1.msra.mxu0 0.0
        %3462 = vmatprep.subr.mxu0 0.0
        %3463 = vmatpush1.msra.mxu0 0.0
        %3464 = vmatprep.subr.mxu0 0.0
        %3465 = vmatpush1.msra.mxu0 0.0
        %3466 = vmatprep.subr.mxu0 0.0
        %3467 = vmatpush1.msra.mxu0 0.0
        %3468 = vmatprep.subr.mxu0 0.0
        %3469 = vmatpush1.msra.mxu0 0.0
        %3470 = vmatprep.subr.mxu0 0.0
        %3471 = vmatpush1.msra.mxu0 0.0
        %3472 = vmatprep.subr.mxu0 0.0
        %3473 = vmatpush1.msra.mxu0 0.0
        %3474 = vmatprep.subr.mxu0 0.0
        %3475 = vmatpush1.msra.mxu0 0.0
        %3476 = vmatprep.subr.mxu0 0.0
        %3477 = vmatpush1.msra.mxu0 0.0
        %3478 = vmatprep.mubr.f32.mxu0 0.0
        %3479 = vmatmul.mubr.f32.gmra.mrb[0].mxu0 %v3412
        %v3480 = vpop.f32.mrb[0].mxu0
        %v3481 = vadd.f32 0.0, %v3480
        %v3482 = vpop.f32.mrb[0].mxu0
        %3483 = vdwg.mxu0
        %v3485 = vsel %vm2090, %v2277, 0
        %3487 = vmatprep.subr.mxu0 0.0
        %3488 = vmatpush1.msra.mxu0 %v440
        %3489 = vmatprep.subr.mxu0 0.0
        %3490 = vmatpush1.msra.mxu0 0.0
        %3491 = vmatprep.subr.mxu0 0.0
        %3492 = vmatpush1.msra.mxu0 0.0
        %3493 = vmatprep.subr.mxu0 0.0
        %3494 = vmatpush1.msra.mxu0 0.0
        %3495 = vmatprep.subr.mxu0 0.0
        %3496 = vmatpush1.msra.mxu0 0.0
        %3497 = vmatprep.subr.mxu0 0.0
        %3498 = vmatpush1.msra.mxu0 0.0
        %3499 = vmatprep.subr.mxu0 0.0
        %3500 = vmatpush1.msra.mxu0 0.0
        %3501 = vmatprep.subr.mxu0 0.0
        %3502 = vmatpush1.msra.mxu0 0.0
        %3503 = vmatprep.subr.mxu0 0.0
        %3504 = vmatpush1.msra.mxu0 0.0
        %3505 = vmatprep.subr.mxu0 0.0
        %3506 = vmatpush1.msra.mxu0 0.0
        %3507 = vmatprep.subr.mxu0 0.0
        %3508 = vmatpush1.msra.mxu0 0.0
        %3509 = vmatprep.subr.mxu0 0.0
        %3510 = vmatpush1.msra.mxu0 0.0
        %3511 = vmatprep.subr.mxu0 0.0
        %3512 = vmatpush1.msra.mxu0 0.0
        %3513 = vmatprep.subr.mxu0 0.0
        %3514 = vmatpush1.msra.mxu0 0.0
        %3515 = vmatprep.subr.mxu0 0.0
        %3516 = vmatpush1.msra.mxu0 0.0
        %3517 = vmatprep.subr.mxu0 0.0
        %3518 = vmatpush1.msra.mxu0 0.0
        %3519 = vmatprep.subr.mxu0 0.0
        %3520 = vmatpush1.msra.mxu0 0.0
        %3521 = vmatprep.subr.mxu0 0.0
        %3522 = vmatpush1.msra.mxu0 0.0
        %3523 = vmatprep.subr.mxu0 0.0
        %3524 = vmatpush1.msra.mxu0 0.0
        %3525 = vmatprep.subr.mxu0 0.0
        %3526 = vmatpush1.msra.mxu0 0.0
        %3527 = vmatprep.subr.mxu0 0.0
        %3528 = vmatpush1.msra.mxu0 0.0
        %3529 = vmatprep.subr.mxu0 0.0
        %3530 = vmatpush1.msra.mxu0 0.0
        %3531 = vmatprep.subr.mxu0 0.0
        %3532 = vmatpush1.msra.mxu0 0.0
        %3533 = vmatprep.subr.mxu0 0.0
        %3534 = vmatpush1.msra.mxu0 0.0
        %3535 = vmatprep.subr.mxu0 0.0
        %3536 = vmatpush1.msra.mxu0 0.0
        %3537 = vmatprep.subr.mxu0 0.0
        %3538 = vmatpush1.msra.mxu0 0.0
        %3539 = vmatprep.subr.mxu0 0.0
        %3540 = vmatpush1.msra.mxu0 0.0
        %3541 = vmatprep.subr.mxu0 0.0
        %3542 = vmatpush1.msra.mxu0 0.0
        %3543 = vmatprep.subr.mxu0 0.0
        %3544 = vmatpush1.msra.mxu0 0.0
        %3545 = vmatprep.subr.mxu0 0.0
        %3546 = vmatpush1.msra.mxu0 0.0
        %3547 = vmatprep.subr.mxu0 0.0
        %3548 = vmatpush1.msra.mxu0 0.0
        %3549 = vmatprep.subr.mxu0 0.0
        %3550 = vmatpush1.msra.mxu0 0.0
        %3551 = vmatprep.mubr.f32.mxu0 0.0
        %3552 = vmatmul.mubr.f32.gmra.mrb[0].mxu0 %v3485
        %v3553 = vpop.f32.mrb[0].mxu0
        %v3554 = vadd.f32 0.0, %v3553
        %v3555 = vpop.f32.mrb[0].mxu0
        %3556 = vdwg.mxu0
        %v3558 = vsel %vm2090, %v2278, 0
        %3560 = vmatprep.subr.mxu0 0.0
        %3561 = vmatpush1.msra.mxu0 %v441
        %3562 = vmatprep.subr.mxu0 0.0
        %3563 = vmatpush1.msra.mxu0 0.0
        %3564 = vmatprep.subr.mxu0 0.0
        %3565 = vmatpush1.msra.mxu0 0.0
        %3566 = vmatprep.subr.mxu0 0.0
        %3567 = vmatpush1.msra.mxu0 0.0
        %3568 = vmatprep.subr.mxu0 0.0
        %3569 = vmatpush1.msra.mxu0 0.0
        %3570 = vmatprep.subr.mxu0 0.0
        %3571 = vmatpush1.msra.mxu0 0.0
        %3572 = vmatprep.subr.mxu0 0.0
        %3573 = vmatpush1.msra.mxu0 0.0
        %3574 = vmatprep.subr.mxu0 0.0
        %3575 = vmatpush1.msra.mxu0 0.0
        %3576 = vmatprep.subr.mxu0 0.0
        %3577 = vmatpush1.msra.mxu0 0.0
        %3578 = vmatprep.subr.mxu0 0.0
        %3579 = vmatpush1.msra.mxu0 0.0
        %3580 = vmatprep.subr.mxu0 0.0
        %3581 = vmatpush1.msra.mxu0 0.0
        %3582 = vmatprep.subr.mxu0 0.0
        %3583 = vmatpush1.msra.mxu0 0.0
        %3584 = vmatprep.subr.mxu0 0.0
        %3585 = vmatpush1.msra.mxu0 0.0
        %3586 = vmatprep.subr.mxu0 0.0
        %3587 = vmatpush1.msra.mxu0 0.0
        %3588 = vmatprep.subr.mxu0 0.0
        %3589 = vmatpush1.msra.mxu0 0.0
        %3590 = vmatprep.subr.mxu0 0.0
        %3591 = vmatpush1.msra.mxu0 0.0
        %3592 = vmatprep.subr.mxu0 0.0
        %3593 = vmatpush1.msra.mxu0 0.0
        %3594 = vmatprep.subr.mxu0 0.0
        %3595 = vmatpush1.msra.mxu0 0.0
        %3596 = vmatprep.subr.mxu0 0.0
        %3597 = vmatpush1.msra.mxu0 0.0
        %3598 = vmatprep.subr.mxu0 0.0
        %3599 = vmatpush1.msra.mxu0 0.0
        %3600 = vmatprep.subr.mxu0 0.0
        %3601 = vmatpush1.msra.mxu0 0.0
        %3602 = vmatprep.subr.mxu0 0.0
        %3603 = vmatpush1.msra.mxu0 0.0
        %3604 = vmatprep.subr.mxu0 0.0
        %3605 = vmatpush1.msra.mxu0 0.0
        %3606 = vmatprep.subr.mxu0 0.0
        %3607 = vmatpush1.msra.mxu0 0.0
        %3608 = vmatprep.subr.mxu0 0.0
        %3609 = vmatpush1.msra.mxu0 0.0
        %3610 = vmatprep.subr.mxu0 0.0
        %3611 = vmatpush1.msra.mxu0 0.0
        %3612 = vmatprep.subr.mxu0 0.0
        %3613 = vmatpush1.msra.mxu0 0.0
        %3614 = vmatprep.subr.mxu0 0.0
        %3615 = vmatpush1.msra.mxu0 0.0
        %3616 = vmatprep.subr.mxu0 0.0
        %3617 = vmatpush1.msra.mxu0 0.0
        %3618 = vmatprep.subr.mxu0 0.0
        %3619 = vmatpush1.msra.mxu0 0.0
        %3620 = vmatprep.subr.mxu0 0.0
        %3621 = vmatpush1.msra.mxu0 0.0
        %3622 = vmatprep.subr.mxu0 0.0
        %3623 = vmatpush1.msra.mxu0 0.0
        %3624 = vmatprep.mubr.f32.mxu0 0.0
        %3625 = vmatmul.mubr.f32.gmra.mrb[0].mxu0 %v3558
        %v3626 = vpop.f32.mrb[0].mxu0
        %v3627 = vadd.f32 0.0, %v3626
        %v3628 = vpop.f32.mrb[0].mxu0
        %3629 = vdwg.mxu0
        %v3631 = vsel %vm2090, %v2279, 0
        %3633 = vmatprep.subr.mxu0 0.0
        %3634 = vmatpush1.msra.mxu0 %v442
        %3635 = vmatprep.subr.mxu0 0.0
        %3636 = vmatpush1.msra.mxu0 0.0
        %3637 = vmatprep.subr.mxu0 0.0
        %3638 = vmatpush1.msra.mxu0 0.0
        %3639 = vmatprep.subr.mxu0 0.0
        %3640 = vmatpush1.msra.mxu0 0.0
        %3641 = vmatprep.subr.mxu0 0.0
        %3642 = vmatpush1.msra.mxu0 0.0
        %3643 = vmatprep.subr.mxu0 0.0
        %3644 = vmatpush1.msra.mxu0 0.0
        %3645 = vmatprep.subr.mxu0 0.0
        %3646 = vmatpush1.msra.mxu0 0.0
        %3647 = vmatprep.subr.mxu0 0.0
        %3648 = vmatpush1.msra.mxu0 0.0
        %3649 = vmatprep.subr.mxu0 0.0
        %3650 = vmatpush1.msra.mxu0 0.0
        %3651 = vmatprep.subr.mxu0 0.0
        %3652 = vmatpush1.msra.mxu0 0.0
        %3653 = vmatprep.subr.mxu0 0.0
        %3654 = vmatpush1.msra.mxu0 0.0
        %3655 = vmatprep.subr.mxu0 0.0
        %3656 = vmatpush1.msra.mxu0 0.0
        %3657 = vmatprep.subr.mxu0 0.0
        %3658 = vmatpush1.msra.mxu0 0.0
        %3659 = vmatprep.subr.mxu0 0.0
        %3660 = vmatpush1.msra.mxu0 0.0
        %3661 = vmatprep.subr.mxu0 0.0
        %3662 = vmatpush1.msra.mxu0 0.0
        %3663 = vmatprep.subr.mxu0 0.0
        %3664 = vmatpush1.msra.mxu0 0.0
        %3665 = vmatprep.subr.mxu0 0.0
        %3666 = vmatpush1.msra.mxu0 0.0
        %3667 = vmatprep.subr.mxu0 0.0
        %3668 = vmatpush1.msra.mxu0 0.0
        %3669 = vmatprep.subr.mxu0 0.0
        %3670 = vmatpush1.msra.mxu0 0.0
        %3671 = vmatprep.subr.mxu0 0.0
        %3672 = vmatpush1.msra.mxu0 0.0
        %3673 = vmatprep.subr.mxu0 0.0
        %3674 = vmatpush1.msra.mxu0 0.0
        %3675 = vmatprep.subr.mxu0 0.0
        %3676 = vmatpush1.msra.mxu0 0.0
        %3677 = vmatprep.subr.mxu0 0.0
        %3678 = vmatpush1.msra.mxu0 0.0
        %3679 = vmatprep.subr.mxu0 0.0
        %3680 = vmatpush1.msra.mxu0 0.0
        %3681 = vmatprep.subr.mxu0 0.0
        %3682 = vmatpush1.msra.mxu0 0.0
        %3683 = vmatprep.subr.mxu0 0.0
        %3684 = vmatpush1.msra.mxu0 0.0
        %3685 = vmatprep.subr.mxu0 0.0
        %3686 = vmatpush1.msra.mxu0 0.0
        %3687 = vmatprep.subr.mxu0 0.0
        %3688 = vmatpush1.msra.mxu0 0.0
        %3689 = vmatprep.subr.mxu0 0.0
        %3690 = vmatpush1.msra.mxu0 0.0
        %3691 = vmatprep.subr.mxu0 0.0
        %3692 = vmatpush1.msra.mxu0 0.0
        %3693 = vmatprep.subr.mxu0 0.0
        %3694 = vmatpush1.msra.mxu0 0.0
        %3695 = vmatprep.subr.mxu0 0.0
        %3696 = vmatpush1.msra.mxu0 0.0
        %3697 = vmatprep.mubr.f32.mxu0 0.0
        %3698 = vmatmul.mubr.f32.gmra.mrb[0].mxu0 %v3631
        %v3699 = vpop.f32.mrb[0].mxu0
        %v3700 = vadd.f32 0.0, %v3699
        %v3701 = vpop.f32.mrb[0].mxu0
        %3702 = vdwg.mxu0
        %v3704 = vsel %vm2090, %v2280, 0
        %3706 = vmatprep.subr.mxu0 0.0
        %3707 = vmatpush1.msra.mxu0 %v443
        %3708 = vmatprep.subr.mxu0 0.0
        %3709 = vmatpush1.msra.mxu0 0.0
        %3710 = vmatprep.subr.mxu0 0.0
        %3711 = vmatpush1.msra.mxu0 0.0
        %3712 = vmatprep.subr.mxu0 0.0
        %3713 = vmatpush1.msra.mxu0 0.0
        %3714 = vmatprep.subr.mxu0 0.0
        %3715 = vmatpush1.msra.mxu0 0.0
        %3716 = vmatprep.subr.mxu0 0.0
        %3717 = vmatpush1.msra.mxu0 0.0
        %3718 = vmatprep.subr.mxu0 0.0
        %3719 = vmatpush1.msra.mxu0 0.0
        %3720 = vmatprep.subr.mxu0 0.0
        %3721 = vmatpush1.msra.mxu0 0.0
        %3722 = vmatprep.subr.mxu0 0.0
        %3723 = vmatpush1.msra.mxu0 0.0
        %3724 = vmatprep.subr.mxu0 0.0
        %3725 = vmatpush1.msra.mxu0 0.0
        %3726 = vmatprep.subr.mxu0 0.0
        %3727 = vmatpush1.msra.mxu0 0.0
        %3728 = vmatprep.subr.mxu0 0.0
        %3729 = vmatpush1.msra.mxu0 0.0
        %3730 = vmatprep.subr.mxu0 0.0
        %3731 = vmatpush1.msra.mxu0 0.0
        %3732 = vmatprep.subr.mxu0 0.0
        %3733 = vmatpush1.msra.mxu0 0.0
        %3734 = vmatprep.subr.mxu0 0.0
        %3735 = vmatpush1.msra.mxu0 0.0
        %3736 = vmatprep.subr.mxu0 0.0
        %3737 = vmatpush1.msra.mxu0 0.0
        %3738 = vmatprep.subr.mxu0 0.0
        %3739 = vmatpush1.msra.mxu0 0.0
        %3740 = vmatprep.subr.mxu0 0.0
        %3741 = vmatpush1.msra.mxu0 0.0
        %3742 = vmatprep.subr.mxu0 0.0
        %3743 = vmatpush1.msra.mxu0 0.0
        %3744 = vmatprep.subr.mxu0 0.0
        %3745 = vmatpush1.msra.mxu0 0.0
        %3746 = vmatprep.subr.mxu0 0.0
        %3747 = vmatpush1.msra.mxu0 0.0
        %3748 = vmatprep.subr.mxu0 0.0
        %3749 = vmatpush1.msra.mxu0 0.0
        %3750 = vmatprep.subr.mxu0 0.0
        %3751 = vmatpush1.msra.mxu0 0.0
        %3752 = vmatprep.subr.mxu0 0.0
        %3753 = vmatpush1.msra.mxu0 0.0
        %3754 = vmatprep.subr.mxu0 0.0
        %3755 = vmatpush1.msra.mxu0 0.0
        %3756 = vmatprep.subr.mxu0 0.0
        %3757 = vmatpush1.msra.mxu0 0.0
        %3758 = vmatprep.subr.mxu0 0.0
        %3759 = vmatpush1.msra.mxu0 0.0
        %3760 = vmatprep.subr.mxu0 0.0
        %3761 = vmatpush1.msra.mxu0 0.0
        %3762 = vmatprep.subr.mxu0 0.0
        %3763 = vmatpush1.msra.mxu0 0.0
        %3764 = vmatprep.subr.mxu0 0.0
        %3765 = vmatpush1.msra.mxu0 0.0
        %3766 = vmatprep.subr.mxu0 0.0
        %3767 = vmatpush1.msra.mxu0 0.0
        %3768 = vmatprep.subr.mxu0 0.0
        %3769 = vmatpush1.msra.mxu0 0.0
        %3770 = vmatprep.mubr.f32.mxu0 0.0
        %3771 = vmatmul.mubr.f32.gmra.mrb[0].mxu0 %v3704
        %v3772 = vpop.f32.mrb[0].mxu0
        %v3773 = vadd.f32 0.0, %v3772
        %v3774 = vpop.f32.mrb[0].mxu0
        %3775 = vdwg.mxu0
        %v3777 = vsel %vm2090, %v2281, 0
        %3779 = vmatprep.subr.mxu0 0.0
        %3780 = vmatpush1.msra.mxu0 %v444
        %3781 = vmatprep.subr.mxu0 0.0
        %3782 = vmatpush1.msra.mxu0 0.0
        %3783 = vmatprep.subr.mxu0 0.0
        %3784 = vmatpush1.msra.mxu0 0.0
        %3785 = vmatprep.subr.mxu0 0.0
        %3786 = vmatpush1.msra.mxu0 0.0
        %3787 = vmatprep.subr.mxu0 0.0
        %3788 = vmatpush1.msra.mxu0 0.0
        %3789 = vmatprep.subr.mxu0 0.0
        %3790 = vmatpush1.msra.mxu0 0.0
        %3791 = vmatprep.subr.mxu0 0.0
        %3792 = vmatpush1.msra.mxu0 0.0
        %3793 = vmatprep.subr.mxu0 0.0
        %3794 = vmatpush1.msra.mxu0 0.0
        %3795 = vmatprep.subr.mxu0 0.0
        %3796 = vmatpush1.msra.mxu0 0.0
        %3797 = vmatprep.subr.mxu0 0.0
        %3798 = vmatpush1.msra.mxu0 0.0
        %3799 = vmatprep.subr.mxu0 0.0
        %3800 = vmatpush1.msra.mxu0 0.0
        %3801 = vmatprep.subr.mxu0 0.0
        %3802 = vmatpush1.msra.mxu0 0.0
        %3803 = vmatprep.subr.mxu0 0.0
        %3804 = vmatpush1.msra.mxu0 0.0
        %3805 = vmatprep.subr.mxu0 0.0
        %3806 = vmatpush1.msra.mxu0 0.0
        %3807 = vmatprep.subr.mxu0 0.0
        %3808 = vmatpush1.msra.mxu0 0.0
        %3809 = vmatprep.subr.mxu0 0.0
        %3810 = vmatpush1.msra.mxu0 0.0
        %3811 = vmatprep.subr.mxu0 0.0
        %3812 = vmatpush1.msra.mxu0 0.0
        %3813 = vmatprep.subr.mxu0 0.0
        %3814 = vmatpush1.msra.mxu0 0.0
        %3815 = vmatprep.subr.mxu0 0.0
        %3816 = vmatpush1.msra.mxu0 0.0
        %3817 = vmatprep.subr.mxu0 0.0
        %3818 = vmatpush1.msra.mxu0 0.0
        %3819 = vmatprep.subr.mxu0 0.0
        %3820 = vmatpush1.msra.mxu0 0.0
        %3821 = vmatprep.subr.mxu0 0.0
        %3822 = vmatpush1.msra.mxu0 0.0
        %3823 = vmatprep.subr.mxu0 0.0
        %3824 = vmatpush1.msra.mxu0 0.0
        %3825 = vmatprep.subr.mxu0 0.0
        %3826 = vmatpush1.msra.mxu0 0.0
        %3827 = vmatprep.subr.mxu0 0.0
        %3828 = vmatpush1.msra.mxu0 0.0
        %3829 = vmatprep.subr.mxu0 0.0
        %3830 = vmatpush1.msra.mxu0 0.0
        %3831 = vmatprep.subr.mxu0 0.0
        %3832 = vmatpush1.msra.mxu0 0.0
        %3833 = vmatprep.subr.mxu0 0.0
        %3834 = vmatpush1.msra.mxu0 0.0
        %3835 = vmatprep.subr.mxu0 0.0
        %3836 = vmatpush1.msra.mxu0 0.0
        %3837 = vmatprep.subr.mxu0 0.0
        %3838 = vmatpush1.msra.mxu0 0.0
        %3839 = vmatprep.subr.mxu0 0.0
        %3840 = vmatpush1.msra.mxu0 0.0
        %3841 = vmatprep.subr.mxu0 0.0
        %3842 = vmatpush1.msra.mxu0 0.0
        %3843 = vmatprep.mubr.f32.mxu0 0.0
        %3844 = vmatmul.mubr.f32.gmra.mrb[0].mxu0 %v3777
        %v3845 = vpop.f32.mrb[0].mxu0
        %v3846 = vadd.f32 0.0, %v3845
        %v3847 = vpop.f32.mrb[0].mxu0
        %3848 = vdwg.mxu0
        %v3850 = vsel %vm2090, %v2282, 0
        %3852 = vmatprep.subr.mxu0 0.0
        %3853 = vmatpush1.msra.mxu0 %v445
        %3854 = vmatprep.subr.mxu0 0.0
        %3855 = vmatpush1.msra.mxu0 0.0
        %3856 = vmatprep.subr.mxu0 0.0
        %3857 = vmatpush1.msra.mxu0 0.0
        %3858 = vmatprep.subr.mxu0 0.0
        %3859 = vmatpush1.msra.mxu0 0.0
        %3860 = vmatprep.subr.mxu0 0.0
        %3861 = vmatpush1.msra.mxu0 0.0
        %3862 = vmatprep.subr.mxu0 0.0
        %3863 = vmatpush1.msra.mxu0 0.0
        %3864 = vmatprep.subr.mxu0 0.0
        %3865 = vmatpush1.msra.mxu0 0.0
        %3866 = vmatprep.subr.mxu0 0.0
        %3867 = vmatpush1.msra.mxu0 0.0
        %3868 = vmatprep.subr.mxu0 0.0
        %3869 = vmatpush1.msra.mxu0 0.0
        %3870 = vmatprep.subr.mxu0 0.0
        %3871 = vmatpush1.msra.mxu0 0.0
        %3872 = vmatprep.subr.mxu0 0.0
        %3873 = vmatpush1.msra.mxu0 0.0
        %3874 = vmatprep.subr.mxu0 0.0
        %3875 = vmatpush1.msra.mxu0 0.0
        %3876 = vmatprep.subr.mxu0 0.0
        %3877 = vmatpush1.msra.mxu0 0.0
        %3878 = vmatprep.subr.mxu0 0.0
        %3879 = vmatpush1.msra.mxu0 0.0
        %3880 = vmatprep.subr.mxu0 0.0
        %3881 = vmatpush1.msra.mxu0 0.0
        %3882 = vmatprep.subr.mxu0 0.0
        %3883 = vmatpush1.msra.mxu0 0.0
        %3884 = vmatprep.subr.mxu0 0.0
        %3885 = vmatpush1.msra.mxu0 0.0
        %3886 = vmatprep.subr.mxu0 0.0
        %3887 = vmatpush1.msra.mxu0 0.0
        %3888 = vmatprep.subr.mxu0 0.0
        %3889 = vmatpush1.msra.mxu0 0.0
        %3890 = vmatprep.subr.mxu0 0.0
        %3891 = vmatpush1.msra.mxu0 0.0
        %3892 = vmatprep.subr.mxu0 0.0
        %3893 = vmatpush1.msra.mxu0 0.0
        %3894 = vmatprep.subr.mxu0 0.0
        %3895 = vmatpush1.msra.mxu0 0.0
        %3896 = vmatprep.subr.mxu0 0.0
        %3897 = vmatpush1.msra.mxu0 0.0
        %3898 = vmatprep.subr.mxu0 0.0
        %3899 = vmatpush1.msra.mxu0 0.0
        %3900 = vmatprep.subr.mxu0 0.0
        %3901 = vmatpush1.msra.mxu0 0.0
        %3902 = vmatprep.subr.mxu0 0.0
        %3903 = vmatpush1.msra.mxu0 0.0
        %3904 = vmatprep.subr.mxu0 0.0
        %3905 = vmatpush1.msra.mxu0 0.0
        %3906 = vmatprep.subr.mxu0 0.0
        %3907 = vmatpush1.msra.mxu0 0.0
        %3908 = vmatprep.subr.mxu0 0.0
        %3909 = vmatpush1.msra.mxu0 0.0
        %3910 = vmatprep.subr.mxu0 0.0
        %3911 = vmatpush1.msra.mxu0 0.0
        %3912 = vmatprep.subr.mxu0 0.0
        %3913 = vmatpush1.msra.mxu0 0.0
        %3914 = vmatprep.subr.mxu0 0.0
        %3915 = vmatpush1.msra.mxu0 0.0
        %3916 = vmatprep.mubr.f32.mxu0 0.0
        %3917 = vmatmul.mubr.f32.gmra.mrb[0].mxu0 %v3850
        %v3918 = vpop.f32.mrb[0].mxu0
        %v3919 = vadd.f32 0.0, %v3918
        %v3920 = vpop.f32.mrb[0].mxu0
        %3921 = vdwg.mxu0
        %v3922 = vlaneseq
        %v3923 = vshrl.u32 %v3922, 7
        %v3924 = vlaneseq
        %v3925 = vshrl.u32 %v3924, 7
        %v3926 = vsub.s32 0, %v3925
        %v3927 = vrot.slane %v1839, %v3926
        %v3928 = vlaneseq
        %v3929 = vshrl.u32 %v3928, 7
        %v3930 = vsub.s32 0, %v3929
        %v3931 = vrot.slane %v1853, %v3930
        %v3932 = vlaneseq
        %v3933 = vshrl.u32 %v3932, 7
        %v3934 = vsub.s32 0, %v3933
        %v3935 = vrot.slane %v1861, %v3934
        %v3936 = vlaneseq
        %v3937 = vshrl.u32 %v3936, 7
        %v3938 = vsub.s32 0, %v3937
        %v3939 = vrot.slane %v1863, %v3938
        %v3940 = vlaneseq
        %v3941 = vshrl.u32 %v3940, 7
        %v3942 = vsub.s32 0, %v3941
        %v3943 = vrot.slane %v1846, %v3942
        %v3944 = vlaneseq
        %v3945 = vshrl.u32 %v3944, 7
        %v3946 = vsub.s32 0, %v3945
        %v3947 = vrot.slane %v1860, %v3946
        %v3948 = vlaneseq
        %v3949 = vshrl.u32 %v3948, 7
        %v3950 = vsub.s32 0, %v3949
        %v3951 = vrot.slane %v1862, %v3950
        %v3952 = vlaneseq
        %v3953 = vshrl.u32 %v3952, 7
        %v3954 = vsub.s32 0, %v3953
        %v3955 = vrot.slane %v1864, %v3954
        %v3956 = vlaneseq
        %v3957 = vshrl.u32 %v3956, 7
        %v3958 = vsub.s32 0, %v3957
        %v3959 = vrot.slane %v1888, %v3958
        %v3960 = vlaneseq
        %v3961 = vshrl.u32 %v3960, 7
        %v3962 = vsub.s32 0, %v3961
        %v3963 = vrot.slane %v1902, %v3962
        %v3964 = vlaneseq
        %v3965 = vshrl.u32 %v3964, 7
        %v3966 = vsub.s32 0, %v3965
        %v3967 = vrot.slane %v1910, %v3966
        %v3968 = vlaneseq
        %v3969 = vshrl.u32 %v3968, 7
        %v3970 = vsub.s32 0, %v3969
        %v3971 = vrot.slane %v1912, %v3970
        %v3972 = vlaneseq
        %v3973 = vshrl.u32 %v3972, 7
        %v3974 = vsub.s32 0, %v3973
        %v3975 = vrot.slane %v1895, %v3974
        %v3976 = vlaneseq
        %v3977 = vshrl.u32 %v3976, 7
        %v3978 = vsub.s32 0, %v3977
        %v3979 = vrot.slane %v1909, %v3978
        %v3980 = vlaneseq
        %v3981 = vshrl.u32 %v3980, 7
        %v3982 = vsub.s32 0, %v3981
        %v3983 = vrot.slane %v1911, %v3982
        %v3984 = vlaneseq
        %v3985 = vshrl.u32 %v3984, 7
        %v3986 = vsub.s32 0, %v3985
        %v3987 = vrot.slane %v1913, %v3986
        %vm3988 = vcmp.lt.s32.totalorder %v3923, %v3927
        %vm3989 = vcmp.lt.s32.totalorder %v3923, %v3931
        %vm3990 = vcmp.lt.s32.totalorder %v3923, %v3935
        %vm3991 = vcmp.lt.s32.totalorder %v3923, %v3939
        %vm3992 = vcmp.lt.s32.totalorder %v3923, %v3943
        %vm3993 = vcmp.lt.s32.totalorder %v3923, %v3947
        %vm3994 = vcmp.lt.s32.totalorder %v3923, %v3951
        %vm3995 = vcmp.lt.s32.totalorder %v3923, %v3955
        %vm3996 = vcmp.lt.s32.totalorder %v3923, %v3959
        %vm3997 = vcmp.lt.s32.totalorder %v3923, %v3963
        %vm3998 = vcmp.lt.s32.totalorder %v3923, %v3967
        %vm3999 = vcmp.lt.s32.totalorder %v3923, %v3971
        %vm4000 = vcmp.lt.s32.totalorder %v3923, %v3975
        %vm4001 = vcmp.lt.s32.totalorder %v3923, %v3979
        %vm4002 = vcmp.lt.s32.totalorder %v3923, %v3983
        %vm4003 = vcmp.lt.s32.totalorder %v3923, %v3987
        %v4004 = vsel %vm3988, 1, 0
        %v4005 = vsel %vm3989, 1, 0
        %v4006 = vsel %vm3990, 1, 0
        %v4007 = vsel %vm3991, 1, 0
        %v4008 = vsel %vm3992, 1, 0
        %v4009 = vsel %vm3993, 1, 0
        %v4010 = vsel %vm3994, 1, 0
        %v4011 = vsel %vm3995, 1, 0
        %v4012 = vsel %vm3996, 1, 0
        %v4013 = vsel %vm3997, 1, 0
        %v4014 = vsel %vm3998, 1, 0
        %v4015 = vsel %vm3999, 1, 0
        %v4016 = vsel %vm4000, 1, 0
        %v4017 = vsel %vm4001, 1, 0
        %v4018 = vsel %vm4002, 1, 0
        %v4019 = vsel %vm4003, 1, 0
        %v4020 = vcvt.s32.f32 %v4004
        %v4021 = vcvt.s32.f32 %v4005
        %v4022 = vcvt.s32.f32 %v4006
        %v4023 = vcvt.s32.f32 %v4007
        %v4024 = vcvt.s32.f32 %v4008
        %v4025 = vcvt.s32.f32 %v4009
        %v4026 = vcvt.s32.f32 %v4010
        %v4027 = vcvt.s32.f32 %v4011
        %v4028 = vcvt.s32.f32 %v4012
        %v4029 = vcvt.s32.f32 %v4013
        %v4030 = vcvt.s32.f32 %v4014
        %v4031 = vcvt.s32.f32 %v4015
        %v4032 = vcvt.s32.f32 %v4016
        %v4033 = vcvt.s32.f32 %v4017
        %v4034 = vcvt.s32.f32 %v4018
        %v4035 = vcvt.s32.f32 %v4019
        %4037 = vset.pattern.permute.xlu0 0
        %4038 = vperm.xlu0 %4037, %v4020
        %v4039 = vpop.permute.xlu0 %4038
        %4042 = vset.pattern.permute.xlu0 0
        %4043 = vperm.xlu0 %4042, %v4021
        %v4044 = vpop.permute.xlu0 %4043
        %4047 = vset.pattern.permute.xlu0 0
        %4048 = vperm.xlu0 %4047, %v4022
        %v4049 = vpop.permute.xlu0 %4048
        %4052 = vset.pattern.permute.xlu0 0
        %4053 = vperm.xlu0 %4052, %v4023
        %v4054 = vpop.permute.xlu0 %4053
        %4057 = vset.pattern.permute.xlu0 0
        %4058 = vperm.xlu0 %4057, %v4024
        %v4059 = vpop.permute.xlu0 %4058
        %4062 = vset.pattern.permute.xlu0 0
        %4063 = vperm.xlu0 %4062, %v4025
        %v4064 = vpop.permute.xlu0 %4063
        %4067 = vset.pattern.permute.xlu0 0
        %4068 = vperm.xlu0 %4067, %v4026
        %v4069 = vpop.permute.xlu0 %4068
        %4072 = vset.pattern.permute.xlu0 0
        %4073 = vperm.xlu0 %4072, %v4027
        %v4074 = vpop.permute.xlu0 %4073
        %4077 = vset.pattern.permute.xlu0 0
        %4078 = vperm.xlu0 %4077, %v4028
        %v4079 = vpop.permute.xlu0 %4078
        %4082 = vset.pattern.permute.xlu0 0
        %4083 = vperm.xlu0 %4082, %v4029
        %v4084 = vpop.permute.xlu0 %4083
        %4087 = vset.pattern.permute.xlu0 0
        %4088 = vperm.xlu0 %4087, %v4030
        %v4089 = vpop.permute.xlu0 %4088
        %4092 = vset.pattern.permute.xlu0 0
        %4093 = vperm.xlu0 %4092, %v4031
        %v4094 = vpop.permute.xlu0 %4093
        %4097 = vset.pattern.permute.xlu0 0
        %4098 = vperm.xlu0 %4097, %v4032
        %v4099 = vpop.permute.xlu0 %4098
        %4102 = vset.pattern.permute.xlu0 0
        %4103 = vperm.xlu0 %4102, %v4033
        %v4104 = vpop.permute.xlu0 %4103
        %4107 = vset.pattern.permute.xlu0 0
        %4108 = vperm.xlu0 %4107, %v4034
        %v4109 = vpop.permute.xlu0 %4108
        %4112 = vset.pattern.permute.xlu0 0
        %4113 = vperm.xlu0 %4112, %v4035
        %v4114 = vpop.permute.xlu0 %4113
        %v4116 = vmul.f32 %v2824, %v4039
        %v4117 = vmul.f32 %v2897, %v4044
        %v4118 = vmul.f32 %v2970, %v4049
        %v4119 = vmul.f32 %v3043, %v4054
        %v4120 = vmul.f32 %v3116, %v4059
        %v4121 = vmul.f32 %v3189, %v4064
        %v4122 = vmul.f32 %v3262, %v4069
        %v4123 = vmul.f32 %v3335, %v4074
        %v4124 = vmul.f32 %v3408, %v4079
        %v4125 = vmul.f32 %v3481, %v4084
        %v4126 = vmul.f32 %v3554, %v4089
        %v4127 = vmul.f32 %v3627, %v4094
        %v4128 = vmul.f32 %v3700, %v4099
        %v4129 = vmul.f32 %v3773, %v4104
        %v4130 = vmul.f32 %v3846, %v4109
        %v4131 = vmul.f32 %v3919, %v4114
        %v4132 = vsel %vm452, %v4116, 0.0
        %v4133 = vrot.slane %v4132, 4
        %v4134 = vadd.f32 %v4132, %v4133
        %v4135 = vrot.slane %v4134, 2
        %v4136 = vadd.f32 %v4134, %v4135
        %v4137 = vrot.slane %v4136, 1
        %v4138 = vadd.f32 %v4136, %v4137
        %v4139 = vsel %vm452, %v4117, 0.0
        %v4140 = vrot.slane %v4139, 4
        %v4141 = vadd.f32 %v4139, %v4140
        %v4142 = vrot.slane %v4141, 2
        %v4143 = vadd.f32 %v4141, %v4142
        %v4144 = vrot.slane %v4143, 1
        %v4145 = vadd.f32 %v4143, %v4144
        %v4146 = vsel %vm452, %v4118, 0.0
        %v4147 = vrot.slane %v4146, 4
        %v4148 = vadd.f32 %v4146, %v4147
        %v4149 = vrot.slane %v4148, 2
        %v4150 = vadd.f32 %v4148, %v4149
        %v4151 = vrot.slane %v4150, 1
        %v4152 = vadd.f32 %v4150, %v4151
        %v4153 = vsel %vm452, %v4119, 0.0
        %v4154 = vrot.slane %v4153, 4
        %v4155 = vadd.f32 %v4153, %v4154
        %v4156 = vrot.slane %v4155, 2
        %v4157 = vadd.f32 %v4155, %v4156
        %v4158 = vrot.slane %v4157, 1
        %v4159 = vadd.f32 %v4157, %v4158
        %v4160 = vsel %vm452, %v4120, 0.0
        %v4161 = vrot.slane %v4160, 4
        %v4162 = vadd.f32 %v4160, %v4161
        %v4163 = vrot.slane %v4162, 2
        %v4164 = vadd.f32 %v4162, %v4163
        %v4165 = vrot.slane %v4164, 1
        %v4166 = vadd.f32 %v4164, %v4165
        %v4167 = vsel %vm452, %v4121, 0.0
        %v4168 = vrot.slane %v4167, 4
        %v4169 = vadd.f32 %v4167, %v4168
        %v4170 = vrot.slane %v4169, 2
        %v4171 = vadd.f32 %v4169, %v4170
        %v4172 = vrot.slane %v4171, 1
        %v4173 = vadd.f32 %v4171, %v4172
        %v4174 = vsel %vm452, %v4122, 0.0
        %v4175 = vrot.slane %v4174, 4
        %v4176 = vadd.f32 %v4174, %v4175
        %v4177 = vrot.slane %v4176, 2
        %v4178 = vadd.f32 %v4176, %v4177
        %v4179 = vrot.slane %v4178, 1
        %v4180 = vadd.f32 %v4178, %v4179
        %v4181 = vsel %vm452, %v4123, 0.0
        %v4182 = vrot.slane %v4181, 4
        %v4183 = vadd.f32 %v4181, %v4182
        %v4184 = vrot.slane %v4183, 2
        %v4185 = vadd.f32 %v4183, %v4184
        %v4186 = vrot.slane %v4185, 1
        %v4187 = vadd.f32 %v4185, %v4186
        %v4188 = vsel %vm452, %v4124, 0.0
        %v4189 = vrot.slane %v4188, 4
        %v4190 = vadd.f32 %v4188, %v4189
        %v4191 = vrot.slane %v4190, 2
        %v4192 = vadd.f32 %v4190, %v4191
        %v4193 = vrot.slane %v4192, 1
        %v4194 = vadd.f32 %v4192, %v4193
        %v4195 = vsel %vm452, %v4125, 0.0
        %v4196 = vrot.slane %v4195, 4
        %v4197 = vadd.f32 %v4195, %v4196
        %v4198 = vrot.slane %v4197, 2
        %v4199 = vadd.f32 %v4197, %v4198
        %v4200 = vrot.slane %v4199, 1
        %v4201 = vadd.f32 %v4199, %v4200
        %v4202 = vsel %vm452, %v4126, 0.0
        %v4203 = vrot.slane %v4202, 4
        %v4204 = vadd.f32 %v4202, %v4203
        %v4205 = vrot.slane %v4204, 2
        %v4206 = vadd.f32 %v4204, %v4205
        %v4207 = vrot.slane %v4206, 1
        %v4208 = vadd.f32 %v4206, %v4207
        %v4209 = vsel %vm452, %v4127, 0.0
        %v4210 = vrot.slane %v4209, 4
        %v4211 = vadd.f32 %v4209, %v4210
        %v4212 = vrot.slane %v4211, 2
        %v4213 = vadd.f32 %v4211, %v4212
        %v4214 = vrot.slane %v4213, 1
        %v4215 = vadd.f32 %v4213, %v4214
        %v4216 = vsel %vm452, %v4128, 0.0
        %v4217 = vrot.slane %v4216, 4
        %v4218 = vadd.f32 %v4216, %v4217
        %v4219 = vrot.slane %v4218, 2
        %v4220 = vadd.f32 %v4218, %v4219
        %v4221 = vrot.slane %v4220, 1
        %v4222 = vadd.f32 %v4220, %v4221
        %v4223 = vsel %vm452, %v4129, 0.0
        %v4224 = vrot.slane %v4223, 4
        %v4225 = vadd.f32 %v4223, %v4224
        %v4226 = vrot.slane %v4225, 2
        %v4227 = vadd.f32 %v4225, %v4226
        %v4228 = vrot.slane %v4227, 1
        %v4229 = vadd.f32 %v4227, %v4228
        %v4230 = vsel %vm452, %v4130, 0.0
        %v4231 = vrot.slane %v4230, 4
        %v4232 = vadd.f32 %v4230, %v4231
        %v4233 = vrot.slane %v4232, 2
        %v4234 = vadd.f32 %v4232, %v4233
        %v4235 = vrot.slane %v4234, 1
        %v4236 = vadd.f32 %v4234, %v4235
        %v4237 = vsel %vm452, %v4131, 0.0
        %v4238 = vrot.slane %v4237, 4
        %v4239 = vadd.f32 %v4237, %v4238
        %v4240 = vrot.slane %v4239, 2
        %v4241 = vadd.f32 %v4239, %v4240
        %v4242 = vrot.slane %v4241, 1
        %v4243 = vadd.f32 %v4241, %v4242
        %v4244 = vcvt.s32.f32 %v446
        %v4245 = vcvt.s32.f32 %v447
        %v4246 = vmax.f32 %v4244, 1.0
        %v4247 = vmax.f32 %v4245, 1.0
        %v4248 = vmin.f32 %v4246, 8.0
        %v4249 = vmin.f32 %v4247, 8.0
        %v4250 = vrcp.pop %v4248
        %v4251 = vrcp.pop %v4249
        %4253 = vset.pattern.permute.xlu0 0
        %4254 = vperm.xlu0 %4253, %v4250
        %v4255 = vpop.permute.xlu0 %4254
        %4257 = vset.pattern.permute.xlu0 0
        %4258 = vperm.xlu0 %4257, %v4251
        %v4259 = vpop.permute.xlu0 %4258
        %v4260 = vrot.slane %v4255, 1
        %v4261 = vrot.slane %v4255, 2
        %v4262 = vrot.slane %v4255, 3
        %v4263 = vrot.slane %v4255, 4
        %v4264 = vrot.slane %v4255, 5
        %v4265 = vrot.slane %v4255, 6
        %v4266 = vrot.slane %v4255, 7
        %v4267 = vrot.slane %v4259, 1
        %v4268 = vrot.slane %v4259, 2
        %v4269 = vrot.slane %v4259, 3
        %v4270 = vrot.slane %v4259, 4
        %v4271 = vrot.slane %v4259, 5
        %v4272 = vrot.slane %v4259, 6
        %v4273 = vrot.slane %v4259, 7
        %v4290 = vmul.f32 %v4138, %v4255
        %v4291 = vmul.f32 %v4145, %v4260
        %v4292 = vmul.f32 %v4152, %v4261
        %v4293 = vmul.f32 %v4159, %v4262
        %v4294 = vmul.f32 %v4166, %v4263
        %v4295 = vmul.f32 %v4173, %v4264
        %v4296 = vmul.f32 %v4180, %v4265
        %v4297 = vmul.f32 %v4187, %v4266
        %v4298 = vmul.f32 %v4194, %v4259
        %v4299 = vmul.f32 %v4201, %v4267
        %v4300 = vmul.f32 %v4208, %v4268
        %v4301 = vmul.f32 %v4215, %v4269
        %v4302 = vmul.f32 %v4222, %v4270
        %v4303 = vmul.f32 %v4229, %v4271
        %v4304 = vmul.f32 %v4236, %v4272
        %v4305 = vmul.f32 %v4243, %v4273
        %v4306 = vld [vmem:[%s3] sm:$0xff]
        %v4307 = vld [vmem:[%s3 + $0x8] sm:$0xff]
        %v4308 = vld [vmem:[%s3 + $0x10] sm:$0xff]
        %v4309 = vld [vmem:[%s3 + $0x18] sm:$0xff]
        %v4310 = vld [vmem:[%s4] sm:$0x1]
        %v4312 = vlaneseq
        %v4313 = vshrl.u32 %v4312, 7
        %v4314 = vsub.s32 0, %v4313
        %v4315 = vrot.slane %v4310, %v4314
        %v4333 = vrot.slane %v4291, 7
        %v4334 = vsel %vm2729, %v4333, %v4290
        %v4335 = vrot.slane %v4292, 6
        %v4336 = vsel %vm2731, %v4335, %v4334
        %v4337 = vrot.slane %v4293, 5
        %v4338 = vsel %vm2733, %v4337, %v4336
        %v4339 = vrot.slane %v4294, 4
        %v4340 = vsel %vm2735, %v4339, %v4338
        %v4341 = vrot.slane %v4295, 3
        %v4342 = vsel %vm2737, %v4341, %v4340
        %v4343 = vrot.slane %v4296, 2
        %v4344 = vsel %vm2739, %v4343, %v4342
        %v4345 = vrot.slane %v4297, 1
        %v4346 = vsel %vm2741, %v4345, %v4344
        %v4347 = vrot.slane %v4299, 7
        %v4348 = vsel %vm2729, %v4347, %v4298
        %v4349 = vrot.slane %v4300, 6
        %v4350 = vsel %vm2731, %v4349, %v4348
        %v4351 = vrot.slane %v4301, 5
        %v4352 = vsel %vm2733, %v4351, %v4350
        %v4353 = vrot.slane %v4302, 4
        %v4354 = vsel %vm2735, %v4353, %v4352
        %v4355 = vrot.slane %v4303, 3
        %v4356 = vsel %vm2737, %v4355, %v4354
        %v4357 = vrot.slane %v4304, 2
        %v4358 = vsel %vm2739, %v4357, %v4356
        %v4359 = vrot.slane %v4305, 1
        %v4360 = vsel %vm2741, %v4359, %v4358
        %v4361 = vsel %vm452, %v4346, 0
        %v4363 = vsel %vm452, %v4360, 0
        %4365 = vmatprep.subr.mxu0 0.0
        %4366 = vmatpush1.msra.mxu0 %v4306
        %4367 = vmatprep.subr.mxu0 0.0
        %4368 = vmatpush1.msra.mxu0 %v4307
        %4369 = vmatprep.subr.mxu0 0.0
        %4370 = vmatpush1.msra.mxu0 %v4308
        %4371 = vmatprep.subr.mxu0 0.0
        %4372 = vmatpush1.msra.mxu0 %v4309
        %4373 = vmatprep.subr.mxu0 0.0
        %4374 = vmatpush1.msra.mxu0 0.0
        %4375 = vmatprep.subr.mxu0 0.0
        %4376 = vmatpush1.msra.mxu0 0.0
        %4377 = vmatprep.subr.mxu0 0.0
        %4378 = vmatpush1.msra.mxu0 0.0
        %4379 = vmatprep.subr.mxu0 0.0
        %4380 = vmatpush1.msra.mxu0 0.0
        %4381 = vmatprep.subr.mxu0 0.0
        %4382 = vmatpush1.msra.mxu0 0.0
        %4383 = vmatprep.subr.mxu0 0.0
        %4384 = vmatpush1.msra.mxu0 0.0
        %4385 = vmatprep.subr.mxu0 0.0
        %4386 = vmatpush1.msra.mxu0 0.0
        %4387 = vmatprep.subr.mxu0 0.0
        %4388 = vmatpush1.msra.mxu0 0.0
        %4389 = vmatprep.subr.mxu0 0.0
        %4390 = vmatpush1.msra.mxu0 0.0
        %4391 = vmatprep.subr.mxu0 0.0
        %4392 = vmatpush1.msra.mxu0 0.0
        %4393 = vmatprep.subr.mxu0 0.0
        %4394 = vmatpush1.msra.mxu0 0.0
        %4395 = vmatprep.subr.mxu0 0.0
        %4396 = vmatpush1.msra.mxu0 0.0
        %4397 = vmatprep.subr.mxu0 0.0
        %4398 = vmatpush1.msra.mxu0 0.0
        %4399 = vmatprep.subr.mxu0 0.0
        %4400 = vmatpush1.msra.mxu0 0.0
        %4401 = vmatprep.subr.mxu0 0.0
        %4402 = vmatpush1.msra.mxu0 0.0
        %4403 = vmatprep.subr.mxu0 0.0
        %4404 = vmatpush1.msra.mxu0 0.0
        %4405 = vmatprep.subr.mxu0 0.0
        %4406 = vmatpush1.msra.mxu0 0.0
        %4407 = vmatprep.subr.mxu0 0.0
        %4408 = vmatpush1.msra.mxu0 0.0
        %4409 = vmatprep.subr.mxu0 0.0
        %4410 = vmatpush1.msra.mxu0 0.0
        %4411 = vmatprep.subr.mxu0 0.0
        %4412 = vmatpush1.msra.mxu0 0.0
        %4413 = vmatprep.subr.mxu0 0.0
        %4414 = vmatpush1.msra.mxu0 0.0
        %4415 = vmatprep.subr.mxu0 0.0
        %4416 = vmatpush1.msra.mxu0 0.0
        %4417 = vmatprep.subr.mxu0 0.0
        %4418 = vmatpush1.msra.mxu0 0.0
        %4419 = vmatprep.subr.mxu0 0.0
        %4420 = vmatpush1.msra.mxu0 0.0
        %4421 = vmatprep.subr.mxu0 0.0
        %4422 = vmatpush1.msra.mxu0 0.0
        %4423 = vmatprep.subr.mxu0 0.0
        %4424 = vmatpush1.msra.mxu0 0.0
        %4425 = vmatprep.subr.mxu0 0.0
        %4426 = vmatpush1.msra.mxu0 0.0
        %4427 = vmatprep.subr.mxu0 0.0
        %4428 = vmatpush1.msra.mxu0 0.0
        %4429 = vmatprep.mubr.f32.mxu0 0.0
        %4430 = vmatmul.mubr.f32.gmra.mrb[0].mxu0 %v4361
        %v4431 = vpop.f32.mrb[0].mxu0
        %v4432 = vadd.f32 %v4315, %v4431
        %v4433 = vpop.f32.mrb[0].mxu0
        %4434 = vmatprep.mubr.f32.mxu0 0.0
        %4435 = vmatmul.mubr.f32.gmra.mrb[0].mxu0 %v4363
        %v4436 = vpop.f32.mrb[0].mxu0
        %v4437 = vadd.f32 %v4315, %v4436
        %v4438 = vpop.f32.mrb[0].mxu0
        %4439 = vdwg.mxu0
        %vm4440 = vcmask 80896
        %4441 = vst.msk [vmem:[%s428] sm:$0xff] %vm4440, %v4432
        %4442 = vst.msk [vmem:[%s428 + $0x8] sm:$0xff] %vm4440, %v4437
        %s4443 = smul.u32 16, %s24
        %p4444 = scmp.lt.s32.totalorder %s4443, 31
        %s4445 = scalar_select %p4444, %s4443, 31
        %s4446 = smul.addr %s4445, 8
        %s4447 = scalar_lea.vmem %s5, %s4446
        %s4448 = smul.u32 16, %s24
        %p4449 = scmp.lt.s32.totalorder %s4448, 31
        %s4450 = scalar_select %p4449, %s4448, 31
        %s4451 = smul.addr %s4450, 8
        %s4452 = scalar_lea.vmem %s6, %s4451
        %s4453 = smul.u32 2, %s24
        %p4454 = scmp.lt.s32.totalorder %s4453, 3
        %s4455 = scalar_select %p4454, %s4453, 3
        %s4456 = smul.addr %s4455, 8
        %s4457 = scalar_lea.vmem %s7, %s4456
        %s4458 = smul.u32 16, %s24
        %p4459 = scmp.lt.s32.totalorder %s4458, 31
        %s4460 = scalar_select %p4459, %s4458, 31
        %s4461 = smul.addr %s4460, 8
        %s4462 = scalar_lea.vmem %s8, %s4461
        %s4463 = smul.u32 2, %s24
        %p4464 = scmp.lt.s32.totalorder %s4463, 3
        %s4465 = scalar_select %p4464, %s4463, 3
        %s4466 = smul.addr %s4465, 8
        %s4467 = scalar_lea.vmem %s9, %s4466
        // Predicated region
        $region45: #{tpu_custom_call.1} parent=39 // pred_check
          %p4468 = pneg %p157
        $region46: #{tpu_custom_call.1} parent=39 // pred_check_branch
          %4470 = sbr.rel (%p4468) target = $region48
        $region47: #{tpu_custom_call.1} parent=39 // pred_region
          %s4471 = smul.u32 16, %s24
        $region48: #{tpu_custom_call.1} parent=39 // pred_fallthru
          _
        // Predicated region
        $region49: #{tpu_custom_call.1} parent=39 // pred_check
          %p4472 = pneg %p183
        $region50: #{tpu_custom_call.1} parent=39 // pred_check_branch
          %4474 = sbr.rel (%p4472) target = $region52
        $region51: #{tpu_custom_call.1} parent=39 // pred_region
          %s4475 = smul.u32 16, %s24
        $region52: #{tpu_custom_call.1} parent=39 // pred_fallthru
          _
        // Predicated region
        $region53: #{tpu_custom_call.1} parent=39 // pred_check
          %p4476 = pneg %p209
        $region54: #{tpu_custom_call.1} parent=39 // pred_check_branch
          %4478 = sbr.rel (%p4476) target = $region56
        $region55: #{tpu_custom_call.1} parent=39 // pred_region
          %s4479 = smul.u32 2, %s24
        $region56: #{tpu_custom_call.1} parent=39 // pred_fallthru
          _
        // Predicated region
        $region57: #{tpu_custom_call.1} parent=39 // pred_check
          %p4480 = pneg %p235
        $region58: #{tpu_custom_call.1} parent=39 // pred_check_branch
          %4482 = sbr.rel (%p4480) target = $region60
        $region59: #{tpu_custom_call.1} parent=39 // pred_region
          %s4483 = smul.u32 16, %s24
        $region60: #{tpu_custom_call.1} parent=39 // pred_fallthru
          _
        // Predicated region
        $region61: #{tpu_custom_call.1} parent=39 // pred_check
          %p4484 = pneg %p261
        $region62: #{tpu_custom_call.1} parent=39 // pred_check_branch
          %4486 = sbr.rel (%p4484) target = $region64
        $region63: #{tpu_custom_call.1} parent=39 // pred_region
          %s4487 = smul.u32 2, %s24
        $region64: #{tpu_custom_call.1} parent=39 // pred_fallthru
          _
      $region40: #{tpu_custom_call.1} parent=5 // pred_fallthru
        _
      %p4488 = scmp.le.s32.totalorder 2, %s19
      // Predicated region
      $region65: #{tpu_custom_call.1} parent=5 // pred_check
        %p4489 = pneg %p4488
      $region66: #{tpu_custom_call.1} parent=5 // pred_check_branch
        %4491 = sbr.rel (%p4489) target = $region68
      $region67: #{tpu_custom_call.1} parent=5 // pred_region
        %s4492 = ssub.s32 %s19, 2
        // Predicated region
        $region69: #{tpu_custom_call.1} parent=67 // pred_check
          %p4493 = pneg %p163
        $region70: #{tpu_custom_call.1} parent=67 // pred_check_branch
          %4495 = sbr.rel (%p4493) target = $region72
        $region71: #{tpu_custom_call.1} parent=67 // pred_region
          %s4496 = smul.u32 16, %s25
          %p4497 = scmp.lt.s32.totalorder %s4496, 31
          %s4498 = scalar_select %p4497, %s4496, 31
          %s4499 = smul.addr %s4498, 8
          %s4500 = scalar_lea.vmem %s5, %s4499
        $region72: #{tpu_custom_call.1} parent=67 // pred_fallthru
          _
        // Predicated region
        $region73: #{tpu_custom_call.1} parent=67 // pred_check
          %p4501 = pneg %p189
        $region74: #{tpu_custom_call.1} parent=67 // pred_check_branch
          %4503 = sbr.rel (%p4501) target = $region76
        $region75: #{tpu_custom_call.1} parent=67 // pred_region
          %s4504 = smul.u32 16, %s25
          %p4505 = scmp.lt.s32.totalorder %s4504, 31
          %s4506 = scalar_select %p4505, %s4504, 31
          %s4507 = smul.addr %s4506, 8
          %s4508 = scalar_lea.vmem %s6, %s4507
        $region76: #{tpu_custom_call.1} parent=67 // pred_fallthru
          _
        // Predicated region
        $region77: #{tpu_custom_call.1} parent=67 // pred_check
          %p4509 = pneg %p215
        $region78: #{tpu_custom_call.1} parent=67 // pred_check_branch
          %4511 = sbr.rel (%p4509) target = $region80
        $region79: #{tpu_custom_call.1} parent=67 // pred_region
          %s4512 = smul.u32 2, %s25
          %p4513 = scmp.lt.s32.totalorder %s4512, 3
          %s4514 = scalar_select %p4513, %s4512, 3
          %s4515 = smul.addr %s4514, 8
          %s4516 = scalar_lea.vmem %s7, %s4515
        $region80: #{tpu_custom_call.1} parent=67 // pred_fallthru
          _
        // Predicated region
        $region81: #{tpu_custom_call.1} parent=67 // pred_check
          %p4517 = pneg %p241
        $region82: #{tpu_custom_call.1} parent=67 // pred_check_branch
          %4519 = sbr.rel (%p4517) target = $region84
        $region83: #{tpu_custom_call.1} parent=67 // pred_region
          %s4520 = smul.u32 16, %s25
          %p4521 = scmp.lt.s32.totalorder %s4520, 31
          %s4522 = scalar_select %p4521, %s4520, 31
          %s4523 = smul.addr %s4522, 8
          %s4524 = scalar_lea.vmem %s8, %s4523
        $region84: #{tpu_custom_call.1} parent=67 // pred_fallthru
          _
        // Predicated region
        $region85: #{tpu_custom_call.1} parent=67 // pred_check
          %p4525 = pneg %p267
        $region86: #{tpu_custom_call.1} parent=67 // pred_check_branch
          %4527 = sbr.rel (%p4525) target = $region88
        $region87: #{tpu_custom_call.1} parent=67 // pred_region
          %s4528 = smul.u32 2, %s25
          %p4529 = scmp.lt.s32.totalorder %s4528, 3
          %s4530 = scalar_select %p4529, %s4528, 3
          %s4531 = smul.addr %s4530, 8
          %s4532 = scalar_lea.vmem %s9, %s4531
        $region88: #{tpu_custom_call.1} parent=67 // pred_fallthru
          _
      $region68: #{tpu_custom_call.1} parent=5 // pred_fallthru
        _
    $region6: #{tpu_custom_call.1} parent=1 // loop_footer
      %s23 = sadd.s32 1, %s19
    $region7: #{tpu_custom_call.1} parent=1 // loop_footer_branch
      %18 = sbr.rel target = $region3
    $region8: #{tpu_custom_call.1} parent=1 // loop_exit
      _
    %4533 = vsyncpa [#allocation3], 1
    %s4534 = scalar_lea.sflag [#allocation3], 1
    %4535 = vsyncpa %s4534, 1

</llo_original>
